<compile_context>
chip_gen: v6e
topology: v6e:2x2x1
jax: 0.10.0
libtpu: 0.0.40
codegen_flags: <defaults>
</compile_context>

<pallas_src>
import jax
import jax.numpy as jnp
from jax.experimental import pallas as pl
from jax.experimental.pallas import tpu as pltpu


def _round_up(x: int, m: int) -> int:
    return ((x + m - 1) // m) * m


def _pick_row_block(H: int, W: int, Cout_p: int) -> int:
    """Rows per output block: the largest divisor of H whose widest per-step
    f32 intermediate, (Hb, W+2, 3*Cout_p), stays under ~2 MiB."""
    bytes_per_row = (W + 2) * 3 * Cout_p * 4
    max_rows = max(1, (2 << 20) // bytes_per_row)
    best = 1
    for d in range(1, H + 1):
        if H % d == 0 and d <= max_rows:
            best = d
    return best


def conv3x3_relu_kernel(x_ref, w_ref, b_ref, o_ref):
    # x_ref: (1, Hb, W+2, 3*Cin)   kh-stacked, spatially padded input row-block
    # w_ref: (3*Cin, 3*Cout_p)     kw taps concatenated along lane-dense Cout
    # b_ref: (1, Cout_p)           bias, zero-padded to Cout_p
    # o_ref: (1, Hb, W, Cout_p)    lane-dense output row-block
    Hb = o_ref.shape[1]
    W = o_ref.shape[2]
    Cout_p = o_ref.shape[3]
    Wp = x_ref.shape[2]          # W + 2
    K = x_ref.shape[3]           # 3 * Cin

    # Single MXU contraction per row-block over the full padded width:
    #   (Hb*(W+2), 3*Cin) @ (3*Cin, 3*Cout_p)
    slab = x_ref[0]                                          # (Hb, W+2, 3*Cin)
    y = jnp.dot(slab.reshape(Hb * Wp, K), w_ref[...],
                preferred_element_type=jnp.float32)          # (Hb*Wp, 3*Cout_p)
    y = y.reshape(Hb, Wp, 3 * Cout_p)

    # kw accumulation: 128-aligned lane slices + small sublane shift (XLU),
    # summed on the VPU.
    acc = (y[:, 0:W, 0:Cout_p]
           + y[:, 1:W + 1, Cout_p:2 * Cout_p]
           + y[:, 2:W + 2, 2 * Cout_p:3 * Cout_p])

    acc += b_ref[0, :][None, None, :]
    o_ref[...] = jnp.maximum(acc, 0.0)[None].astype(o_ref.dtype)   # ReLU


def conv3x3_relu(x_nchw, weight_oihw, bias):
    """x_nchw: (N, Cin, H, W); weight_oihw: (Cout, Cin, 3, 3); bias: (Cout,)"""
    N, Cin, H, W = x_nchw.shape
    Cout = weight_oihw.shape[0]
    Cout_p = _round_up(Cout, 128)               # lane-dense output channels

    # NCHW -> NHWC, zero-pad spatial by 1 (padding=1), then stack the three
    # kh-shifted row windows along channels (partial im2col on kh only).
    # TODO(synk): for large Cin the 3x input-byte blowup starts to matter;
    # there the per-kh matmul formulation (kh loop in-kernel) is preferable.
    x_nhwc = jnp.transpose(x_nchw, (0, 2, 3, 1))
    x_pad = jnp.pad(x_nhwc, ((0, 0), (1, 1), (1, 1), (0, 0)))
    x_stack = jnp.concatenate(
        [x_pad[:, kh:kh + H, :, :] for kh in range(3)], axis=-1)  # (N,H,W+2,3*Cin)

    # OIHW -> (kh*Cin, kw*Cout_p + cout); Cout zero-padded to Cout_p so the
    # kernel's lane slices are 128-aligned and the MXU N dim is 3*Cout_p.
    w_t = jnp.transpose(weight_oihw, (2, 1, 3, 0))                # (kh,Cin,kw,Cout)
    w_t = jnp.pad(w_t, ((0, 0), (0, 0), (0, 0), (0, Cout_p - Cout)))
    w_k = w_t.reshape(3 * Cin, 3 * Cout_p)

    b_p = jnp.pad(bias, (0, Cout_p - Cout)).reshape(1, Cout_p)

    Hb = _pick_row_block(H, W, Cout_p)
    grid = (N, H // Hb)

    out_nhwc = pl.pallas_call(
        conv3x3_relu_kernel,
        out_shape=jax.ShapeDtypeStruct((N, H, W, Cout_p), x_nchw.dtype),
        grid_spec=pltpu.PrefetchScalarGridSpec(
            num_scalar_prefetch=0,
            grid=grid,
            in_specs=[
                # Per-step input row-block: pipelines HBM->VMEM DMA against
                # the previous step's compute.
                pl.BlockSpec((1, Hb, W + 2, 3 * Cin), lambda n, h: (n, h, 0, 0)),
                # Weights / bias: constant index_map -> DMA'd once, resident.
                pl.BlockSpec((3 * Cin, 3 * Cout_p), lambda n, h: (0, 0)),
                pl.BlockSpec((1, Cout_p), lambda n, h: (0, 0)),
            ],
            out_specs=pl.BlockSpec((1, Hb, W, Cout_p),
                                   lambda n, h: (n, h, 0, 0)),
        ),
        compiler_params=pltpu.CompilerParams(
            dimension_semantics=("parallel", "parallel"),
            vmem_limit_bytes=32 * 1024 * 1024,
        ),
    )(x_stack, w_k, b_p)

    # Drop padded output channels, NHWC -> NCHW to match PyTorch.
    return jnp.transpose(out_nhwc[..., :Cout], (0, 3, 1, 2))


if __name__ == "__main__":
    key = jax.random.PRNGKey(0)
    N, Cin, Cout, H, W = 2, 4, 8, 16, 16

    kx, kw_, kb = jax.random.split(key, 3)
    x = jax.random.normal(kx, (N, Cin, H, W), dtype=jnp.float32)

    # Deterministic kaiming_normal(mode='fan_out', nonlinearity='relu'):
    # std = sqrt(2 / fan_out), fan_out = Cout * 3 * 3.
    fan_out = Cout * 3 * 3
    std = (2.0 / fan_out) ** 0.5
    weight = std * jax.random.normal(kw_, (Cout, Cin, 3, 3), dtype=jnp.float32)
    bias = 0.1 * jax.random.normal(kb, (Cout,), dtype=jnp.float32)

    out = jax.block_until_ready(jax.jit(conv3x3_relu)(x, weight, bias))

    # Reference check against XLA's conv.
    ref = jax.lax.conv_general_dilated(
        x, weight, window_strides=(1, 1), padding=((1, 1), (1, 1)),
        dimension_numbers=("NCHW", "OIHW", "NCHW"))
    ref = jnp.maximum(ref + bias[None, :, None, None], 0.0)
    assert out.shape == (N, Cout, H, W)
    assert jnp.allclose(out, ref, atol=1e-4, rtol=1e-4)

    print("KERNEL_OK")
</pallas_src>

<mosaic_0001>
module attributes {stable_mosaic.version = 11 : i64} {
  func.func @conv3x3_relu_kernel(%arg0: i32, %arg1: i32, %arg2: memref<1x16x18x12xf32, #tpu.memory_space<vmem>>, %arg3: memref<12x384xf32, #tpu.memory_space<vmem>>, %arg4: memref<1x128xf32, #tpu.memory_space<vmem>>, %arg5: memref<1x16x16x128xf32, #tpu.memory_space<vmem>>) attributes {dimension_semantics = [#tpu.dimension_semantics<parallel>, #tpu.dimension_semantics<parallel>], iteration_bounds = array<i64: 2, 1>, scalar_prefetch = 0 : i64, scratch_operands = 0 : i64, tpu.core_type = #tpu.core_type<tc>, window_params = [{transform_indices = @transform_0, window_bounds = array<i64: 1, 16, 18, 12>}, {pipeline_mode = #tpu.pipeline_mode<synchronous>, transform_indices = @transform_1, window_bounds = array<i64: 12, 384>}, {pipeline_mode = #tpu.pipeline_mode<synchronous>, transform_indices = @transform_2, window_bounds = array<i64: 1, 128>}, {transform_indices = @transform_3, window_bounds = array<i64: 1, 16, 16, 128>}]} {
    %c0 = arith.constant 0 : index
    %c0_0 = arith.constant 0 : index
    %c0_1 = arith.constant 0 : index
    %c0_2 = arith.constant 0 : index
    %0 = vector.load %arg2[%c0, %c0_0, %c0_1, %c0_2] : memref<1x16x18x12xf32, #tpu.memory_space<vmem>>, vector<1x16x18x12xf32>
    %1 = vector.shape_cast %0 : vector<1x16x18x12xf32> to vector<16x18x12xf32>
    %2 = vector.shape_cast %1 : vector<16x18x12xf32> to vector<288x12xf32>
    %c0_3 = arith.constant 0 : index
    %c0_4 = arith.constant 0 : index
    %3 = vector.load %arg3[%c0_3, %c0_4] : memref<12x384xf32, #tpu.memory_space<vmem>>, vector<12x384xf32>
    %cst = arith.constant dense<0.000000e+00> : vector<288x384xf32>
    %4 = tpu.matmul %2, %3, %cst {dimension_numbers = #tpu.dot_dimension_numbers<[1], [0], [0], [1], [0, 0, 1, 1], [], []>} : vector<288x12xf32>, vector<12x384xf32>, vector<288x384xf32> -> vector<288x384xf32>
    %5 = vector.shape_cast %4 : vector<288x384xf32> to vector<16x18x384xf32>
    %6 = vector.extract_strided_slice %5 {offsets = [0, 0, 0], sizes = [16, 16, 128], strides = [1, 1, 1]} : vector<16x18x384xf32> to vector<16x16x128xf32>
    %7 = vector.extract_strided_slice %5 {offsets = [0, 1, 128], sizes = [16, 16, 128], strides = [1, 1, 1]} : vector<16x18x384xf32> to vector<16x16x128xf32>
    %8 = arith.addf %6, %7 : vector<16x16x128xf32>
    %9 = vector.extract_strided_slice %5 {offsets = [0, 2, 256], sizes = [16, 16, 128], strides = [1, 1, 1]} : vector<16x18x384xf32> to vector<16x16x128xf32>
    %10 = arith.addf %8, %9 : vector<16x16x128xf32>
    %c0_5 = arith.constant 0 : index
    %c0_6 = arith.constant 0 : index
    %11 = vector.load %arg4[%c0_5, %c0_6] : memref<1x128xf32, #tpu.memory_space<vmem>>, vector<1x128xf32>
    %12 = vector.shape_cast %11 : vector<1x128xf32> to vector<128xf32>
    %13 = vector.shape_cast %12 : vector<128xf32> to vector<1x1x128xf32>
    %14 = vector.broadcast %13 : vector<1x1x128xf32> to vector<16x16x128xf32>
    %15 = arith.addf %10, %14 : vector<16x16x128xf32>
    %cst_7 = arith.constant 0.000000e+00 : f32
    %16 = vector.broadcast %cst_7 : f32 to vector<16x16x128xf32>
    %17 = arith.maximumf %15, %16 : vector<16x16x128xf32>
    %18 = vector.shape_cast %17 : vector<16x16x128xf32> to vector<1x16x16x128xf32>
    %c0_8 = arith.constant 0 : index
    %c0_9 = arith.constant 0 : index
    %c0_10 = arith.constant 0 : index
    %c0_11 = arith.constant 0 : index
    %19 = vector.load %arg5[%c0_8, %c0_9, %c0_10, %c0_11] : memref<1x16x16x128xf32, #tpu.memory_space<vmem>>, vector<1x16x16x128xf32>
    tpu.vector_store %arg5[%c0_8, %c0_9, %c0_10, %c0_11], %18 {strides = array<i32>} : memref<1x16x16x128xf32, #tpu.memory_space<vmem>>, vector<1x16x16x128xf32>,
    return
  }
  func.func @transform_0(%arg0: i32, %arg1: i32) -> (i32, i32, i32, i32) {
    %c0_i32 = arith.constant 0 : i32
    %c0_i32_0 = arith.constant 0 : i32
    %c0_i32_1 = arith.constant 0 : i32
    return %arg0, %arg1, %c0_i32, %c0_i32_0 : i32, i32, i32, i32
  }
  func.func @transform_1(%arg0: i32, %arg1: i32) -> (i32, i32) {
    %c0_i32 = arith.constant 0 : i32
    %c0_i32_0 = arith.constant 0 : i32
    %c0_i32_1 = arith.constant 0 : i32
    return %c0_i32, %c0_i32_0 : i32, i32
  }
  func.func @transform_2(%arg0: i32, %arg1: i32) -> (i32, i32) {
    %c0_i32 = arith.constant 0 : i32
    %c0_i32_0 = arith.constant 0 : i32
    %c0_i32_1 = arith.constant 0 : i32
    return %c0_i32, %c0_i32_0 : i32, i32
  }
  func.func @transform_3(%arg0: i32, %arg1: i32) -> (i32, i32, i32, i32) {
    %c0_i32 = arith.constant 0 : i32
    %c0_i32_0 = arith.constant 0 : i32
    %c0_i32_1 = arith.constant 0 : i32
    return %arg0, %arg1, %c0_i32, %c0_i32_0 : i32, i32, i32, i32
  }
}

</mosaic_0001>

<llo_original>
// kernel: conv3x3_relu.1
$region0: #{conv3x3_relu.1}
  #allocation0 [shape = 'u32[]', space=smem, size = 0x4, offset = 0x4, fixed_abs, tag = 'smem constant byte address 0x4 - core index']
  #allocation1 [shape = 'u32[144,128]{1,0:T(1,128)}', space=vmem, size = 0x12000, scoped, tag = 'internal scratch']
  %s0 = inlined_call_operand.vmem [shape: f32[2,16,18,12], index: 0, kind: input, shape index: {}]
  %s1 = inlined_call_operand.vmem [shape: f32[12,384], index: 1, kind: input, shape index: {}]
  %s2 = inlined_call_operand.vmem [shape: f32[1,128], index: 2, kind: input, shape index: {}]
  %s3 = inlined_call_operand.vmem [shape: f32[2,16,16,128], index: 3, kind: output, shape index: {}]
  %s4 = sld [smem:[#allocation0]]
  $region45: #{conv3x3_relu.1} parent=0
    _
  %s6 = ssub.s32 1, %s4
  %s7 = scalar_select 0, %s6, %s4
  loop: start=0, step=1, limit=4
  $region2: #{conv3x3_relu.1} parent=0 // loop_pre_header
    _
  $region3: #{conv3x3_relu.1} parent=0 // loop_header
    %s9 = sphi 0, %s13
    %p10 = scmp.ge.s32.totalorder %s9, 4
    %s16 = sphi 0, %s28
    %s17 = sphi 0, %s24
    %s18 = sphi 0, %s16
    %s19 = sphi 0, %s17
    %s20 = sphi 0, %s18
    %s21 = sphi 0, %s19
    %s33 = sphi 0, %s35
    %s36 = sphi 0, %s33
    %s37 = sphi 0, %s36
    %s53 = sphi 0, %s37
    %s57 = sphi 0, %s57
    %s59 = sphi 0, %s57
    %s60 = sphi 0, %s59
    %s74 = sphi 0, %s60
    %s78 = sphi 0, %s78
    %s80 = sphi 0, %s78
    %s81 = sphi 0, %s80
    %s95 = sphi 0, %s81
    %s103 = sphi 0, %s105
    %s106 = sphi 0, %s103
    %s107 = sphi 0, %s106
    %s123 = sphi 0, %s107
  $region4: #{conv3x3_relu.1} parent=0 // loop_header_branch
    %12 = sbr.rel (%p10) target = $region8
  $region5: #{conv3x3_relu.1} parent=0 // loop_body
    %s14 = ssub.s32 %s9, 1
    %s15 = ssub.s32 %s9, 2
    %s22 = sadd.s32 1, %s17
    %p23 = scmp.ge.s32.totalorder %s22, 1
    %s24 = scalar_select %p23, 0, %s22
    %s25 = sadd.s32 1, %s16
    %s26 = scalar_select %p23, %s25, %s16
    %p27 = scmp.ge.s32.totalorder %s26, 2
    %s28 = scalar_select %p27, 0, %s26
    %s29 = ssub.s32 %s16, %s28
    %s30 = ssub.s32 %s17, %s24
    %s31 = sor.u32 %s29, %s30
    %p32 = scmp.eq.s32.totalorder %s31, 0
    %s34 = sadd.s32 %s33, 1
    %s35 = scalar_select %p32, %s33, %s34
    %p38 = pneg %p32
    %p39 = scmp.eq.s32.totalorder %s9, 1
    %p40 = por %p38, %p39
    %p41 = scmp.ne.s32.totalorder %s33, %s36
    %p42 = scmp.eq.s32.totalorder %s9, 0
    %p43 = por %p41, %p42
    %p44 = scmp.ne.s32.totalorder %s33, %s36
    %p45 = scmp.eq.s32.totalorder %s14, 1
    %p46 = por %p44, %p45
    %p47 = scmp.ne.s32.totalorder %s36, %s37
    %p48 = scmp.eq.s32.totalorder %s14, 0
    %p49 = por %p47, %p48
    %p50 = scmp.ne.s32.totalorder %s36, %s37
    %p51 = scmp.eq.s32.totalorder %s15, 1
    %p52 = por %p50, %p51
    %p54 = scmp.ne.s32.totalorder %s37, %s53
    %p55 = scmp.eq.s32.totalorder %s15, 0
    %p56 = por %p54, %p55
    %s58 = sadd.s32 %s57, 1
    %p61 = scmp.eq.s32.totalorder %s9, 1
    %p62 = scmp.ne.s32.totalorder %s57, %s59
    %p63 = scmp.eq.s32.totalorder %s9, 0
    %p64 = por %p62, %p63
    %p65 = scmp.ne.s32.totalorder %s57, %s59
    %p66 = scmp.eq.s32.totalorder %s14, 1
    %p67 = por %p65, %p66
    %p68 = scmp.ne.s32.totalorder %s59, %s60
    %p69 = scmp.eq.s32.totalorder %s14, 0
    %p70 = por %p68, %p69
    %p71 = scmp.ne.s32.totalorder %s59, %s60
    %p72 = scmp.eq.s32.totalorder %s15, 1
    %p73 = por %p71, %p72
    %p75 = scmp.ne.s32.totalorder %s60, %s74
    %p76 = scmp.eq.s32.totalorder %s15, 0
    %p77 = por %p75, %p76
    %s79 = sadd.s32 %s78, 1
    %p82 = scmp.eq.s32.totalorder %s9, 1
    %p83 = scmp.ne.s32.totalorder %s78, %s80
    %p84 = scmp.eq.s32.totalorder %s9, 0
    %p85 = por %p83, %p84
    %p86 = scmp.ne.s32.totalorder %s78, %s80
    %p87 = scmp.eq.s32.totalorder %s14, 1
    %p88 = por %p86, %p87
    %p89 = scmp.ne.s32.totalorder %s80, %s81
    %p90 = scmp.eq.s32.totalorder %s14, 0
    %p91 = por %p89, %p90
    %p92 = scmp.ne.s32.totalorder %s80, %s81
    %p93 = scmp.eq.s32.totalorder %s15, 1
    %p94 = por %p92, %p93
    %p96 = scmp.ne.s32.totalorder %s81, %s95
    %p97 = scmp.eq.s32.totalorder %s15, 0
    %p98 = por %p96, %p97
    %s99 = ssub.s32 %s16, %s28
    %s100 = ssub.s32 %s17, %s24
    %s101 = sor.u32 %s99, %s100
    %p102 = scmp.eq.s32.totalorder %s101, 0
    %s104 = sadd.s32 %s103, 1
    %s105 = scalar_select %p102, %s103, %s104
    %p108 = pneg %p102
    %p109 = scmp.eq.s32.totalorder %s9, 1
    %p110 = por %p108, %p109
    %p111 = scmp.ne.s32.totalorder %s103, %s106
    %p112 = scmp.eq.s32.totalorder %s9, 0
    %p113 = por %p111, %p112
    %p114 = scmp.ne.s32.totalorder %s103, %s106
    %p115 = scmp.eq.s32.totalorder %s14, 1
    %p116 = por %p114, %p115
    %p117 = scmp.ne.s32.totalorder %s106, %s107
    %p118 = scmp.eq.s32.totalorder %s14, 0
    %p119 = por %p117, %p118
    %p120 = scmp.ne.s32.totalorder %s106, %s107
    %p121 = scmp.eq.s32.totalorder %s15, 1
    %p122 = por %p120, %p121
    %p124 = scmp.ne.s32.totalorder %s107, %s123
    %p125 = scmp.eq.s32.totalorder %s15, 0
    %p126 = por %p124, %p125
    %p127 = scmp.le.s32.totalorder 1, %s9
    %p128 = scmp.lt.s32.totalorder %s9, 3
    %p129 = pnand %p127, %p128
    %p130 = pneg %p129
    // Predicated region
    $region9: #{conv3x3_relu.1} parent=5 // pred_check
      _
    $region10: #{conv3x3_relu.1} parent=5 // pred_check_branch
      %132 = sbr.rel (%p129) target = $region12
    $region11: #{conv3x3_relu.1} parent=5 // pred_region
      %s133 = ssub.s32 %s9, 1
      // Predicated region
      $region13: #{conv3x3_relu.1} parent=11 // pred_check
        %p134 = pneg %p70
      $region14: #{conv3x3_relu.1} parent=11 // pred_check_branch
        %136 = sbr.rel (%p134) target = $region16
      $region15: #{conv3x3_relu.1} parent=11 // pred_region
        _
      $region16: #{conv3x3_relu.1} parent=11 // pred_fallthru
        _
      // Predicated region
      $region17: #{conv3x3_relu.1} parent=11 // pred_check
        %p137 = pneg %p91
      $region18: #{conv3x3_relu.1} parent=11 // pred_check_branch
        %139 = sbr.rel (%p137) target = $region20
      $region19: #{conv3x3_relu.1} parent=11 // pred_region
        _
      $region20: #{conv3x3_relu.1} parent=11 // pred_fallthru
        _
    $region12: #{conv3x3_relu.1} parent=5 // pred_fallthru
      _
    %p140 = scmp.lt.s32.totalorder %s9, 2
    // Predicated region
    $region21: #{conv3x3_relu.1} parent=5 // pred_check
      %p141 = pneg %p140
    $region22: #{conv3x3_relu.1} parent=5 // pred_check_branch
      %143 = sbr.rel (%p141) target = $region24
    $region23: #{conv3x3_relu.1} parent=5 // pred_region
      // Predicated region
      $region25: #{conv3x3_relu.1} parent=23 // pred_check
        %p144 = pneg %p43
      $region26: #{conv3x3_relu.1} parent=23 // pred_check_branch
        %146 = sbr.rel (%p144) target = $region28
      $region27: #{conv3x3_relu.1} parent=23 // pred_region
        %s147 = smul.u32 16, %s17
        %p148 = scmp.lt.s32.totalorder %s16, 1
        %s149 = scalar_select %p148, %s16, 1
        %p150 = scmp.lt.s32.totalorder %s147, 15
        %s151 = scalar_select %p150, %s147, 15
        %s152 = smul.addr %s151, 3
        %s153 = smul.addr %s149, 48
        %s154 = sadd.s32 %s152, %s153
        %s155 = smul.addr %s154, 8
        %s156 = scalar_lea.vmem %s0, %s155
        %s157 = smul.u32 16, %s17
      $region28: #{conv3x3_relu.1} parent=23 // pred_fallthru
        _
    $region24: #{conv3x3_relu.1} parent=5 // pred_fallthru
      _
    %p158 = scmp.le.s32.totalorder 1, %s9
    %p159 = scmp.lt.s32.totalorder %s9, 3
    %p160 = pnand %p158, %p159
    %p161 = pneg %p160
    // Predicated region
    $region29: #{conv3x3_relu.1} parent=5 // pred_check
      _
    $region30: #{conv3x3_relu.1} parent=5 // pred_check_branch
      %163 = sbr.rel (%p160) target = $region32
    $region31: #{conv3x3_relu.1} parent=5 // pred_region
      %s164 = ssub.s32 %s9, 1
      %s165 = smul.u32 16, %s19
      %p166 = scmp.lt.s32.totalorder %s18, 1
      %s167 = scalar_select %p166, %s18, 1
      %p168 = scmp.lt.s32.totalorder %s165, 15
      %s169 = scalar_select %p168, %s165, 15
      %s170 = smul.addr %s169, 3
      %s171 = smul.addr %s167, 48
      %s172 = sadd.s32 %s170, %s171
      %s173 = smul.addr %s172, 8
      %s174 = scalar_lea.vmem %s0, %s173
      %p175 = pneg %p49
      %p176 = pneg %p46
      %p177 = pneg %p70
      %p178 = pneg %p67
      %p179 = pneg %p91
      %p180 = pneg %p88
      %p181 = pneg %p119
      %p182 = pneg %p116
      %s183 = smul.u32 16, %s19
      %p184 = scmp.lt.s32.totalorder %s18, 1
      %s185 = scalar_select %p184, %s18, 1
      %p186 = scmp.lt.s32.totalorder %s183, 15
      %s187 = scalar_select %p186, %s183, 15
      %s188 = smul.addr %s187, 2
      %s189 = smul.addr %s185, 32
      %s190 = sadd.s32 %s188, %s189
      %s191 = smul.addr %s190, 8
      %s192 = scalar_lea.vmem %s3, %s191
      %s193 = smul.u32 16, %s19
      %p194 = scmp.lt.s32.totalorder %s18, 1
      %s195 = scalar_select %p194, %s18, 1
      %p196 = scmp.lt.s32.totalorder %s193, 15
      %s197 = scalar_select %p196, %s193, 15
      %s198 = smul.addr %s197, 3
      %s199 = smul.addr %s195, 48
      %s200 = sadd.s32 %s198, %s199
      %s201 = smul.addr %s200, 8
      %s202 = scalar_lea.vmem %s0, %s201
      %s203 = smul.u32 16, %s19
      %s204 = smul.u32 16, %s19
      %p205 = scmp.lt.s32.totalorder %s18, 1
      %s206 = scalar_select %p205, %s18, 1
      %p207 = scmp.lt.s32.totalorder %s204, 15
      %s208 = scalar_select %p207, %s204, 15
      %s209 = smul.addr %s208, 2
      %s210 = smul.addr %s206, 32
      %s211 = sadd.s32 %s209, %s210
      %s212 = smul.addr %s211, 8
      %s213 = scalar_lea.vmem %s3, %s212
      %s214 = smul.u32 16, %s19
      %v215 = vld [vmem:[%s202] sm:$0xff]
      %v216 = vld [vmem:[%s202 + $0x8] sm:$0xff]
      %v217 = vld [vmem:[%s202 + $0x10] sm:$0x3]
      %v218 = vld [vmem:[%s202 + $0x18] sm:$0xff]
      %v219 = vld [vmem:[%s202 + $0x20] sm:$0xff]
      %v220 = vld [vmem:[%s202 + $0x28] sm:$0x3]
      %v221 = vld [vmem:[%s202 + $0x30] sm:$0xff]
      %v222 = vld [vmem:[%s202 + $0x38] sm:$0xff]
      %v223 = vld [vmem:[%s202 + $0x40] sm:$0x3]
      %v224 = vld [vmem:[%s202 + $0x48] sm:$0xff]
      %v225 = vld [vmem:[%s202 + $0x50] sm:$0xff]
      %v226 = vld [vmem:[%s202 + $0x58] sm:$0x3]
      %v227 = vld [vmem:[%s202 + $0x60] sm:$0xff]
      %v228 = vld [vmem:[%s202 + $0x68] sm:$0xff]
      %v229 = vld [vmem:[%s202 + $0x70] sm:$0x3]
      %v230 = vld [vmem:[%s202 + $0x78] sm:$0xff]
      %v231 = vld [vmem:[%s202 + $0x80] sm:$0xff]
      %v232 = vld [vmem:[%s202 + $0x88] sm:$0x3]
      %v233 = vld [vmem:[%s202 + $0x90] sm:$0xff]
      %v234 = vld [vmem:[%s202 + $0x98] sm:$0xff]
      %v235 = vld [vmem:[%s202 + $0xa0] sm:$0x3]
      %v236 = vld [vmem:[%s202 + $0xa8] sm:$0xff]
      %v237 = vld [vmem:[%s202 + $0xb0] sm:$0xff]
      %v238 = vld [vmem:[%s202 + $0xb8] sm:$0x3]
      %v239 = vld [vmem:[%s202 + $0xc0] sm:$0xff]
      %v240 = vld [vmem:[%s202 + $0xc8] sm:$0xff]
      %v241 = vld [vmem:[%s202 + $0xd0] sm:$0x3]
      %v242 = vld [vmem:[%s202 + $0xd8] sm:$0xff]
      %v243 = vld [vmem:[%s202 + $0xe0] sm:$0xff]
      %v244 = vld [vmem:[%s202 + $0xe8] sm:$0x3]
      %v245 = vld [vmem:[%s202 + $0xf0] sm:$0xff]
      %v246 = vld [vmem:[%s202 + $0xf8] sm:$0xff]
      %v247 = vld [vmem:[%s202 + $0x100] sm:$0x3]
      %v248 = vld [vmem:[%s202 + $0x108] sm:$0xff]
      %v249 = vld [vmem:[%s202 + $0x110] sm:$0xff]
      %v250 = vld [vmem:[%s202 + $0x118] sm:$0x3]
      %v251 = vld [vmem:[%s202 + $0x120] sm:$0xff]
      %v252 = vld [vmem:[%s202 + $0x128] sm:$0xff]
      %v253 = vld [vmem:[%s202 + $0x130] sm:$0x3]
      %v254 = vld [vmem:[%s202 + $0x138] sm:$0xff]
      %v255 = vld [vmem:[%s202 + $0x140] sm:$0xff]
      %v256 = vld [vmem:[%s202 + $0x148] sm:$0x3]
      %v257 = vld [vmem:[%s202 + $0x150] sm:$0xff]
      %v258 = vld [vmem:[%s202 + $0x158] sm:$0xff]
      %v259 = vld [vmem:[%s202 + $0x160] sm:$0x3]
      %v260 = vld [vmem:[%s202 + $0x168] sm:$0xff]
      %v261 = vld [vmem:[%s202 + $0x170] sm:$0xff]
      %v262 = vld [vmem:[%s202 + $0x178] sm:$0x3]
      %v311 = vcombine.high %v215, %v215
      %v313 = vunpack.c.l.s4 1983009808
      %v314 = vunpack.c.0.s8 %v313
      %v315 = vlaneseq
      %v316 = vshrl.u32 %v315, 7
      %v317 = vsub.s32 %v314, %v316
      %v318 = vrot.slane %v215, %v317
      %v320 = vunpack.c.l.s4 1983009808
      %v321 = vunpack.c.0.s8 %v320
      %v322 = vlaneseq
      %v323 = vshrl.u32 %v322, 7
      %v324 = vsub.s32 %v321, %v323
      %v325 = vrot.slane %v311, %v324
      %v326 = vcombine.high %v318, %v318
      %v327 = vcombine.high %v325, %v325
      %v328 = vcombine.high %v216, %v216
      %v330 = vunpack.c.l.s4 1983009808
      %v331 = vunpack.c.0.s8 %v330
      %v332 = vlaneseq
      %v333 = vshrl.u32 %v332, 7
      %v334 = vsub.s32 %v331, %v333
      %v335 = vrot.slane %v216, %v334
      %v337 = vunpack.c.l.s4 1983009808
      %v338 = vunpack.c.0.s8 %v337
      %v339 = vlaneseq
      %v340 = vshrl.u32 %v339, 7
      %v341 = vsub.s32 %v338, %v340
      %v342 = vrot.slane %v328, %v341
      %v343 = vcombine.high %v335, %v335
      %v344 = vcombine.high %v342, %v342
      %v346 = vunpack.c.l.s4 1983009808
      %v347 = vunpack.c.0.s8 %v346
      %v348 = vlaneseq
      %v349 = vshrl.u32 %v348, 7
      %v350 = vsub.s32 %v347, %v349
      %v351 = vrot.slane %v217, %v350
      %v352 = vcombine.high %v218, %v218
      %v354 = vunpack.c.l.s4 1983009808
      %v355 = vunpack.c.0.s8 %v354
      %v356 = vlaneseq
      %v357 = vshrl.u32 %v356, 7
      %v358 = vsub.s32 %v355, %v357
      %v359 = vrot.slane %v218, %v358
      %v361 = vunpack.c.l.s4 1983009808
      %v362 = vunpack.c.0.s8 %v361
      %v363 = vlaneseq
      %v364 = vshrl.u32 %v363, 7
      %v365 = vsub.s32 %v362, %v364
      %v366 = vrot.slane %v352, %v365
      %v367 = vcombine.high %v359, %v359
      %v368 = vcombine.high %v366, %v366
      %v369 = vcombine.high %v219, %v219
      %v371 = vunpack.c.l.s4 1983009808
      %v372 = vunpack.c.0.s8 %v371
      %v373 = vlaneseq
      %v374 = vshrl.u32 %v373, 7
      %v375 = vsub.s32 %v372, %v374
      %v376 = vrot.slane %v219, %v375
      %v378 = vunpack.c.l.s4 1983009808
      %v379 = vunpack.c.0.s8 %v378
      %v380 = vlaneseq
      %v381 = vshrl.u32 %v380, 7
      %v382 = vsub.s32 %v379, %v381
      %v383 = vrot.slane %v369, %v382
      %v384 = vcombine.high %v376, %v376
      %v385 = vcombine.high %v383, %v383
      %v387 = vunpack.c.l.s4 1983009808
      %v388 = vunpack.c.0.s8 %v387
      %v389 = vlaneseq
      %v390 = vshrl.u32 %v389, 7
      %v391 = vsub.s32 %v388, %v390
      %v392 = vrot.slane %v220, %v391
      %v393 = vcombine.high %v221, %v221
      %v395 = vunpack.c.l.s4 1983009808
      %v396 = vunpack.c.0.s8 %v395
      %v397 = vlaneseq
      %v398 = vshrl.u32 %v397, 7
      %v399 = vsub.s32 %v396, %v398
      %v400 = vrot.slane %v221, %v399
      %v402 = vunpack.c.l.s4 1983009808
      %v403 = vunpack.c.0.s8 %v402
      %v404 = vlaneseq
      %v405 = vshrl.u32 %v404, 7
      %v406 = vsub.s32 %v403, %v405
      %v407 = vrot.slane %v393, %v406
      %v408 = vcombine.high %v400, %v400
      %v409 = vcombine.high %v407, %v407
      %v410 = vcombine.high %v222, %v222
      %v412 = vunpack.c.l.s4 1983009808
      %v413 = vunpack.c.0.s8 %v412
      %v414 = vlaneseq
      %v415 = vshrl.u32 %v414, 7
      %v416 = vsub.s32 %v413, %v415
      %v417 = vrot.slane %v222, %v416
      %v419 = vunpack.c.l.s4 1983009808
      %v420 = vunpack.c.0.s8 %v419
      %v421 = vlaneseq
      %v422 = vshrl.u32 %v421, 7
      %v423 = vsub.s32 %v420, %v422
      %v424 = vrot.slane %v410, %v423
      %v425 = vcombine.high %v417, %v417
      %v426 = vcombine.high %v424, %v424
      %v428 = vunpack.c.l.s4 1983009808
      %v429 = vunpack.c.0.s8 %v428
      %v430 = vlaneseq
      %v431 = vshrl.u32 %v430, 7
      %v432 = vsub.s32 %v429, %v431
      %v433 = vrot.slane %v223, %v432
      %v434 = vcombine.high %v224, %v224
      %v436 = vunpack.c.l.s4 1983009808
      %v437 = vunpack.c.0.s8 %v436
      %v438 = vlaneseq
      %v439 = vshrl.u32 %v438, 7
      %v440 = vsub.s32 %v437, %v439
      %v441 = vrot.slane %v224, %v440
      %v443 = vunpack.c.l.s4 1983009808
      %v444 = vunpack.c.0.s8 %v443
      %v445 = vlaneseq
      %v446 = vshrl.u32 %v445, 7
      %v447 = vsub.s32 %v444, %v446
      %v448 = vrot.slane %v434, %v447
      %v449 = vcombine.high %v441, %v441
      %v450 = vcombine.high %v448, %v448
      %v451 = vcombine.high %v225, %v225
      %v453 = vunpack.c.l.s4 1983009808
      %v454 = vunpack.c.0.s8 %v453
      %v455 = vlaneseq
      %v456 = vshrl.u32 %v455, 7
      %v457 = vsub.s32 %v454, %v456
      %v458 = vrot.slane %v225, %v457
      %v460 = vunpack.c.l.s4 1983009808
      %v461 = vunpack.c.0.s8 %v460
      %v462 = vlaneseq
      %v463 = vshrl.u32 %v462, 7
      %v464 = vsub.s32 %v461, %v463
      %v465 = vrot.slane %v451, %v464
      %v466 = vcombine.high %v458, %v458
      %v467 = vcombine.high %v465, %v465
      %v469 = vunpack.c.l.s4 1983009808
      %v470 = vunpack.c.0.s8 %v469
      %v471 = vlaneseq
      %v472 = vshrl.u32 %v471, 7
      %v473 = vsub.s32 %v470, %v472
      %v474 = vrot.slane %v226, %v473
      %v475 = vcombine.high %v227, %v227
      %v477 = vunpack.c.l.s4 1983009808
      %v478 = vunpack.c.0.s8 %v477
      %v479 = vlaneseq
      %v480 = vshrl.u32 %v479, 7
      %v481 = vsub.s32 %v478, %v480
      %v482 = vrot.slane %v227, %v481
      %v484 = vunpack.c.l.s4 1983009808
      %v485 = vunpack.c.0.s8 %v484
      %v486 = vlaneseq
      %v487 = vshrl.u32 %v486, 7
      %v488 = vsub.s32 %v485, %v487
      %v489 = vrot.slane %v475, %v488
      %v490 = vcombine.high %v482, %v482
      %v491 = vcombine.high %v489, %v489
      %v492 = vcombine.high %v228, %v228
      %v494 = vunpack.c.l.s4 1983009808
      %v495 = vunpack.c.0.s8 %v494
      %v496 = vlaneseq
      %v497 = vshrl.u32 %v496, 7
      %v498 = vsub.s32 %v495, %v497
      %v499 = vrot.slane %v228, %v498
      %v501 = vunpack.c.l.s4 1983009808
      %v502 = vunpack.c.0.s8 %v501
      %v503 = vlaneseq
      %v504 = vshrl.u32 %v503, 7
      %v505 = vsub.s32 %v502, %v504
      %v506 = vrot.slane %v492, %v505
      %v507 = vcombine.high %v499, %v499
      %v508 = vcombine.high %v506, %v506
      %v510 = vunpack.c.l.s4 1983009808
      %v511 = vunpack.c.0.s8 %v510
      %v512 = vlaneseq
      %v513 = vshrl.u32 %v512, 7
      %v514 = vsub.s32 %v511, %v513
      %v515 = vrot.slane %v229, %v514
      %v516 = vcombine.high %v230, %v230
      %v518 = vunpack.c.l.s4 1983009808
      %v519 = vunpack.c.0.s8 %v518
      %v520 = vlaneseq
      %v521 = vshrl.u32 %v520, 7
      %v522 = vsub.s32 %v519, %v521
      %v523 = vrot.slane %v230, %v522
      %v525 = vunpack.c.l.s4 1983009808
      %v526 = vunpack.c.0.s8 %v525
      %v527 = vlaneseq
      %v528 = vshrl.u32 %v527, 7
      %v529 = vsub.s32 %v526, %v528
      %v530 = vrot.slane %v516, %v529
      %v531 = vcombine.high %v523, %v523
      %v532 = vcombine.high %v530, %v530
      %v533 = vcombine.high %v231, %v231
      %v535 = vunpack.c.l.s4 1983009808
      %v536 = vunpack.c.0.s8 %v535
      %v537 = vlaneseq
      %v538 = vshrl.u32 %v537, 7
      %v539 = vsub.s32 %v536, %v538
      %v540 = vrot.slane %v231, %v539
      %v542 = vunpack.c.l.s4 1983009808
      %v543 = vunpack.c.0.s8 %v542
      %v544 = vlaneseq
      %v545 = vshrl.u32 %v544, 7
      %v546 = vsub.s32 %v543, %v545
      %v547 = vrot.slane %v533, %v546
      %v548 = vcombine.high %v540, %v540
      %v549 = vcombine.high %v547, %v547
      %v551 = vunpack.c.l.s4 1983009808
      %v552 = vunpack.c.0.s8 %v551
      %v553 = vlaneseq
      %v554 = vshrl.u32 %v553, 7
      %v555 = vsub.s32 %v552, %v554
      %v556 = vrot.slane %v232, %v555
      %v557 = vcombine.high %v233, %v233
      %v559 = vunpack.c.l.s4 1983009808
      %v560 = vunpack.c.0.s8 %v559
      %v561 = vlaneseq
      %v562 = vshrl.u32 %v561, 7
      %v563 = vsub.s32 %v560, %v562
      %v564 = vrot.slane %v233, %v563
      %v566 = vunpack.c.l.s4 1983009808
      %v567 = vunpack.c.0.s8 %v566
      %v568 = vlaneseq
      %v569 = vshrl.u32 %v568, 7
      %v570 = vsub.s32 %v567, %v569
      %v571 = vrot.slane %v557, %v570
      %v572 = vcombine.high %v564, %v564
      %v573 = vcombine.high %v571, %v571
      %v574 = vcombine.high %v234, %v234
      %v576 = vunpack.c.l.s4 1983009808
      %v577 = vunpack.c.0.s8 %v576
      %v578 = vlaneseq
      %v579 = vshrl.u32 %v578, 7
      %v580 = vsub.s32 %v577, %v579
      %v581 = vrot.slane %v234, %v580
      %v583 = vunpack.c.l.s4 1983009808
      %v584 = vunpack.c.0.s8 %v583
      %v585 = vlaneseq
      %v586 = vshrl.u32 %v585, 7
      %v587 = vsub.s32 %v584, %v586
      %v588 = vrot.slane %v574, %v587
      %v589 = vcombine.high %v581, %v581
      %v590 = vcombine.high %v588, %v588
      %v592 = vunpack.c.l.s4 1983009808
      %v593 = vunpack.c.0.s8 %v592
      %v594 = vlaneseq
      %v595 = vshrl.u32 %v594, 7
      %v596 = vsub.s32 %v593, %v595
      %v597 = vrot.slane %v235, %v596
      %v598 = vcombine.high %v236, %v236
      %v600 = vunpack.c.l.s4 1983009808
      %v601 = vunpack.c.0.s8 %v600
      %v602 = vlaneseq
      %v603 = vshrl.u32 %v602, 7
      %v604 = vsub.s32 %v601, %v603
      %v605 = vrot.slane %v236, %v604
      %v607 = vunpack.c.l.s4 1983009808
      %v608 = vunpack.c.0.s8 %v607
      %v609 = vlaneseq
      %v610 = vshrl.u32 %v609, 7
      %v611 = vsub.s32 %v608, %v610
      %v612 = vrot.slane %v598, %v611
      %v613 = vcombine.high %v605, %v605
      %v614 = vcombine.high %v612, %v612
      %v615 = vcombine.high %v237, %v237
      %v617 = vunpack.c.l.s4 1983009808
      %v618 = vunpack.c.0.s8 %v617
      %v619 = vlaneseq
      %v620 = vshrl.u32 %v619, 7
      %v621 = vsub.s32 %v618, %v620
      %v622 = vrot.slane %v237, %v621
      %v624 = vunpack.c.l.s4 1983009808
      %v625 = vunpack.c.0.s8 %v624
      %v626 = vlaneseq
      %v627 = vshrl.u32 %v626, 7
      %v628 = vsub.s32 %v625, %v627
      %v629 = vrot.slane %v615, %v628
      %v630 = vcombine.high %v622, %v622
      %v631 = vcombine.high %v629, %v629
      %v633 = vunpack.c.l.s4 1983009808
      %v634 = vunpack.c.0.s8 %v633
      %v635 = vlaneseq
      %v636 = vshrl.u32 %v635, 7
      %v637 = vsub.s32 %v634, %v636
      %v638 = vrot.slane %v238, %v637
      %v639 = vcombine.high %v239, %v239
      %v641 = vunpack.c.l.s4 1983009808
      %v642 = vunpack.c.0.s8 %v641
      %v643 = vlaneseq
      %v644 = vshrl.u32 %v643, 7
      %v645 = vsub.s32 %v642, %v644
      %v646 = vrot.slane %v239, %v645
      %v648 = vunpack.c.l.s4 1983009808
      %v649 = vunpack.c.0.s8 %v648
      %v650 = vlaneseq
      %v651 = vshrl.u32 %v650, 7
      %v652 = vsub.s32 %v649, %v651
      %v653 = vrot.slane %v639, %v652
      %v654 = vcombine.high %v646, %v646
      %v655 = vcombine.high %v653, %v653
      %v656 = vcombine.high %v240, %v240
      %v658 = vunpack.c.l.s4 1983009808
      %v659 = vunpack.c.0.s8 %v658
      %v660 = vlaneseq
      %v661 = vshrl.u32 %v660, 7
      %v662 = vsub.s32 %v659, %v661
      %v663 = vrot.slane %v240, %v662
      %v665 = vunpack.c.l.s4 1983009808
      %v666 = vunpack.c.0.s8 %v665
      %v667 = vlaneseq
      %v668 = vshrl.u32 %v667, 7
      %v669 = vsub.s32 %v666, %v668
      %v670 = vrot.slane %v656, %v669
      %v671 = vcombine.high %v663, %v663
      %v672 = vcombine.high %v670, %v670
      %v674 = vunpack.c.l.s4 1983009808
      %v675 = vunpack.c.0.s8 %v674
      %v676 = vlaneseq
      %v677 = vshrl.u32 %v676, 7
      %v678 = vsub.s32 %v675, %v677
      %v679 = vrot.slane %v241, %v678
      %v680 = vcombine.high %v242, %v242
      %v682 = vunpack.c.l.s4 1983009808
      %v683 = vunpack.c.0.s8 %v682
      %v684 = vlaneseq
      %v685 = vshrl.u32 %v684, 7
      %v686 = vsub.s32 %v683, %v685
      %v687 = vrot.slane %v242, %v686
      %v689 = vunpack.c.l.s4 1983009808
      %v690 = vunpack.c.0.s8 %v689
      %v691 = vlaneseq
      %v692 = vshrl.u32 %v691, 7
      %v693 = vsub.s32 %v690, %v692
      %v694 = vrot.slane %v680, %v693
      %v695 = vcombine.high %v687, %v687
      %v696 = vcombine.high %v694, %v694
      %v697 = vcombine.high %v243, %v243
      %v699 = vunpack.c.l.s4 1983009808
      %v700 = vunpack.c.0.s8 %v699
      %v701 = vlaneseq
      %v702 = vshrl.u32 %v701, 7
      %v703 = vsub.s32 %v700, %v702
      %v704 = vrot.slane %v243, %v703
      %v706 = vunpack.c.l.s4 1983009808
      %v707 = vunpack.c.0.s8 %v706
      %v708 = vlaneseq
      %v709 = vshrl.u32 %v708, 7
      %v710 = vsub.s32 %v707, %v709
      %v711 = vrot.slane %v697, %v710
      %v712 = vcombine.high %v704, %v704
      %v713 = vcombine.high %v711, %v711
      %v715 = vunpack.c.l.s4 1983009808
      %v716 = vunpack.c.0.s8 %v715
      %v717 = vlaneseq
      %v718 = vshrl.u32 %v717, 7
      %v719 = vsub.s32 %v716, %v718
      %v720 = vrot.slane %v244, %v719
      %v721 = vcombine.high %v245, %v245
      %v723 = vunpack.c.l.s4 1983009808
      %v724 = vunpack.c.0.s8 %v723
      %v725 = vlaneseq
      %v726 = vshrl.u32 %v725, 7
      %v727 = vsub.s32 %v724, %v726
      %v728 = vrot.slane %v245, %v727
      %v730 = vunpack.c.l.s4 1983009808
      %v731 = vunpack.c.0.s8 %v730
      %v732 = vlaneseq
      %v733 = vshrl.u32 %v732, 7
      %v734 = vsub.s32 %v731, %v733
      %v735 = vrot.slane %v721, %v734
      %v736 = vcombine.high %v728, %v728
      %v737 = vcombine.high %v735, %v735
      %v738 = vcombine.high %v246, %v246
      %v740 = vunpack.c.l.s4 1983009808
      %v741 = vunpack.c.0.s8 %v740
      %v742 = vlaneseq
      %v743 = vshrl.u32 %v742, 7
      %v744 = vsub.s32 %v741, %v743
      %v745 = vrot.slane %v246, %v744
      %v747 = vunpack.c.l.s4 1983009808
      %v748 = vunpack.c.0.s8 %v747
      %v749 = vlaneseq
      %v750 = vshrl.u32 %v749, 7
      %v751 = vsub.s32 %v748, %v750
      %v752 = vrot.slane %v738, %v751
      %v753 = vcombine.high %v745, %v745
      %v754 = vcombine.high %v752, %v752
      %v756 = vunpack.c.l.s4 1983009808
      %v757 = vunpack.c.0.s8 %v756
      %v758 = vlaneseq
      %v759 = vshrl.u32 %v758, 7
      %v760 = vsub.s32 %v757, %v759
      %v761 = vrot.slane %v247, %v760
      %v762 = vcombine.high %v248, %v248
      %v764 = vunpack.c.l.s4 1983009808
      %v765 = vunpack.c.0.s8 %v764
      %v766 = vlaneseq
      %v767 = vshrl.u32 %v766, 7
      %v768 = vsub.s32 %v765, %v767
      %v769 = vrot.slane %v248, %v768
      %v771 = vunpack.c.l.s4 1983009808
      %v772 = vunpack.c.0.s8 %v771
      %v773 = vlaneseq
      %v774 = vshrl.u32 %v773, 7
      %v775 = vsub.s32 %v772, %v774
      %v776 = vrot.slane %v762, %v775
      %v777 = vcombine.high %v769, %v769
      %v778 = vcombine.high %v776, %v776
      %v779 = vcombine.high %v249, %v249
      %v781 = vunpack.c.l.s4 1983009808
      %v782 = vunpack.c.0.s8 %v781
      %v783 = vlaneseq
      %v784 = vshrl.u32 %v783, 7
      %v785 = vsub.s32 %v782, %v784
      %v786 = vrot.slane %v249, %v785
      %v788 = vunpack.c.l.s4 1983009808
      %v789 = vunpack.c.0.s8 %v788
      %v790 = vlaneseq
      %v791 = vshrl.u32 %v790, 7
      %v792 = vsub.s32 %v789, %v791
      %v793 = vrot.slane %v779, %v792
      %v794 = vcombine.high %v786, %v786
      %v795 = vcombine.high %v793, %v793
      %v797 = vunpack.c.l.s4 1983009808
      %v798 = vunpack.c.0.s8 %v797
      %v799 = vlaneseq
      %v800 = vshrl.u32 %v799, 7
      %v801 = vsub.s32 %v798, %v800
      %v802 = vrot.slane %v250, %v801
      %v803 = vcombine.high %v251, %v251
      %v805 = vunpack.c.l.s4 1983009808
      %v806 = vunpack.c.0.s8 %v805
      %v807 = vlaneseq
      %v808 = vshrl.u32 %v807, 7
      %v809 = vsub.s32 %v806, %v808
      %v810 = vrot.slane %v251, %v809
      %v812 = vunpack.c.l.s4 1983009808
      %v813 = vunpack.c.0.s8 %v812
      %v814 = vlaneseq
      %v815 = vshrl.u32 %v814, 7
      %v816 = vsub.s32 %v813, %v815
      %v817 = vrot.slane %v803, %v816
      %v818 = vcombine.high %v810, %v810
      %v819 = vcombine.high %v817, %v817
      %v820 = vcombine.high %v252, %v252
      %v822 = vunpack.c.l.s4 1983009808
      %v823 = vunpack.c.0.s8 %v822
      %v824 = vlaneseq
      %v825 = vshrl.u32 %v824, 7
      %v826 = vsub.s32 %v823, %v825
      %v827 = vrot.slane %v252, %v826
      %v829 = vunpack.c.l.s4 1983009808
      %v830 = vunpack.c.0.s8 %v829
      %v831 = vlaneseq
      %v832 = vshrl.u32 %v831, 7
      %v833 = vsub.s32 %v830, %v832
      %v834 = vrot.slane %v820, %v833
      %v835 = vcombine.high %v827, %v827
      %v836 = vcombine.high %v834, %v834
      %v838 = vunpack.c.l.s4 1983009808
      %v839 = vunpack.c.0.s8 %v838
      %v840 = vlaneseq
      %v841 = vshrl.u32 %v840, 7
      %v842 = vsub.s32 %v839, %v841
      %v843 = vrot.slane %v253, %v842
      %v844 = vcombine.high %v254, %v254
      %v846 = vunpack.c.l.s4 1983009808
      %v847 = vunpack.c.0.s8 %v846
      %v848 = vlaneseq
      %v849 = vshrl.u32 %v848, 7
      %v850 = vsub.s32 %v847, %v849
      %v851 = vrot.slane %v254, %v850
      %v853 = vunpack.c.l.s4 1983009808
      %v854 = vunpack.c.0.s8 %v853
      %v855 = vlaneseq
      %v856 = vshrl.u32 %v855, 7
      %v857 = vsub.s32 %v854, %v856
      %v858 = vrot.slane %v844, %v857
      %v859 = vcombine.high %v851, %v851
      %v860 = vcombine.high %v858, %v858
      %v861 = vcombine.high %v255, %v255
      %v863 = vunpack.c.l.s4 1983009808
      %v864 = vunpack.c.0.s8 %v863
      %v865 = vlaneseq
      %v866 = vshrl.u32 %v865, 7
      %v867 = vsub.s32 %v864, %v866
      %v868 = vrot.slane %v255, %v867
      %v870 = vunpack.c.l.s4 1983009808
      %v871 = vunpack.c.0.s8 %v870
      %v872 = vlaneseq
      %v873 = vshrl.u32 %v872, 7
      %v874 = vsub.s32 %v871, %v873
      %v875 = vrot.slane %v861, %v874
      %v876 = vcombine.high %v868, %v868
      %v877 = vcombine.high %v875, %v875
      %v879 = vunpack.c.l.s4 1983009808
      %v880 = vunpack.c.0.s8 %v879
      %v881 = vlaneseq
      %v882 = vshrl.u32 %v881, 7
      %v883 = vsub.s32 %v880, %v882
      %v884 = vrot.slane %v256, %v883
      %v885 = vcombine.high %v257, %v257
      %v887 = vunpack.c.l.s4 1983009808
      %v888 = vunpack.c.0.s8 %v887
      %v889 = vlaneseq
      %v890 = vshrl.u32 %v889, 7
      %v891 = vsub.s32 %v888, %v890
      %v892 = vrot.slane %v257, %v891
      %v894 = vunpack.c.l.s4 1983009808
      %v895 = vunpack.c.0.s8 %v894
      %v896 = vlaneseq
      %v897 = vshrl.u32 %v896, 7
      %v898 = vsub.s32 %v895, %v897
      %v899 = vrot.slane %v885, %v898
      %v900 = vcombine.high %v892, %v892
      %v901 = vcombine.high %v899, %v899
      %v902 = vcombine.high %v258, %v258
      %v904 = vunpack.c.l.s4 1983009808
      %v905 = vunpack.c.0.s8 %v904
      %v906 = vlaneseq
      %v907 = vshrl.u32 %v906, 7
      %v908 = vsub.s32 %v905, %v907
      %v909 = vrot.slane %v258, %v908
      %v911 = vunpack.c.l.s4 1983009808
      %v912 = vunpack.c.0.s8 %v911
      %v913 = vlaneseq
      %v914 = vshrl.u32 %v913, 7
      %v915 = vsub.s32 %v912, %v914
      %v916 = vrot.slane %v902, %v915
      %v917 = vcombine.high %v909, %v909
      %v918 = vcombine.high %v916, %v916
      %v920 = vunpack.c.l.s4 1983009808
      %v921 = vunpack.c.0.s8 %v920
      %v922 = vlaneseq
      %v923 = vshrl.u32 %v922, 7
      %v924 = vsub.s32 %v921, %v923
      %v925 = vrot.slane %v259, %v924
      %v926 = vcombine.high %v260, %v260
      %v928 = vunpack.c.l.s4 1983009808
      %v929 = vunpack.c.0.s8 %v928
      %v930 = vlaneseq
      %v931 = vshrl.u32 %v930, 7
      %v932 = vsub.s32 %v929, %v931
      %v933 = vrot.slane %v260, %v932
      %v935 = vunpack.c.l.s4 1983009808
      %v936 = vunpack.c.0.s8 %v935
      %v937 = vlaneseq
      %v938 = vshrl.u32 %v937, 7
      %v939 = vsub.s32 %v936, %v938
      %v940 = vrot.slane %v926, %v939
      %v941 = vcombine.high %v933, %v933
      %v942 = vcombine.high %v940, %v940
      %v943 = vcombine.high %v261, %v261
      %v945 = vunpack.c.l.s4 1983009808
      %v946 = vunpack.c.0.s8 %v945
      %v947 = vlaneseq
      %v948 = vshrl.u32 %v947, 7
      %v949 = vsub.s32 %v946, %v948
      %v950 = vrot.slane %v261, %v949
      %v952 = vunpack.c.l.s4 1983009808
      %v953 = vunpack.c.0.s8 %v952
      %v954 = vlaneseq
      %v955 = vshrl.u32 %v954, 7
      %v956 = vsub.s32 %v953, %v955
      %v957 = vrot.slane %v943, %v956
      %v958 = vcombine.high %v950, %v950
      %v959 = vcombine.high %v957, %v957
      %v961 = vunpack.c.l.s4 1983009808
      %v962 = vunpack.c.0.s8 %v961
      %v963 = vlaneseq
      %v964 = vshrl.u32 %v963, 7
      %v965 = vsub.s32 %v962, %v964
      %v966 = vrot.slane %v262, %v965
      %v967 = vld [vmem:[%s1] sm:$0xff]
      %v968 = vld [vmem:[%s1 + $0x8] sm:$0xff]
      %v969 = vld [vmem:[%s1 + $0x10] sm:$0xff]
      %v970 = vld [vmem:[%s1 + $0x18] sm:$0xf]
      %v971 = vld [vmem:[%s1 + $0x20] sm:$0xf]
      %v972 = vld [vmem:[%s1 + $0x28] sm:$0xf]
      %v973 = vcombine.low %v318, %v326
      %v974 = vcombine.low %v325, %v327
      %v976 = vunpack.c.l.s4 1983009808
      %v977 = vunpack.c.0.s8 %v976
      %v978 = vlaneseq
      %v979 = vshrl.u32 %v978, 7
      %v980 = vsub.s32 %v977, %v979
      %v981 = vrot.slane %v973, %v980
      %v983 = vunpack.c.l.s4 1983009808
      %v984 = vunpack.c.0.s8 %v983
      %v985 = vlaneseq
      %v986 = vshrl.u32 %v985, 7
      %v987 = vsub.s32 %v984, %v986
      %v988 = vrot.slane %v974, %v987
      %v989 = vcombine.low %v981, %v988
      %v990 = vcombine.low %v335, %v343
      %v991 = vcombine.low %v342, %v344
      %v993 = vunpack.c.l.s4 1983009808
      %v994 = vunpack.c.0.s8 %v993
      %v995 = vlaneseq
      %v996 = vshrl.u32 %v995, 7
      %v997 = vsub.s32 %v994, %v996
      %v998 = vrot.slane %v990, %v997
      %v1000 = vunpack.c.l.s4 1983009808
      %v1001 = vunpack.c.0.s8 %v1000
      %v1002 = vlaneseq
      %v1003 = vshrl.u32 %v1002, 7
      %v1004 = vsub.s32 %v1001, %v1003
      %v1005 = vrot.slane %v991, %v1004
      %v1006 = vcombine.low %v998, %v1005
      %v1007 = vcombine.low %v351, %v359
      %v1008 = vcombine.low %v367, %v366
      %v1010 = vunpack.c.l.s4 1983009808
      %v1011 = vunpack.c.0.s8 %v1010
      %v1012 = vlaneseq
      %v1013 = vshrl.u32 %v1012, 7
      %v1014 = vsub.s32 %v1011, %v1013
      %v1015 = vrot.slane %v1007, %v1014
      %v1017 = vunpack.c.l.s4 1983009808
      %v1018 = vunpack.c.0.s8 %v1017
      %v1019 = vlaneseq
      %v1020 = vshrl.u32 %v1019, 7
      %v1021 = vsub.s32 %v1018, %v1020
      %v1022 = vrot.slane %v1008, %v1021
      %v1023 = vcombine.low %v1015, %v1022
      %v1024 = vcombine.low %v368, %v376
      %v1025 = vcombine.low %v384, %v383
      %v1027 = vunpack.c.l.s4 1983009808
      %v1028 = vunpack.c.0.s8 %v1027
      %v1029 = vlaneseq
      %v1030 = vshrl.u32 %v1029, 7
      %v1031 = vsub.s32 %v1028, %v1030
      %v1032 = vrot.slane %v1024, %v1031
      %v1034 = vunpack.c.l.s4 1983009808
      %v1035 = vunpack.c.0.s8 %v1034
      %v1036 = vlaneseq
      %v1037 = vshrl.u32 %v1036, 7
      %v1038 = vsub.s32 %v1035, %v1037
      %v1039 = vrot.slane %v1025, %v1038
      %v1040 = vcombine.low %v1032, %v1039
      %v1041 = vcombine.low %v385, %v392
      %v1042 = vcombine.low %v400, %v408
      %v1044 = vunpack.c.l.s4 1983009808
      %v1045 = vunpack.c.0.s8 %v1044
      %v1046 = vlaneseq
      %v1047 = vshrl.u32 %v1046, 7
      %v1048 = vsub.s32 %v1045, %v1047
      %v1049 = vrot.slane %v1041, %v1048
      %v1051 = vunpack.c.l.s4 1983009808
      %v1052 = vunpack.c.0.s8 %v1051
      %v1053 = vlaneseq
      %v1054 = vshrl.u32 %v1053, 7
      %v1055 = vsub.s32 %v1052, %v1054
      %v1056 = vrot.slane %v1042, %v1055
      %v1057 = vcombine.low %v1049, %v1056
      %v1058 = vcombine.low %v407, %v409
      %v1059 = vcombine.low %v417, %v425
      %v1061 = vunpack.c.l.s4 1983009808
      %v1062 = vunpack.c.0.s8 %v1061
      %v1063 = vlaneseq
      %v1064 = vshrl.u32 %v1063, 7
      %v1065 = vsub.s32 %v1062, %v1064
      %v1066 = vrot.slane %v1058, %v1065
      %v1068 = vunpack.c.l.s4 1983009808
      %v1069 = vunpack.c.0.s8 %v1068
      %v1070 = vlaneseq
      %v1071 = vshrl.u32 %v1070, 7
      %v1072 = vsub.s32 %v1069, %v1071
      %v1073 = vrot.slane %v1059, %v1072
      %v1074 = vcombine.low %v1066, %v1073
      %v1075 = vcombine.low %v424, %v426
      %v1076 = vcombine.low %v433, %v441
      %v1078 = vunpack.c.l.s4 1983009808
      %v1079 = vunpack.c.0.s8 %v1078
      %v1080 = vlaneseq
      %v1081 = vshrl.u32 %v1080, 7
      %v1082 = vsub.s32 %v1079, %v1081
      %v1083 = vrot.slane %v1075, %v1082
      %v1085 = vunpack.c.l.s4 1983009808
      %v1086 = vunpack.c.0.s8 %v1085
      %v1087 = vlaneseq
      %v1088 = vshrl.u32 %v1087, 7
      %v1089 = vsub.s32 %v1086, %v1088
      %v1090 = vrot.slane %v1076, %v1089
      %v1091 = vcombine.low %v1083, %v1090
      %v1092 = vcombine.low %v449, %v448
      %v1093 = vcombine.low %v450, %v458
      %v1095 = vunpack.c.l.s4 1983009808
      %v1096 = vunpack.c.0.s8 %v1095
      %v1097 = vlaneseq
      %v1098 = vshrl.u32 %v1097, 7
      %v1099 = vsub.s32 %v1096, %v1098
      %v1100 = vrot.slane %v1092, %v1099
      %v1102 = vunpack.c.l.s4 1983009808
      %v1103 = vunpack.c.0.s8 %v1102
      %v1104 = vlaneseq
      %v1105 = vshrl.u32 %v1104, 7
      %v1106 = vsub.s32 %v1103, %v1105
      %v1107 = vrot.slane %v1093, %v1106
      %v1108 = vcombine.low %v1100, %v1107
      %v1109 = vcombine.low %v466, %v465
      %v1110 = vcombine.low %v467, %v474
      %v1112 = vunpack.c.l.s4 1983009808
      %v1113 = vunpack.c.0.s8 %v1112
      %v1114 = vlaneseq
      %v1115 = vshrl.u32 %v1114, 7
      %v1116 = vsub.s32 %v1113, %v1115
      %v1117 = vrot.slane %v1109, %v1116
      %v1119 = vunpack.c.l.s4 1983009808
      %v1120 = vunpack.c.0.s8 %v1119
      %v1121 = vlaneseq
      %v1122 = vshrl.u32 %v1121, 7
      %v1123 = vsub.s32 %v1120, %v1122
      %v1124 = vrot.slane %v1110, %v1123
      %v1125 = vcombine.low %v1117, %v1124
      %v1126 = vcombine.low %v482, %v490
      %v1127 = vcombine.low %v489, %v491
      %v1129 = vunpack.c.l.s4 1983009808
      %v1130 = vunpack.c.0.s8 %v1129
      %v1131 = vlaneseq
      %v1132 = vshrl.u32 %v1131, 7
      %v1133 = vsub.s32 %v1130, %v1132
      %v1134 = vrot.slane %v1126, %v1133
      %v1136 = vunpack.c.l.s4 1983009808
      %v1137 = vunpack.c.0.s8 %v1136
      %v1138 = vlaneseq
      %v1139 = vshrl.u32 %v1138, 7
      %v1140 = vsub.s32 %v1137, %v1139
      %v1141 = vrot.slane %v1127, %v1140
      %v1142 = vcombine.low %v1134, %v1141
      %v1143 = vcombine.low %v499, %v507
      %v1144 = vcombine.low %v506, %v508
      %v1146 = vunpack.c.l.s4 1983009808
      %v1147 = vunpack.c.0.s8 %v1146
      %v1148 = vlaneseq
      %v1149 = vshrl.u32 %v1148, 7
      %v1150 = vsub.s32 %v1147, %v1149
      %v1151 = vrot.slane %v1143, %v1150
      %v1153 = vunpack.c.l.s4 1983009808
      %v1154 = vunpack.c.0.s8 %v1153
      %v1155 = vlaneseq
      %v1156 = vshrl.u32 %v1155, 7
      %v1157 = vsub.s32 %v1154, %v1156
      %v1158 = vrot.slane %v1144, %v1157
      %v1159 = vcombine.low %v1151, %v1158
      %v1160 = vcombine.low %v515, %v523
      %v1161 = vcombine.low %v531, %v530
      %v1163 = vunpack.c.l.s4 1983009808
      %v1164 = vunpack.c.0.s8 %v1163
      %v1165 = vlaneseq
      %v1166 = vshrl.u32 %v1165, 7
      %v1167 = vsub.s32 %v1164, %v1166
      %v1168 = vrot.slane %v1160, %v1167
      %v1170 = vunpack.c.l.s4 1983009808
      %v1171 = vunpack.c.0.s8 %v1170
      %v1172 = vlaneseq
      %v1173 = vshrl.u32 %v1172, 7
      %v1174 = vsub.s32 %v1171, %v1173
      %v1175 = vrot.slane %v1161, %v1174
      %v1176 = vcombine.low %v1168, %v1175
      %v1177 = vcombine.low %v532, %v540
      %v1178 = vcombine.low %v548, %v547
      %v1180 = vunpack.c.l.s4 1983009808
      %v1181 = vunpack.c.0.s8 %v1180
      %v1182 = vlaneseq
      %v1183 = vshrl.u32 %v1182, 7
      %v1184 = vsub.s32 %v1181, %v1183
      %v1185 = vrot.slane %v1177, %v1184
      %v1187 = vunpack.c.l.s4 1983009808
      %v1188 = vunpack.c.0.s8 %v1187
      %v1189 = vlaneseq
      %v1190 = vshrl.u32 %v1189, 7
      %v1191 = vsub.s32 %v1188, %v1190
      %v1192 = vrot.slane %v1178, %v1191
      %v1193 = vcombine.low %v1185, %v1192
      %v1194 = vcombine.low %v549, %v556
      %v1195 = vcombine.low %v564, %v572
      %v1197 = vunpack.c.l.s4 1983009808
      %v1198 = vunpack.c.0.s8 %v1197
      %v1199 = vlaneseq
      %v1200 = vshrl.u32 %v1199, 7
      %v1201 = vsub.s32 %v1198, %v1200
      %v1202 = vrot.slane %v1194, %v1201
      %v1204 = vunpack.c.l.s4 1983009808
      %v1205 = vunpack.c.0.s8 %v1204
      %v1206 = vlaneseq
      %v1207 = vshrl.u32 %v1206, 7
      %v1208 = vsub.s32 %v1205, %v1207
      %v1209 = vrot.slane %v1195, %v1208
      %v1210 = vcombine.low %v1202, %v1209
      %v1211 = vcombine.low %v571, %v573
      %v1212 = vcombine.low %v581, %v589
      %v1214 = vunpack.c.l.s4 1983009808
      %v1215 = vunpack.c.0.s8 %v1214
      %v1216 = vlaneseq
      %v1217 = vshrl.u32 %v1216, 7
      %v1218 = vsub.s32 %v1215, %v1217
      %v1219 = vrot.slane %v1211, %v1218
      %v1221 = vunpack.c.l.s4 1983009808
      %v1222 = vunpack.c.0.s8 %v1221
      %v1223 = vlaneseq
      %v1224 = vshrl.u32 %v1223, 7
      %v1225 = vsub.s32 %v1222, %v1224
      %v1226 = vrot.slane %v1212, %v1225
      %v1227 = vcombine.low %v1219, %v1226
      %v1228 = vcombine.low %v588, %v590
      %v1229 = vcombine.low %v597, %v605
      %v1231 = vunpack.c.l.s4 1983009808
      %v1232 = vunpack.c.0.s8 %v1231
      %v1233 = vlaneseq
      %v1234 = vshrl.u32 %v1233, 7
      %v1235 = vsub.s32 %v1232, %v1234
      %v1236 = vrot.slane %v1228, %v1235
      %v1238 = vunpack.c.l.s4 1983009808
      %v1239 = vunpack.c.0.s8 %v1238
      %v1240 = vlaneseq
      %v1241 = vshrl.u32 %v1240, 7
      %v1242 = vsub.s32 %v1239, %v1241
      %v1243 = vrot.slane %v1229, %v1242
      %v1244 = vcombine.low %v1236, %v1243
      %v1245 = vcombine.low %v613, %v612
      %v1246 = vcombine.low %v614, %v622
      %v1248 = vunpack.c.l.s4 1983009808
      %v1249 = vunpack.c.0.s8 %v1248
      %v1250 = vlaneseq
      %v1251 = vshrl.u32 %v1250, 7
      %v1252 = vsub.s32 %v1249, %v1251
      %v1253 = vrot.slane %v1245, %v1252
      %v1255 = vunpack.c.l.s4 1983009808
      %v1256 = vunpack.c.0.s8 %v1255
      %v1257 = vlaneseq
      %v1258 = vshrl.u32 %v1257, 7
      %v1259 = vsub.s32 %v1256, %v1258
      %v1260 = vrot.slane %v1246, %v1259
      %v1261 = vcombine.low %v1253, %v1260
      %v1262 = vcombine.low %v630, %v629
      %v1263 = vcombine.low %v631, %v638
      %v1265 = vunpack.c.l.s4 1983009808
      %v1266 = vunpack.c.0.s8 %v1265
      %v1267 = vlaneseq
      %v1268 = vshrl.u32 %v1267, 7
      %v1269 = vsub.s32 %v1266, %v1268
      %v1270 = vrot.slane %v1262, %v1269
      %v1272 = vunpack.c.l.s4 1983009808
      %v1273 = vunpack.c.0.s8 %v1272
      %v1274 = vlaneseq
      %v1275 = vshrl.u32 %v1274, 7
      %v1276 = vsub.s32 %v1273, %v1275
      %v1277 = vrot.slane %v1263, %v1276
      %v1278 = vcombine.low %v1270, %v1277
      %v1279 = vcombine.low %v646, %v654
      %v1280 = vcombine.low %v653, %v655
      %v1282 = vunpack.c.l.s4 1983009808
      %v1283 = vunpack.c.0.s8 %v1282
      %v1284 = vlaneseq
      %v1285 = vshrl.u32 %v1284, 7
      %v1286 = vsub.s32 %v1283, %v1285
      %v1287 = vrot.slane %v1279, %v1286
      %v1289 = vunpack.c.l.s4 1983009808
      %v1290 = vunpack.c.0.s8 %v1289
      %v1291 = vlaneseq
      %v1292 = vshrl.u32 %v1291, 7
      %v1293 = vsub.s32 %v1290, %v1292
      %v1294 = vrot.slane %v1280, %v1293
      %v1295 = vcombine.low %v1287, %v1294
      %v1296 = vcombine.low %v663, %v671
      %v1297 = vcombine.low %v670, %v672
      %v1299 = vunpack.c.l.s4 1983009808
      %v1300 = vunpack.c.0.s8 %v1299
      %v1301 = vlaneseq
      %v1302 = vshrl.u32 %v1301, 7
      %v1303 = vsub.s32 %v1300, %v1302
      %v1304 = vrot.slane %v1296, %v1303
      %v1306 = vunpack.c.l.s4 1983009808
      %v1307 = vunpack.c.0.s8 %v1306
      %v1308 = vlaneseq
      %v1309 = vshrl.u32 %v1308, 7
      %v1310 = vsub.s32 %v1307, %v1309
      %v1311 = vrot.slane %v1297, %v1310
      %v1312 = vcombine.low %v1304, %v1311
      %v1313 = vcombine.low %v679, %v687
      %v1314 = vcombine.low %v695, %v694
      %v1316 = vunpack.c.l.s4 1983009808
      %v1317 = vunpack.c.0.s8 %v1316
      %v1318 = vlaneseq
      %v1319 = vshrl.u32 %v1318, 7
      %v1320 = vsub.s32 %v1317, %v1319
      %v1321 = vrot.slane %v1313, %v1320
      %v1323 = vunpack.c.l.s4 1983009808
      %v1324 = vunpack.c.0.s8 %v1323
      %v1325 = vlaneseq
      %v1326 = vshrl.u32 %v1325, 7
      %v1327 = vsub.s32 %v1324, %v1326
      %v1328 = vrot.slane %v1314, %v1327
      %v1329 = vcombine.low %v1321, %v1328
      %v1330 = vcombine.low %v696, %v704
      %v1331 = vcombine.low %v712, %v711
      %v1333 = vunpack.c.l.s4 1983009808
      %v1334 = vunpack.c.0.s8 %v1333
      %v1335 = vlaneseq
      %v1336 = vshrl.u32 %v1335, 7
      %v1337 = vsub.s32 %v1334, %v1336
      %v1338 = vrot.slane %v1330, %v1337
      %v1340 = vunpack.c.l.s4 1983009808
      %v1341 = vunpack.c.0.s8 %v1340
      %v1342 = vlaneseq
      %v1343 = vshrl.u32 %v1342, 7
      %v1344 = vsub.s32 %v1341, %v1343
      %v1345 = vrot.slane %v1331, %v1344
      %v1346 = vcombine.low %v1338, %v1345
      %v1347 = vcombine.low %v713, %v720
      %v1348 = vcombine.low %v728, %v736
      %v1350 = vunpack.c.l.s4 1983009808
      %v1351 = vunpack.c.0.s8 %v1350
      %v1352 = vlaneseq
      %v1353 = vshrl.u32 %v1352, 7
      %v1354 = vsub.s32 %v1351, %v1353
      %v1355 = vrot.slane %v1347, %v1354
      %v1357 = vunpack.c.l.s4 1983009808
      %v1358 = vunpack.c.0.s8 %v1357
      %v1359 = vlaneseq
      %v1360 = vshrl.u32 %v1359, 7
      %v1361 = vsub.s32 %v1358, %v1360
      %v1362 = vrot.slane %v1348, %v1361
      %v1363 = vcombine.low %v1355, %v1362
      %v1364 = vcombine.low %v735, %v737
      %v1365 = vcombine.low %v745, %v753
      %v1367 = vunpack.c.l.s4 1983009808
      %v1368 = vunpack.c.0.s8 %v1367
      %v1369 = vlaneseq
      %v1370 = vshrl.u32 %v1369, 7
      %v1371 = vsub.s32 %v1368, %v1370
      %v1372 = vrot.slane %v1364, %v1371
      %v1374 = vunpack.c.l.s4 1983009808
      %v1375 = vunpack.c.0.s8 %v1374
      %v1376 = vlaneseq
      %v1377 = vshrl.u32 %v1376, 7
      %v1378 = vsub.s32 %v1375, %v1377
      %v1379 = vrot.slane %v1365, %v1378
      %v1380 = vcombine.low %v1372, %v1379
      %v1381 = vcombine.low %v752, %v754
      %v1382 = vcombine.low %v761, %v769
      %v1384 = vunpack.c.l.s4 1983009808
      %v1385 = vunpack.c.0.s8 %v1384
      %v1386 = vlaneseq
      %v1387 = vshrl.u32 %v1386, 7
      %v1388 = vsub.s32 %v1385, %v1387
      %v1389 = vrot.slane %v1381, %v1388
      %v1391 = vunpack.c.l.s4 1983009808
      %v1392 = vunpack.c.0.s8 %v1391
      %v1393 = vlaneseq
      %v1394 = vshrl.u32 %v1393, 7
      %v1395 = vsub.s32 %v1392, %v1394
      %v1396 = vrot.slane %v1382, %v1395
      %v1397 = vcombine.low %v1389, %v1396
      %v1398 = vcombine.low %v777, %v776
      %v1399 = vcombine.low %v778, %v786
      %v1401 = vunpack.c.l.s4 1983009808
      %v1402 = vunpack.c.0.s8 %v1401
      %v1403 = vlaneseq
      %v1404 = vshrl.u32 %v1403, 7
      %v1405 = vsub.s32 %v1402, %v1404
      %v1406 = vrot.slane %v1398, %v1405
      %v1408 = vunpack.c.l.s4 1983009808
      %v1409 = vunpack.c.0.s8 %v1408
      %v1410 = vlaneseq
      %v1411 = vshrl.u32 %v1410, 7
      %v1412 = vsub.s32 %v1409, %v1411
      %v1413 = vrot.slane %v1399, %v1412
      %v1414 = vcombine.low %v1406, %v1413
      %v1415 = vcombine.low %v794, %v793
      %v1416 = vcombine.low %v795, %v802
      %v1418 = vunpack.c.l.s4 1983009808
      %v1419 = vunpack.c.0.s8 %v1418
      %v1420 = vlaneseq
      %v1421 = vshrl.u32 %v1420, 7
      %v1422 = vsub.s32 %v1419, %v1421
      %v1423 = vrot.slane %v1415, %v1422
      %v1425 = vunpack.c.l.s4 1983009808
      %v1426 = vunpack.c.0.s8 %v1425
      %v1427 = vlaneseq
      %v1428 = vshrl.u32 %v1427, 7
      %v1429 = vsub.s32 %v1426, %v1428
      %v1430 = vrot.slane %v1416, %v1429
      %v1431 = vcombine.low %v1423, %v1430
      %v1432 = vcombine.low %v810, %v818
      %v1433 = vcombine.low %v817, %v819
      %v1435 = vunpack.c.l.s4 1983009808
      %v1436 = vunpack.c.0.s8 %v1435
      %v1437 = vlaneseq
      %v1438 = vshrl.u32 %v1437, 7
      %v1439 = vsub.s32 %v1436, %v1438
      %v1440 = vrot.slane %v1432, %v1439
      %v1442 = vunpack.c.l.s4 1983009808
      %v1443 = vunpack.c.0.s8 %v1442
      %v1444 = vlaneseq
      %v1445 = vshrl.u32 %v1444, 7
      %v1446 = vsub.s32 %v1443, %v1445
      %v1447 = vrot.slane %v1433, %v1446
      %v1448 = vcombine.low %v1440, %v1447
      %v1449 = vcombine.low %v827, %v835
      %v1450 = vcombine.low %v834, %v836
      %v1452 = vunpack.c.l.s4 1983009808
      %v1453 = vunpack.c.0.s8 %v1452
      %v1454 = vlaneseq
      %v1455 = vshrl.u32 %v1454, 7
      %v1456 = vsub.s32 %v1453, %v1455
      %v1457 = vrot.slane %v1449, %v1456
      %v1459 = vunpack.c.l.s4 1983009808
      %v1460 = vunpack.c.0.s8 %v1459
      %v1461 = vlaneseq
      %v1462 = vshrl.u32 %v1461, 7
      %v1463 = vsub.s32 %v1460, %v1462
      %v1464 = vrot.slane %v1450, %v1463
      %v1465 = vcombine.low %v1457, %v1464
      %v1466 = vcombine.low %v843, %v851
      %v1467 = vcombine.low %v859, %v858
      %v1469 = vunpack.c.l.s4 1983009808
      %v1470 = vunpack.c.0.s8 %v1469
      %v1471 = vlaneseq
      %v1472 = vshrl.u32 %v1471, 7
      %v1473 = vsub.s32 %v1470, %v1472
      %v1474 = vrot.slane %v1466, %v1473
      %v1476 = vunpack.c.l.s4 1983009808
      %v1477 = vunpack.c.0.s8 %v1476
      %v1478 = vlaneseq
      %v1479 = vshrl.u32 %v1478, 7
      %v1480 = vsub.s32 %v1477, %v1479
      %v1481 = vrot.slane %v1467, %v1480
      %v1482 = vcombine.low %v1474, %v1481
      %v1483 = vcombine.low %v860, %v868
      %v1484 = vcombine.low %v876, %v875
      %v1486 = vunpack.c.l.s4 1983009808
      %v1487 = vunpack.c.0.s8 %v1486
      %v1488 = vlaneseq
      %v1489 = vshrl.u32 %v1488, 7
      %v1490 = vsub.s32 %v1487, %v1489
      %v1491 = vrot.slane %v1483, %v1490
      %v1493 = vunpack.c.l.s4 1983009808
      %v1494 = vunpack.c.0.s8 %v1493
      %v1495 = vlaneseq
      %v1496 = vshrl.u32 %v1495, 7
      %v1497 = vsub.s32 %v1494, %v1496
      %v1498 = vrot.slane %v1484, %v1497
      %v1499 = vcombine.low %v1491, %v1498
      %v1500 = vcombine.low %v877, %v884
      %v1501 = vcombine.low %v892, %v900
      %v1503 = vunpack.c.l.s4 1983009808
      %v1504 = vunpack.c.0.s8 %v1503
      %v1505 = vlaneseq
      %v1506 = vshrl.u32 %v1505, 7
      %v1507 = vsub.s32 %v1504, %v1506
      %v1508 = vrot.slane %v1500, %v1507
      %v1510 = vunpack.c.l.s4 1983009808
      %v1511 = vunpack.c.0.s8 %v1510
      %v1512 = vlaneseq
      %v1513 = vshrl.u32 %v1512, 7
      %v1514 = vsub.s32 %v1511, %v1513
      %v1515 = vrot.slane %v1501, %v1514
      %v1516 = vcombine.low %v1508, %v1515
      %v1517 = vcombine.low %v899, %v901
      %v1518 = vcombine.low %v909, %v917
      %v1520 = vunpack.c.l.s4 1983009808
      %v1521 = vunpack.c.0.s8 %v1520
      %v1522 = vlaneseq
      %v1523 = vshrl.u32 %v1522, 7
      %v1524 = vsub.s32 %v1521, %v1523
      %v1525 = vrot.slane %v1517, %v1524
      %v1527 = vunpack.c.l.s4 1983009808
      %v1528 = vunpack.c.0.s8 %v1527
      %v1529 = vlaneseq
      %v1530 = vshrl.u32 %v1529, 7
      %v1531 = vsub.s32 %v1528, %v1530
      %v1532 = vrot.slane %v1518, %v1531
      %v1533 = vcombine.low %v1525, %v1532
      %v1534 = vcombine.low %v916, %v918
      %v1535 = vcombine.low %v925, %v933
      %v1537 = vunpack.c.l.s4 1983009808
      %v1538 = vunpack.c.0.s8 %v1537
      %v1539 = vlaneseq
      %v1540 = vshrl.u32 %v1539, 7
      %v1541 = vsub.s32 %v1538, %v1540
      %v1542 = vrot.slane %v1534, %v1541
      %v1544 = vunpack.c.l.s4 1983009808
      %v1545 = vunpack.c.0.s8 %v1544
      %v1546 = vlaneseq
      %v1547 = vshrl.u32 %v1546, 7
      %v1548 = vsub.s32 %v1545, %v1547
      %v1549 = vrot.slane %v1535, %v1548
      %v1550 = vcombine.low %v1542, %v1549
      %v1551 = vcombine.low %v941, %v940
      %v1552 = vcombine.low %v942, %v950
      %v1554 = vunpack.c.l.s4 1983009808
      %v1555 = vunpack.c.0.s8 %v1554
      %v1556 = vlaneseq
      %v1557 = vshrl.u32 %v1556, 7
      %v1558 = vsub.s32 %v1555, %v1557
      %v1559 = vrot.slane %v1551, %v1558
      %v1561 = vunpack.c.l.s4 1983009808
      %v1562 = vunpack.c.0.s8 %v1561
      %v1563 = vlaneseq
      %v1564 = vshrl.u32 %v1563, 7
      %v1565 = vsub.s32 %v1562, %v1564
      %v1566 = vrot.slane %v1552, %v1565
      %v1567 = vcombine.low %v1559, %v1566
      %v1568 = vcombine.low %v958, %v957
      %v1569 = vcombine.low %v959, %v966
      %v1571 = vunpack.c.l.s4 1983009808
      %v1572 = vunpack.c.0.s8 %v1571
      %v1573 = vlaneseq
      %v1574 = vshrl.u32 %v1573, 7
      %v1575 = vsub.s32 %v1572, %v1574
      %v1576 = vrot.slane %v1568, %v1575
      %v1578 = vunpack.c.l.s4 1983009808
      %v1579 = vunpack.c.0.s8 %v1578
      %v1580 = vlaneseq
      %v1581 = vshrl.u32 %v1580, 7
      %v1582 = vsub.s32 %v1579, %v1581
      %v1583 = vrot.slane %v1569, %v1582
      %v1584 = vcombine.low %v1576, %v1583
      %vm1585 = vcmask 97280
      %v1586 = vsel %vm1585, %v989, 0
      %v1588 = vsel %vm1585, %v1006, 0
      %v1590 = vsel %vm1585, %v1023, 0
      %v1592 = vsel %vm1585, %v1040, 0
      %v1594 = vsel %vm1585, %v1057, 0
      %v1596 = vsel %vm1585, %v1074, 0
      %v1598 = vsel %vm1585, %v1091, 0
      %v1600 = vsel %vm1585, %v1108, 0
      %v1602 = vsel %vm1585, %v1125, 0
      %v1604 = vsel %vm1585, %v1142, 0
      %v1606 = vsel %vm1585, %v1159, 0
      %v1608 = vsel %vm1585, %v1176, 0
      %v1610 = vsel %vm1585, %v1193, 0
      %v1612 = vsel %vm1585, %v1210, 0
      %v1614 = vsel %vm1585, %v1227, 0
      %v1616 = vsel %vm1585, %v1244, 0
      %v1618 = vsel %vm1585, %v1261, 0
      %v1620 = vsel %vm1585, %v1278, 0
      %v1622 = vsel %vm1585, %v1295, 0
      %v1624 = vsel %vm1585, %v1312, 0
      %v1626 = vsel %vm1585, %v1329, 0
      %v1628 = vsel %vm1585, %v1346, 0
      %v1630 = vsel %vm1585, %v1363, 0
      %v1632 = vsel %vm1585, %v1380, 0
      %v1634 = vsel %vm1585, %v1397, 0
      %v1636 = vsel %vm1585, %v1414, 0
      %v1638 = vsel %vm1585, %v1431, 0
      %v1640 = vsel %vm1585, %v1448, 0
      %v1642 = vsel %vm1585, %v1465, 0
      %v1644 = vsel %vm1585, %v1482, 0
      %v1646 = vsel %vm1585, %v1499, 0
      %v1648 = vsel %vm1585, %v1516, 0
      %v1650 = vsel %vm1585, %v1533, 0
      %v1652 = vsel %vm1585, %v1550, 0
      %v1654 = vsel %vm1585, %v1567, 0
      %v1656 = vsel %vm1585, %v1584, 0
      %vm1658 = vcmask 1043456
      %v1660 = vsel %vm1658, %v970, 0
      %v1663 = vsel %vm1658, %v971, 0
      %v1666 = vsel %vm1658, %v972, 0
      %1668 = vmatprep.subr.mxu0 0.0
      %1669 = vmatpush1.msra.mxu0 0.0
      %1670 = vmatprep.subr.mxu0 0.0
      %1671 = vmatpush1.msra.mxu0 0.0
      %1672 = vmatprep.subr.mxu0 0.0
      %1673 = vmatpush1.msra.mxu0 0.0
      %1674 = vmatprep.subr.mxu0 0.0
      %1675 = vmatpush1.msra.mxu0 0.0
      %1676 = vmatprep.subr.mxu0 0.0
      %1677 = vmatpush1.msra.mxu0 0.0
      %1678 = vmatprep.subr.mxu0 0.0
      %1679 = vmatpush1.msra.mxu0 0.0
      %1680 = vmatprep.subr.mxu0 0.0
      %1681 = vmatpush1.msra.mxu0 0.0
      %1682 = vmatprep.subr.mxu0 0.0
      %1683 = vmatpush1.msra.mxu0 0.0
      %1684 = vmatprep.subr.mxu0 0.0
      %1685 = vmatpush1.msra.mxu0 0.0
      %1686 = vmatprep.subr.mxu0 0.0
      %1687 = vmatpush1.msra.mxu0 0.0
      %1688 = vmatprep.subr.mxu0 0.0
      %1689 = vmatpush1.msra.mxu0 0.0
      %1690 = vmatprep.subr.mxu0 0.0
      %1691 = vmatpush1.msra.mxu0 0.0
      %1692 = vmatprep.subr.mxu0 0.0
      %1693 = vmatpush1.msra.mxu0 0.0
      %1694 = vmatprep.subr.mxu0 0.0
      %1695 = vmatpush1.msra.mxu0 0.0
      %1696 = vmatprep.subr.mxu0 %v1663
      %1697 = vmatpush1.msra.mxu0 %v1660
      %1698 = vmatprep.subr.mxu0 %v968
      %1699 = vmatpush1.msra.mxu0 %v967
      %1700 = vmatprep.subr.mxu0 0.0
      %1701 = vmatpush2.msra.mxu0 0.0
      %1702 = vmatprep.subr.mxu0 0.0
      %1703 = vmatpush2.msra.mxu0 0.0
      %1704 = vmatprep.subr.mxu0 0.0
      %1705 = vmatpush2.msra.mxu0 0.0
      %1706 = vmatprep.subr.mxu0 0.0
      %1707 = vmatpush2.msra.mxu0 0.0
      %1708 = vmatprep.subr.mxu0 0.0
      %1709 = vmatpush2.msra.mxu0 0.0
      %1710 = vmatprep.subr.mxu0 0.0
      %1711 = vmatpush2.msra.mxu0 0.0
      %1712 = vmatprep.subr.mxu0 0.0
      %1713 = vmatpush2.msra.mxu0 0.0
      %1714 = vmatprep.subr.mxu0 0.0
      %1715 = vmatpush2.msra.mxu0 0.0
      %1716 = vmatprep.subr.mxu0 0.0
      %1717 = vmatpush2.msra.mxu0 0.0
      %1718 = vmatprep.subr.mxu0 0.0
      %1719 = vmatpush2.msra.mxu0 0.0
      %1720 = vmatprep.subr.mxu0 0.0
      %1721 = vmatpush2.msra.mxu0 0.0
      %1722 = vmatprep.subr.mxu0 0.0
      %1723 = vmatpush2.msra.mxu0 0.0
      %1724 = vmatprep.subr.mxu0 0.0
      %1725 = vmatpush2.msra.mxu0 0.0
      %1726 = vmatprep.subr.mxu0 0.0
      %1727 = vmatpush2.msra.mxu0 0.0
      %1728 = vmatprep.subr.mxu0 0.0
      %1729 = vmatpush2.msra.mxu0 0.0
      %1730 = vmatprep.subr.mxu0 0.0
      %1731 = vmatpush2.msra.mxu0 0.0
      %1732 = vmatprep.mubr.f32.mxu0 0.0
      %1733 = vmatmul.mubr.f32.gmra.mxu0 %v1586
      %v1734 = vpop.f32.mrf.mxu0
      %v1735 = vadd.f32 0.0, %v1734
      %v1736 = vpop.f32.mrf.mxu0
      %v1737 = vadd.f32 0.0, %v1736
      %1738 = vmatprep.mubr.f32.mxu0 0.0
      %1739 = vmatmul.mubr.f32.gmra.mxu0 %v1588
      %v1740 = vpop.f32.mrf.mxu0
      %v1741 = vadd.f32 0.0, %v1740
      %v1742 = vpop.f32.mrf.mxu0
      %v1743 = vadd.f32 0.0, %v1742
      %1744 = vmatprep.mubr.f32.mxu0 0.0
      %1745 = vmatmul.mubr.f32.gmra.mxu0 %v1590
      %v1746 = vpop.f32.mrf.mxu0
      %v1747 = vadd.f32 0.0, %v1746
      %v1748 = vpop.f32.mrf.mxu0
      %v1749 = vadd.f32 0.0, %v1748
      %1750 = vmatprep.mubr.f32.mxu0 0.0
      %1751 = vmatmul.mubr.f32.gmra.mxu0 %v1592
      %v1752 = vpop.f32.mrf.mxu0
      %v1753 = vadd.f32 0.0, %v1752
      %v1754 = vpop.f32.mrf.mxu0
      %v1755 = vadd.f32 0.0, %v1754
      %1756 = vmatprep.mubr.f32.mxu0 0.0
      %1757 = vmatmul.mubr.f32.gmra.mxu0 %v1594
      %v1758 = vpop.f32.mrf.mxu0
      %v1759 = vadd.f32 0.0, %v1758
      %v1760 = vpop.f32.mrf.mxu0
      %v1761 = vadd.f32 0.0, %v1760
      %1762 = vmatprep.mubr.f32.mxu0 0.0
      %1763 = vmatmul.mubr.f32.gmra.mxu0 %v1596
      %v1764 = vpop.f32.mrf.mxu0
      %v1765 = vadd.f32 0.0, %v1764
      %v1766 = vpop.f32.mrf.mxu0
      %v1767 = vadd.f32 0.0, %v1766
      %1768 = vmatprep.mubr.f32.mxu0 0.0
      %1769 = vmatmul.mubr.f32.gmra.mxu0 %v1598
      %v1770 = vpop.f32.mrf.mxu0
      %v1771 = vadd.f32 0.0, %v1770
      %v1772 = vpop.f32.mrf.mxu0
      %v1773 = vadd.f32 0.0, %v1772
      %1774 = vmatprep.mubr.f32.mxu0 0.0
      %1775 = vmatmul.mubr.f32.gmra.mxu0 %v1600
      %v1776 = vpop.f32.mrf.mxu0
      %v1777 = vadd.f32 0.0, %v1776
      %v1778 = vpop.f32.mrf.mxu0
      %v1779 = vadd.f32 0.0, %v1778
      %1780 = vmatprep.mubr.f32.mxu0 0.0
      %1781 = vmatmul.mubr.f32.gmra.mxu0 %v1602
      %v1782 = vpop.f32.mrf.mxu0
      %v1783 = vadd.f32 0.0, %v1782
      %v1784 = vpop.f32.mrf.mxu0
      %v1785 = vadd.f32 0.0, %v1784
      %1786 = vmatprep.mubr.f32.mxu0 0.0
      %1787 = vmatmul.mubr.f32.gmra.mxu0 %v1604
      %v1788 = vpop.f32.mrf.mxu0
      %v1789 = vadd.f32 0.0, %v1788
      %v1790 = vpop.f32.mrf.mxu0
      %v1791 = vadd.f32 0.0, %v1790
      %1792 = vmatprep.mubr.f32.mxu0 0.0
      %1793 = vmatmul.mubr.f32.gmra.mxu0 %v1606
      %v1794 = vpop.f32.mrf.mxu0
      %v1795 = vadd.f32 0.0, %v1794
      %v1796 = vpop.f32.mrf.mxu0
      %v1797 = vadd.f32 0.0, %v1796
      %1798 = vmatprep.mubr.f32.mxu0 0.0
      %1799 = vmatmul.mubr.f32.gmra.mxu0 %v1608
      %v1800 = vpop.f32.mrf.mxu0
      %v1801 = vadd.f32 0.0, %v1800
      %v1802 = vpop.f32.mrf.mxu0
      %v1803 = vadd.f32 0.0, %v1802
      %1804 = vmatprep.mubr.f32.mxu0 0.0
      %1805 = vmatmul.mubr.f32.gmra.mxu0 %v1610
      %v1806 = vpop.f32.mrf.mxu0
      %v1807 = vadd.f32 0.0, %v1806
      %v1808 = vpop.f32.mrf.mxu0
      %v1809 = vadd.f32 0.0, %v1808
      %1810 = vmatprep.mubr.f32.mxu0 0.0
      %1811 = vmatmul.mubr.f32.gmra.mxu0 %v1612
      %v1812 = vpop.f32.mrf.mxu0
      %v1813 = vadd.f32 0.0, %v1812
      %v1814 = vpop.f32.mrf.mxu0
      %v1815 = vadd.f32 0.0, %v1814
      %1816 = vmatprep.mubr.f32.mxu0 0.0
      %1817 = vmatmul.mubr.f32.gmra.mxu0 %v1614
      %v1818 = vpop.f32.mrf.mxu0
      %v1819 = vadd.f32 0.0, %v1818
      %v1820 = vpop.f32.mrf.mxu0
      %v1821 = vadd.f32 0.0, %v1820
      %1822 = vmatprep.mubr.f32.mxu0 0.0
      %1823 = vmatmul.mubr.f32.gmra.mxu0 %v1616
      %v1824 = vpop.f32.mrf.mxu0
      %v1825 = vadd.f32 0.0, %v1824
      %v1826 = vpop.f32.mrf.mxu0
      %v1827 = vadd.f32 0.0, %v1826
      %1828 = vmatprep.mubr.f32.mxu0 0.0
      %1829 = vmatmul.mubr.f32.gmra.mxu0 %v1618
      %v1830 = vpop.f32.mrf.mxu0
      %v1831 = vadd.f32 0.0, %v1830
      %v1832 = vpop.f32.mrf.mxu0
      %v1833 = vadd.f32 0.0, %v1832
      %1834 = vmatprep.mubr.f32.mxu0 0.0
      %1835 = vmatmul.mubr.f32.gmra.mxu0 %v1620
      %v1836 = vpop.f32.mrf.mxu0
      %v1837 = vadd.f32 0.0, %v1836
      %v1838 = vpop.f32.mrf.mxu0
      %v1839 = vadd.f32 0.0, %v1838
      %1840 = vmatprep.mubr.f32.mxu0 0.0
      %1841 = vmatmul.mubr.f32.gmra.mxu0 %v1622
      %v1842 = vpop.f32.mrf.mxu0
      %v1843 = vadd.f32 0.0, %v1842
      %v1844 = vpop.f32.mrf.mxu0
      %v1845 = vadd.f32 0.0, %v1844
      %1846 = vmatprep.mubr.f32.mxu0 0.0
      %1847 = vmatmul.mubr.f32.gmra.mxu0 %v1624
      %v1848 = vpop.f32.mrf.mxu0
      %v1849 = vadd.f32 0.0, %v1848
      %v1850 = vpop.f32.mrf.mxu0
      %v1851 = vadd.f32 0.0, %v1850
      %1852 = vmatprep.mubr.f32.mxu0 0.0
      %1853 = vmatmul.mubr.f32.gmra.mxu0 %v1626
      %v1854 = vpop.f32.mrf.mxu0
      %v1855 = vadd.f32 0.0, %v1854
      %v1856 = vpop.f32.mrf.mxu0
      %v1857 = vadd.f32 0.0, %v1856
      %1858 = vmatprep.mubr.f32.mxu0 0.0
      %1859 = vmatmul.mubr.f32.gmra.mxu0 %v1628
      %v1860 = vpop.f32.mrf.mxu0
      %v1861 = vadd.f32 0.0, %v1860
      %v1862 = vpop.f32.mrf.mxu0
      %v1863 = vadd.f32 0.0, %v1862
      %1864 = vmatprep.mubr.f32.mxu0 0.0
      %1865 = vmatmul.mubr.f32.gmra.mxu0 %v1630
      %v1866 = vpop.f32.mrf.mxu0
      %v1867 = vadd.f32 0.0, %v1866
      %v1868 = vpop.f32.mrf.mxu0
      %v1869 = vadd.f32 0.0, %v1868
      %1870 = vmatprep.mubr.f32.mxu0 0.0
      %1871 = vmatmul.mubr.f32.gmra.mxu0 %v1632
      %v1872 = vpop.f32.mrf.mxu0
      %v1873 = vadd.f32 0.0, %v1872
      %v1874 = vpop.f32.mrf.mxu0
      %v1875 = vadd.f32 0.0, %v1874
      %1876 = vmatprep.mubr.f32.mxu0 0.0
      %1877 = vmatmul.mubr.f32.gmra.mxu0 %v1634
      %v1878 = vpop.f32.mrf.mxu0
      %v1879 = vadd.f32 0.0, %v1878
      %v1880 = vpop.f32.mrf.mxu0
      %v1881 = vadd.f32 0.0, %v1880
      %1882 = vmatprep.mubr.f32.mxu0 0.0
      %1883 = vmatmul.mubr.f32.gmra.mxu0 %v1636
      %v1884 = vpop.f32.mrf.mxu0
      %v1885 = vadd.f32 0.0, %v1884
      %v1886 = vpop.f32.mrf.mxu0
      %v1887 = vadd.f32 0.0, %v1886
      %1888 = vmatprep.mubr.f32.mxu0 0.0
      %1889 = vmatmul.mubr.f32.gmra.mxu0 %v1638
      %v1890 = vpop.f32.mrf.mxu0
      %v1891 = vadd.f32 0.0, %v1890
      %v1892 = vpop.f32.mrf.mxu0
      %v1893 = vadd.f32 0.0, %v1892
      %1894 = vmatprep.mubr.f32.mxu0 0.0
      %1895 = vmatmul.mubr.f32.gmra.mxu0 %v1640
      %v1896 = vpop.f32.mrf.mxu0
      %v1897 = vadd.f32 0.0, %v1896
      %v1898 = vpop.f32.mrf.mxu0
      %v1899 = vadd.f32 0.0, %v1898
      %1900 = vmatprep.mubr.f32.mxu0 0.0
      %1901 = vmatmul.mubr.f32.gmra.mxu0 %v1642
      %v1902 = vpop.f32.mrf.mxu0
      %v1903 = vadd.f32 0.0, %v1902
      %v1904 = vpop.f32.mrf.mxu0
      %v1905 = vadd.f32 0.0, %v1904
      %1906 = vmatprep.mubr.f32.mxu0 0.0
      %1907 = vmatmul.mubr.f32.gmra.mxu0 %v1644
      %v1908 = vpop.f32.mrf.mxu0
      %v1909 = vadd.f32 0.0, %v1908
      %v1910 = vpop.f32.mrf.mxu0
      %v1911 = vadd.f32 0.0, %v1910
      %1912 = vmatprep.mubr.f32.mxu0 0.0
      %1913 = vmatmul.mubr.f32.gmra.mxu0 %v1646
      %v1914 = vpop.f32.mrf.mxu0
      %v1915 = vadd.f32 0.0, %v1914
      %v1916 = vpop.f32.mrf.mxu0
      %v1917 = vadd.f32 0.0, %v1916
      %1918 = vmatprep.mubr.f32.mxu0 0.0
      %1919 = vmatmul.mubr.f32.gmra.mxu0 %v1648
      %v1920 = vpop.f32.mrf.mxu0
      %v1921 = vadd.f32 0.0, %v1920
      %v1922 = vpop.f32.mrf.mxu0
      %v1923 = vadd.f32 0.0, %v1922
      %1924 = vmatprep.mubr.f32.mxu0 0.0
      %1925 = vmatmul.mubr.f32.gmra.mxu0 %v1650
      %v1926 = vpop.f32.mrf.mxu0
      %v1927 = vadd.f32 0.0, %v1926
      %v1928 = vpop.f32.mrf.mxu0
      %v1929 = vadd.f32 0.0, %v1928
      %1930 = vmatprep.mubr.f32.mxu0 0.0
      %1931 = vmatmul.mubr.f32.gmra.mxu0 %v1652
      %v1932 = vpop.f32.mrf.mxu0
      %v1933 = vadd.f32 0.0, %v1932
      %v1934 = vpop.f32.mrf.mxu0
      %v1935 = vadd.f32 0.0, %v1934
      %1936 = vmatprep.mubr.f32.mxu0 0.0
      %1937 = vmatmul.mubr.f32.gmra.mxu0 %v1654
      %v1938 = vpop.f32.mrf.mxu0
      %v1939 = vadd.f32 0.0, %v1938
      %v1940 = vpop.f32.mrf.mxu0
      %v1941 = vadd.f32 0.0, %v1940
      %1942 = vmatprep.mubr.f32.mxu0 0.0
      %1943 = vmatmul.mubr.f32.gmra.mxu0 %v1656
      %v1944 = vpop.f32.mrf.mxu0
      %v1945 = vadd.f32 0.0, %v1944
      %v1946 = vpop.f32.mrf.mxu0
      %v1947 = vadd.f32 0.0, %v1946
      %1948 = vdwg.mxu0
      %1949 = vmatprep.subr.mxu0 0.0
      %1950 = vmatpush1.msra.mxu0 0.0
      %1951 = vmatprep.subr.mxu0 0.0
      %1952 = vmatpush1.msra.mxu0 0.0
      %1953 = vmatprep.subr.mxu0 0.0
      %1954 = vmatpush1.msra.mxu0 0.0
      %1955 = vmatprep.subr.mxu0 0.0
      %1956 = vmatpush1.msra.mxu0 0.0
      %1957 = vmatprep.subr.mxu0 0.0
      %1958 = vmatpush1.msra.mxu0 0.0
      %1959 = vmatprep.subr.mxu0 0.0
      %1960 = vmatpush1.msra.mxu0 0.0
      %1961 = vmatprep.subr.mxu0 0.0
      %1962 = vmatpush1.msra.mxu0 0.0
      %1963 = vmatprep.subr.mxu0 0.0
      %1964 = vmatpush1.msra.mxu0 0.0
      %1965 = vmatprep.subr.mxu0 0.0
      %1966 = vmatpush1.msra.mxu0 0.0
      %1967 = vmatprep.subr.mxu0 0.0
      %1968 = vmatpush1.msra.mxu0 0.0
      %1969 = vmatprep.subr.mxu0 0.0
      %1970 = vmatpush1.msra.mxu0 0.0
      %1971 = vmatprep.subr.mxu0 0.0
      %1972 = vmatpush1.msra.mxu0 0.0
      %1973 = vmatprep.subr.mxu0 0.0
      %1974 = vmatpush1.msra.mxu0 0.0
      %1975 = vmatprep.subr.mxu0 0.0
      %1976 = vmatpush1.msra.mxu0 0.0
      %1977 = vmatprep.subr.mxu0 0.0
      %1978 = vmatpush1.msra.mxu0 %v1666
      %1979 = vmatprep.subr.mxu0 0.0
      %1980 = vmatpush1.msra.mxu0 %v969
      %1981 = vmatprep.subr.mxu0 0.0
      %1982 = vmatpush2.msra.mxu0 0.0
      %1983 = vmatprep.subr.mxu0 0.0
      %1984 = vmatpush2.msra.mxu0 0.0
      %1985 = vmatprep.subr.mxu0 0.0
      %1986 = vmatpush2.msra.mxu0 0.0
      %1987 = vmatprep.subr.mxu0 0.0
      %1988 = vmatpush2.msra.mxu0 0.0
      %1989 = vmatprep.subr.mxu0 0.0
      %1990 = vmatpush2.msra.mxu0 0.0
      %1991 = vmatprep.subr.mxu0 0.0
      %1992 = vmatpush2.msra.mxu0 0.0
      %1993 = vmatprep.subr.mxu0 0.0
      %1994 = vmatpush2.msra.mxu0 0.0
      %1995 = vmatprep.subr.mxu0 0.0
      %1996 = vmatpush2.msra.mxu0 0.0
      %1997 = vmatprep.subr.mxu0 0.0
      %1998 = vmatpush2.msra.mxu0 0.0
      %1999 = vmatprep.subr.mxu0 0.0
      %2000 = vmatpush2.msra.mxu0 0.0
      %2001 = vmatprep.subr.mxu0 0.0
      %2002 = vmatpush2.msra.mxu0 0.0
      %2003 = vmatprep.subr.mxu0 0.0
      %2004 = vmatpush2.msra.mxu0 0.0
      %2005 = vmatprep.subr.mxu0 0.0
      %2006 = vmatpush2.msra.mxu0 0.0
      %2007 = vmatprep.subr.mxu0 0.0
      %2008 = vmatpush2.msra.mxu0 0.0
      %2009 = vmatprep.subr.mxu0 0.0
      %2010 = vmatpush2.msra.mxu0 0.0
      %2011 = vmatprep.subr.mxu0 0.0
      %2012 = vmatpush2.msra.mxu0 0.0
      %2013 = vmatprep.mubr.f32.mxu0 0.0
      %2014 = vmatmul.mubr.f32.gmra.mxu0 %v1586
      %v2015 = vpop.f32.mrf.mxu0
      %v2016 = vadd.f32 0.0, %v2015
      %v2017 = vpop.f32.mrf.mxu0
      %2018 = vmatprep.mubr.f32.mxu0 0.0
      %2019 = vmatmul.mubr.f32.gmra.mxu0 %v1588
      %v2020 = vpop.f32.mrf.mxu0
      %v2021 = vadd.f32 0.0, %v2020
      %v2022 = vpop.f32.mrf.mxu0
      %2023 = vmatprep.mubr.f32.mxu0 0.0
      %2024 = vmatmul.mubr.f32.gmra.mxu0 %v1590
      %v2025 = vpop.f32.mrf.mxu0
      %v2026 = vadd.f32 0.0, %v2025
      %v2027 = vpop.f32.mrf.mxu0
      %2028 = vmatprep.mubr.f32.mxu0 0.0
      %2029 = vmatmul.mubr.f32.gmra.mxu0 %v1592
      %v2030 = vpop.f32.mrf.mxu0
      %v2031 = vadd.f32 0.0, %v2030
      %v2032 = vpop.f32.mrf.mxu0
      %2033 = vmatprep.mubr.f32.mxu0 0.0
      %2034 = vmatmul.mubr.f32.gmra.mxu0 %v1594
      %v2035 = vpop.f32.mrf.mxu0
      %v2036 = vadd.f32 0.0, %v2035
      %v2037 = vpop.f32.mrf.mxu0
      %2038 = vmatprep.mubr.f32.mxu0 0.0
      %2039 = vmatmul.mubr.f32.gmra.mxu0 %v1596
      %v2040 = vpop.f32.mrf.mxu0
      %v2041 = vadd.f32 0.0, %v2040
      %v2042 = vpop.f32.mrf.mxu0
      %2043 = vmatprep.mubr.f32.mxu0 0.0
      %2044 = vmatmul.mubr.f32.gmra.mxu0 %v1598
      %v2045 = vpop.f32.mrf.mxu0
      %v2046 = vadd.f32 0.0, %v2045
      %v2047 = vpop.f32.mrf.mxu0
      %2048 = vmatprep.mubr.f32.mxu0 0.0
      %2049 = vmatmul.mubr.f32.gmra.mxu0 %v1600
      %v2050 = vpop.f32.mrf.mxu0
      %v2051 = vadd.f32 0.0, %v2050
      %v2052 = vpop.f32.mrf.mxu0
      %2053 = vmatprep.mubr.f32.mxu0 0.0
      %2054 = vmatmul.mubr.f32.gmra.mxu0 %v1602
      %v2055 = vpop.f32.mrf.mxu0
      %v2056 = vadd.f32 0.0, %v2055
      %v2057 = vpop.f32.mrf.mxu0
      %2058 = vmatprep.mubr.f32.mxu0 0.0
      %2059 = vmatmul.mubr.f32.gmra.mxu0 %v1604
      %v2060 = vpop.f32.mrf.mxu0
      %v2061 = vadd.f32 0.0, %v2060
      %v2062 = vpop.f32.mrf.mxu0
      %2063 = vmatprep.mubr.f32.mxu0 0.0
      %2064 = vmatmul.mubr.f32.gmra.mxu0 %v1606
      %v2065 = vpop.f32.mrf.mxu0
      %v2066 = vadd.f32 0.0, %v2065
      %v2067 = vpop.f32.mrf.mxu0
      %2068 = vmatprep.mubr.f32.mxu0 0.0
      %2069 = vmatmul.mubr.f32.gmra.mxu0 %v1608
      %v2070 = vpop.f32.mrf.mxu0
      %v2071 = vadd.f32 0.0, %v2070
      %v2072 = vpop.f32.mrf.mxu0
      %2073 = vmatprep.mubr.f32.mxu0 0.0
      %2074 = vmatmul.mubr.f32.gmra.mxu0 %v1610
      %v2075 = vpop.f32.mrf.mxu0
      %v2076 = vadd.f32 0.0, %v2075
      %v2077 = vpop.f32.mrf.mxu0
      %2078 = vmatprep.mubr.f32.mxu0 0.0
      %2079 = vmatmul.mubr.f32.gmra.mxu0 %v1612
      %v2080 = vpop.f32.mrf.mxu0
      %v2081 = vadd.f32 0.0, %v2080
      %v2082 = vpop.f32.mrf.mxu0
      %2083 = vmatprep.mubr.f32.mxu0 0.0
      %2084 = vmatmul.mubr.f32.gmra.mxu0 %v1614
      %v2085 = vpop.f32.mrf.mxu0
      %v2086 = vadd.f32 0.0, %v2085
      %v2087 = vpop.f32.mrf.mxu0
      %2088 = vmatprep.mubr.f32.mxu0 0.0
      %2089 = vmatmul.mubr.f32.gmra.mxu0 %v1616
      %v2090 = vpop.f32.mrf.mxu0
      %v2091 = vadd.f32 0.0, %v2090
      %v2092 = vpop.f32.mrf.mxu0
      %2093 = vmatprep.mubr.f32.mxu0 0.0
      %2094 = vmatmul.mubr.f32.gmra.mxu0 %v1618
      %v2095 = vpop.f32.mrf.mxu0
      %v2096 = vadd.f32 0.0, %v2095
      %v2097 = vpop.f32.mrf.mxu0
      %2098 = vmatprep.mubr.f32.mxu0 0.0
      %2099 = vmatmul.mubr.f32.gmra.mxu0 %v1620
      %v2100 = vpop.f32.mrf.mxu0
      %v2101 = vadd.f32 0.0, %v2100
      %v2102 = vpop.f32.mrf.mxu0
      %2103 = vmatprep.mubr.f32.mxu0 0.0
      %2104 = vmatmul.mubr.f32.gmra.mxu0 %v1622
      %v2105 = vpop.f32.mrf.mxu0
      %v2106 = vadd.f32 0.0, %v2105
      %v2107 = vpop.f32.mrf.mxu0
      %2108 = vmatprep.mubr.f32.mxu0 0.0
      %2109 = vmatmul.mubr.f32.gmra.mxu0 %v1624
      %v2110 = vpop.f32.mrf.mxu0
      %v2111 = vadd.f32 0.0, %v2110
      %v2112 = vpop.f32.mrf.mxu0
      %2113 = vmatprep.mubr.f32.mxu0 0.0
      %2114 = vmatmul.mubr.f32.gmra.mxu0 %v1626
      %v2115 = vpop.f32.mrf.mxu0
      %v2116 = vadd.f32 0.0, %v2115
      %v2117 = vpop.f32.mrf.mxu0
      %2118 = vmatprep.mubr.f32.mxu0 0.0
      %2119 = vmatmul.mubr.f32.gmra.mxu0 %v1628
      %v2120 = vpop.f32.mrf.mxu0
      %v2121 = vadd.f32 0.0, %v2120
      %v2122 = vpop.f32.mrf.mxu0
      %2123 = vmatprep.mubr.f32.mxu0 0.0
      %2124 = vmatmul.mubr.f32.gmra.mxu0 %v1630
      %v2125 = vpop.f32.mrf.mxu0
      %v2126 = vadd.f32 0.0, %v2125
      %v2127 = vpop.f32.mrf.mxu0
      %2128 = vmatprep.mubr.f32.mxu0 0.0
      %2129 = vmatmul.mubr.f32.gmra.mxu0 %v1632
      %v2130 = vpop.f32.mrf.mxu0
      %v2131 = vadd.f32 0.0, %v2130
      %v2132 = vpop.f32.mrf.mxu0
      %2133 = vmatprep.mubr.f32.mxu0 0.0
      %2134 = vmatmul.mubr.f32.gmra.mxu0 %v1634
      %v2135 = vpop.f32.mrf.mxu0
      %v2136 = vadd.f32 0.0, %v2135
      %v2137 = vpop.f32.mrf.mxu0
      %2138 = vmatprep.mubr.f32.mxu0 0.0
      %2139 = vmatmul.mubr.f32.gmra.mxu0 %v1636
      %v2140 = vpop.f32.mrf.mxu0
      %v2141 = vadd.f32 0.0, %v2140
      %v2142 = vpop.f32.mrf.mxu0
      %2143 = vmatprep.mubr.f32.mxu0 0.0
      %2144 = vmatmul.mubr.f32.gmra.mxu0 %v1638
      %v2145 = vpop.f32.mrf.mxu0
      %v2146 = vadd.f32 0.0, %v2145
      %v2147 = vpop.f32.mrf.mxu0
      %2148 = vmatprep.mubr.f32.mxu0 0.0
      %2149 = vmatmul.mubr.f32.gmra.mxu0 %v1640
      %v2150 = vpop.f32.mrf.mxu0
      %v2151 = vadd.f32 0.0, %v2150
      %v2152 = vpop.f32.mrf.mxu0
      %2153 = vmatprep.mubr.f32.mxu0 0.0
      %2154 = vmatmul.mubr.f32.gmra.mxu0 %v1642
      %v2155 = vpop.f32.mrf.mxu0
      %v2156 = vadd.f32 0.0, %v2155
      %v2157 = vpop.f32.mrf.mxu0
      %2158 = vmatprep.mubr.f32.mxu0 0.0
      %2159 = vmatmul.mubr.f32.gmra.mxu0 %v1644
      %v2160 = vpop.f32.mrf.mxu0
      %v2161 = vadd.f32 0.0, %v2160
      %v2162 = vpop.f32.mrf.mxu0
      %2163 = vmatprep.mubr.f32.mxu0 0.0
      %2164 = vmatmul.mubr.f32.gmra.mxu0 %v1646
      %v2165 = vpop.f32.mrf.mxu0
      %v2166 = vadd.f32 0.0, %v2165
      %v2167 = vpop.f32.mrf.mxu0
      %2168 = vmatprep.mubr.f32.mxu0 0.0
      %2169 = vmatmul.mubr.f32.gmra.mxu0 %v1648
      %v2170 = vpop.f32.mrf.mxu0
      %v2171 = vadd.f32 0.0, %v2170
      %v2172 = vpop.f32.mrf.mxu0
      %2173 = vmatprep.mubr.f32.mxu0 0.0
      %2174 = vmatmul.mubr.f32.gmra.mxu0 %v1650
      %v2175 = vpop.f32.mrf.mxu0
      %v2176 = vadd.f32 0.0, %v2175
      %v2177 = vpop.f32.mrf.mxu0
      %2178 = vmatprep.mubr.f32.mxu0 0.0
      %2179 = vmatmul.mubr.f32.gmra.mxu0 %v1652
      %v2180 = vpop.f32.mrf.mxu0
      %v2181 = vadd.f32 0.0, %v2180
      %v2182 = vpop.f32.mrf.mxu0
      %2183 = vmatprep.mubr.f32.mxu0 0.0
      %2184 = vmatmul.mubr.f32.gmra.mxu0 %v1654
      %v2185 = vpop.f32.mrf.mxu0
      %v2186 = vadd.f32 0.0, %v2185
      %v2187 = vpop.f32.mrf.mxu0
      %2188 = vmatprep.mubr.f32.mxu0 0.0
      %2189 = vmatmul.mubr.f32.gmra.mxu0 %v1656
      %v2190 = vpop.f32.mrf.mxu0
      %v2191 = vadd.f32 0.0, %v2190
      %v2192 = vpop.f32.mrf.mxu0
      %2193 = vdwg.mxu0
      %v2302 = vcombine.low %v1735, %v1737
      %v2303 = vcombine.high %v1735, %v1737
      %v2304 = vcombine.high %v2016, %v2016
      %v2306 = vunpack.c.l.s4 1983009808
      %v2307 = vunpack.c.0.s8 %v2306
      %v2308 = vlaneseq
      %v2309 = vshrl.u32 %v2308, 7
      %v2310 = vsub.s32 %v2307, %v2309
      %v2311 = vrot.slane %v2302, %v2310
      %v2313 = vunpack.c.l.s4 1983009808
      %v2314 = vunpack.c.0.s8 %v2313
      %v2315 = vlaneseq
      %v2316 = vshrl.u32 %v2315, 7
      %v2317 = vsub.s32 %v2314, %v2316
      %v2318 = vrot.slane %v2303, %v2317
      %v2320 = vunpack.c.l.s4 1983009808
      %v2321 = vunpack.c.0.s8 %v2320
      %v2322 = vlaneseq
      %v2323 = vshrl.u32 %v2322, 7
      %v2324 = vsub.s32 %v2321, %v2323
      %v2325 = vrot.slane %v2016, %v2324
      %v2327 = vunpack.c.l.s4 1983009808
      %v2328 = vunpack.c.0.s8 %v2327
      %v2329 = vlaneseq
      %v2330 = vshrl.u32 %v2329, 7
      %v2331 = vsub.s32 %v2328, %v2330
      %v2332 = vrot.slane %v2304, %v2331
      %v2333 = vcombine.low %v2311, %v2325
      %v2334 = vcombine.high %v2311, %v2325
      %v2335 = vcombine.low %v2318, %v2332
      %v2336 = vcombine.high %v2318, %v2332
      %v2337 = vcombine.low %v1741, %v1743
      %v2338 = vcombine.high %v1741, %v1743
      %v2339 = vcombine.high %v2021, %v2021
      %v2341 = vunpack.c.l.s4 1983009808
      %v2342 = vunpack.c.0.s8 %v2341
      %v2343 = vlaneseq
      %v2344 = vshrl.u32 %v2343, 7
      %v2345 = vsub.s32 %v2342, %v2344
      %v2346 = vrot.slane %v2337, %v2345
      %v2348 = vunpack.c.l.s4 1983009808
      %v2349 = vunpack.c.0.s8 %v2348
      %v2350 = vlaneseq
      %v2351 = vshrl.u32 %v2350, 7
      %v2352 = vsub.s32 %v2349, %v2351
      %v2353 = vrot.slane %v2338, %v2352
      %v2355 = vunpack.c.l.s4 1983009808
      %v2356 = vunpack.c.0.s8 %v2355
      %v2357 = vlaneseq
      %v2358 = vshrl.u32 %v2357, 7
      %v2359 = vsub.s32 %v2356, %v2358
      %v2360 = vrot.slane %v2021, %v2359
      %v2362 = vunpack.c.l.s4 1983009808
      %v2363 = vunpack.c.0.s8 %v2362
      %v2364 = vlaneseq
      %v2365 = vshrl.u32 %v2364, 7
      %v2366 = vsub.s32 %v2363, %v2365
      %v2367 = vrot.slane %v2339, %v2366
      %v2368 = vcombine.low %v2346, %v2360
      %v2369 = vcombine.high %v2346, %v2360
      %v2370 = vcombine.low %v2353, %v2367
      %v2371 = vcombine.high %v2353, %v2367
      %v2372 = vcombine.low %v1747, %v1749
      %v2373 = vcombine.high %v1747, %v1749
      %v2374 = vcombine.high %v2026, %v2026
      %v2376 = vunpack.c.l.s4 1983009808
      %v2377 = vunpack.c.0.s8 %v2376
      %v2378 = vlaneseq
      %v2379 = vshrl.u32 %v2378, 7
      %v2380 = vsub.s32 %v2377, %v2379
      %v2381 = vrot.slane %v2372, %v2380
      %v2383 = vunpack.c.l.s4 1983009808
      %v2384 = vunpack.c.0.s8 %v2383
      %v2385 = vlaneseq
      %v2386 = vshrl.u32 %v2385, 7
      %v2387 = vsub.s32 %v2384, %v2386
      %v2388 = vrot.slane %v2373, %v2387
      %v2390 = vunpack.c.l.s4 1983009808
      %v2391 = vunpack.c.0.s8 %v2390
      %v2392 = vlaneseq
      %v2393 = vshrl.u32 %v2392, 7
      %v2394 = vsub.s32 %v2391, %v2393
      %v2395 = vrot.slane %v2026, %v2394
      %v2397 = vunpack.c.l.s4 1983009808
      %v2398 = vunpack.c.0.s8 %v2397
      %v2399 = vlaneseq
      %v2400 = vshrl.u32 %v2399, 7
      %v2401 = vsub.s32 %v2398, %v2400
      %v2402 = vrot.slane %v2374, %v2401
      %v2403 = vcombine.low %v2381, %v2395
      %v2404 = vcombine.high %v2381, %v2395
      %v2405 = vcombine.low %v2388, %v2402
      %v2406 = vcombine.high %v2388, %v2402
      %v2407 = vcombine.low %v1753, %v1755
      %v2408 = vcombine.high %v1753, %v1755
      %v2409 = vcombine.high %v2031, %v2031
      %v2411 = vunpack.c.l.s4 1983009808
      %v2412 = vunpack.c.0.s8 %v2411
      %v2413 = vlaneseq
      %v2414 = vshrl.u32 %v2413, 7
      %v2415 = vsub.s32 %v2412, %v2414
      %v2416 = vrot.slane %v2407, %v2415
      %v2418 = vunpack.c.l.s4 1983009808
      %v2419 = vunpack.c.0.s8 %v2418
      %v2420 = vlaneseq
      %v2421 = vshrl.u32 %v2420, 7
      %v2422 = vsub.s32 %v2419, %v2421
      %v2423 = vrot.slane %v2408, %v2422
      %v2425 = vunpack.c.l.s4 1983009808
      %v2426 = vunpack.c.0.s8 %v2425
      %v2427 = vlaneseq
      %v2428 = vshrl.u32 %v2427, 7
      %v2429 = vsub.s32 %v2426, %v2428
      %v2430 = vrot.slane %v2031, %v2429
      %v2432 = vunpack.c.l.s4 1983009808
      %v2433 = vunpack.c.0.s8 %v2432
      %v2434 = vlaneseq
      %v2435 = vshrl.u32 %v2434, 7
      %v2436 = vsub.s32 %v2433, %v2435
      %v2437 = vrot.slane %v2409, %v2436
      %v2438 = vcombine.low %v2416, %v2430
      %v2439 = vcombine.high %v2416, %v2430
      %v2440 = vcombine.low %v2423, %v2437
      %v2441 = vcombine.high %v2423, %v2437
      %v2442 = vcombine.low %v1759, %v1761
      %v2443 = vcombine.high %v1759, %v1761
      %v2444 = vcombine.high %v2036, %v2036
      %v2446 = vunpack.c.l.s4 1983009808
      %v2447 = vunpack.c.0.s8 %v2446
      %v2448 = vlaneseq
      %v2449 = vshrl.u32 %v2448, 7
      %v2450 = vsub.s32 %v2447, %v2449
      %v2451 = vrot.slane %v2442, %v2450
      %v2453 = vunpack.c.l.s4 1983009808
      %v2454 = vunpack.c.0.s8 %v2453
      %v2455 = vlaneseq
      %v2456 = vshrl.u32 %v2455, 7
      %v2457 = vsub.s32 %v2454, %v2456
      %v2458 = vrot.slane %v2443, %v2457
      %v2460 = vunpack.c.l.s4 1983009808
      %v2461 = vunpack.c.0.s8 %v2460
      %v2462 = vlaneseq
      %v2463 = vshrl.u32 %v2462, 7
      %v2464 = vsub.s32 %v2461, %v2463
      %v2465 = vrot.slane %v2036, %v2464
      %v2467 = vunpack.c.l.s4 1983009808
      %v2468 = vunpack.c.0.s8 %v2467
      %v2469 = vlaneseq
      %v2470 = vshrl.u32 %v2469, 7
      %v2471 = vsub.s32 %v2468, %v2470
      %v2472 = vrot.slane %v2444, %v2471
      %v2473 = vcombine.low %v2451, %v2465
      %v2474 = vcombine.high %v2451, %v2465
      %v2475 = vcombine.low %v2458, %v2472
      %v2476 = vcombine.high %v2458, %v2472
      %v2477 = vcombine.low %v1765, %v1767
      %v2478 = vcombine.high %v1765, %v1767
      %v2479 = vcombine.high %v2041, %v2041
      %v2481 = vunpack.c.l.s4 1983009808
      %v2482 = vunpack.c.0.s8 %v2481
      %v2483 = vlaneseq
      %v2484 = vshrl.u32 %v2483, 7
      %v2485 = vsub.s32 %v2482, %v2484
      %v2486 = vrot.slane %v2477, %v2485
      %v2488 = vunpack.c.l.s4 1983009808
      %v2489 = vunpack.c.0.s8 %v2488
      %v2490 = vlaneseq
      %v2491 = vshrl.u32 %v2490, 7
      %v2492 = vsub.s32 %v2489, %v2491
      %v2493 = vrot.slane %v2478, %v2492
      %v2495 = vunpack.c.l.s4 1983009808
      %v2496 = vunpack.c.0.s8 %v2495
      %v2497 = vlaneseq
      %v2498 = vshrl.u32 %v2497, 7
      %v2499 = vsub.s32 %v2496, %v2498
      %v2500 = vrot.slane %v2041, %v2499
      %v2502 = vunpack.c.l.s4 1983009808
      %v2503 = vunpack.c.0.s8 %v2502
      %v2504 = vlaneseq
      %v2505 = vshrl.u32 %v2504, 7
      %v2506 = vsub.s32 %v2503, %v2505
      %v2507 = vrot.slane %v2479, %v2506
      %v2508 = vcombine.low %v2486, %v2500
      %v2509 = vcombine.high %v2486, %v2500
      %v2510 = vcombine.low %v2493, %v2507
      %v2511 = vcombine.high %v2493, %v2507
      %v2512 = vcombine.low %v1771, %v1773
      %v2513 = vcombine.high %v1771, %v1773
      %v2514 = vcombine.high %v2046, %v2046
      %v2516 = vunpack.c.l.s4 1983009808
      %v2517 = vunpack.c.0.s8 %v2516
      %v2518 = vlaneseq
      %v2519 = vshrl.u32 %v2518, 7
      %v2520 = vsub.s32 %v2517, %v2519
      %v2521 = vrot.slane %v2512, %v2520
      %v2523 = vunpack.c.l.s4 1983009808
      %v2524 = vunpack.c.0.s8 %v2523
      %v2525 = vlaneseq
      %v2526 = vshrl.u32 %v2525, 7
      %v2527 = vsub.s32 %v2524, %v2526
      %v2528 = vrot.slane %v2513, %v2527
      %v2530 = vunpack.c.l.s4 1983009808
      %v2531 = vunpack.c.0.s8 %v2530
      %v2532 = vlaneseq
      %v2533 = vshrl.u32 %v2532, 7
      %v2534 = vsub.s32 %v2531, %v2533
      %v2535 = vrot.slane %v2046, %v2534
      %v2537 = vunpack.c.l.s4 1983009808
      %v2538 = vunpack.c.0.s8 %v2537
      %v2539 = vlaneseq
      %v2540 = vshrl.u32 %v2539, 7
      %v2541 = vsub.s32 %v2538, %v2540
      %v2542 = vrot.slane %v2514, %v2541
      %v2543 = vcombine.low %v2521, %v2535
      %v2544 = vcombine.high %v2521, %v2535
      %v2545 = vcombine.low %v2528, %v2542
      %v2546 = vcombine.high %v2528, %v2542
      %v2547 = vcombine.low %v1777, %v1779
      %v2548 = vcombine.high %v1777, %v1779
      %v2549 = vcombine.high %v2051, %v2051
      %v2551 = vunpack.c.l.s4 1983009808
      %v2552 = vunpack.c.0.s8 %v2551
      %v2553 = vlaneseq
      %v2554 = vshrl.u32 %v2553, 7
      %v2555 = vsub.s32 %v2552, %v2554
      %v2556 = vrot.slane %v2547, %v2555
      %v2558 = vunpack.c.l.s4 1983009808
      %v2559 = vunpack.c.0.s8 %v2558
      %v2560 = vlaneseq
      %v2561 = vshrl.u32 %v2560, 7
      %v2562 = vsub.s32 %v2559, %v2561
      %v2563 = vrot.slane %v2548, %v2562
      %v2565 = vunpack.c.l.s4 1983009808
      %v2566 = vunpack.c.0.s8 %v2565
      %v2567 = vlaneseq
      %v2568 = vshrl.u32 %v2567, 7
      %v2569 = vsub.s32 %v2566, %v2568
      %v2570 = vrot.slane %v2051, %v2569
      %v2572 = vunpack.c.l.s4 1983009808
      %v2573 = vunpack.c.0.s8 %v2572
      %v2574 = vlaneseq
      %v2575 = vshrl.u32 %v2574, 7
      %v2576 = vsub.s32 %v2573, %v2575
      %v2577 = vrot.slane %v2549, %v2576
      %v2578 = vcombine.low %v2556, %v2570
      %v2579 = vcombine.high %v2556, %v2570
      %v2580 = vcombine.low %v2563, %v2577
      %v2581 = vcombine.high %v2563, %v2577
      %v2582 = vcombine.low %v1783, %v1785
      %v2583 = vcombine.high %v1783, %v1785
      %v2584 = vcombine.high %v2056, %v2056
      %v2586 = vunpack.c.l.s4 1983009808
      %v2587 = vunpack.c.0.s8 %v2586
      %v2588 = vlaneseq
      %v2589 = vshrl.u32 %v2588, 7
      %v2590 = vsub.s32 %v2587, %v2589
      %v2591 = vrot.slane %v2582, %v2590
      %v2593 = vunpack.c.l.s4 1983009808
      %v2594 = vunpack.c.0.s8 %v2593
      %v2595 = vlaneseq
      %v2596 = vshrl.u32 %v2595, 7
      %v2597 = vsub.s32 %v2594, %v2596
      %v2598 = vrot.slane %v2583, %v2597
      %v2600 = vunpack.c.l.s4 1983009808
      %v2601 = vunpack.c.0.s8 %v2600
      %v2602 = vlaneseq
      %v2603 = vshrl.u32 %v2602, 7
      %v2604 = vsub.s32 %v2601, %v2603
      %v2605 = vrot.slane %v2056, %v2604
      %v2607 = vunpack.c.l.s4 1983009808
      %v2608 = vunpack.c.0.s8 %v2607
      %v2609 = vlaneseq
      %v2610 = vshrl.u32 %v2609, 7
      %v2611 = vsub.s32 %v2608, %v2610
      %v2612 = vrot.slane %v2584, %v2611
      %v2613 = vcombine.low %v2591, %v2605
      %v2614 = vcombine.high %v2591, %v2605
      %v2615 = vcombine.low %v2598, %v2612
      %v2616 = vcombine.high %v2598, %v2612
      %v2617 = vcombine.low %v1789, %v1791
      %v2618 = vcombine.high %v1789, %v1791
      %v2619 = vcombine.high %v2061, %v2061
      %v2621 = vunpack.c.l.s4 1983009808
      %v2622 = vunpack.c.0.s8 %v2621
      %v2623 = vlaneseq
      %v2624 = vshrl.u32 %v2623, 7
      %v2625 = vsub.s32 %v2622, %v2624
      %v2626 = vrot.slane %v2617, %v2625
      %v2628 = vunpack.c.l.s4 1983009808
      %v2629 = vunpack.c.0.s8 %v2628
      %v2630 = vlaneseq
      %v2631 = vshrl.u32 %v2630, 7
      %v2632 = vsub.s32 %v2629, %v2631
      %v2633 = vrot.slane %v2618, %v2632
      %v2635 = vunpack.c.l.s4 1983009808
      %v2636 = vunpack.c.0.s8 %v2635
      %v2637 = vlaneseq
      %v2638 = vshrl.u32 %v2637, 7
      %v2639 = vsub.s32 %v2636, %v2638
      %v2640 = vrot.slane %v2061, %v2639
      %v2642 = vunpack.c.l.s4 1983009808
      %v2643 = vunpack.c.0.s8 %v2642
      %v2644 = vlaneseq
      %v2645 = vshrl.u32 %v2644, 7
      %v2646 = vsub.s32 %v2643, %v2645
      %v2647 = vrot.slane %v2619, %v2646
      %v2648 = vcombine.low %v2626, %v2640
      %v2649 = vcombine.high %v2626, %v2640
      %v2650 = vcombine.low %v2633, %v2647
      %v2651 = vcombine.high %v2633, %v2647
      %v2652 = vcombine.low %v1795, %v1797
      %v2653 = vcombine.high %v1795, %v1797
      %v2654 = vcombine.high %v2066, %v2066
      %v2656 = vunpack.c.l.s4 1983009808
      %v2657 = vunpack.c.0.s8 %v2656
      %v2658 = vlaneseq
      %v2659 = vshrl.u32 %v2658, 7
      %v2660 = vsub.s32 %v2657, %v2659
      %v2661 = vrot.slane %v2652, %v2660
      %v2663 = vunpack.c.l.s4 1983009808
      %v2664 = vunpack.c.0.s8 %v2663
      %v2665 = vlaneseq
      %v2666 = vshrl.u32 %v2665, 7
      %v2667 = vsub.s32 %v2664, %v2666
      %v2668 = vrot.slane %v2653, %v2667
      %v2670 = vunpack.c.l.s4 1983009808
      %v2671 = vunpack.c.0.s8 %v2670
      %v2672 = vlaneseq
      %v2673 = vshrl.u32 %v2672, 7
      %v2674 = vsub.s32 %v2671, %v2673
      %v2675 = vrot.slane %v2066, %v2674
      %v2677 = vunpack.c.l.s4 1983009808
      %v2678 = vunpack.c.0.s8 %v2677
      %v2679 = vlaneseq
      %v2680 = vshrl.u32 %v2679, 7
      %v2681 = vsub.s32 %v2678, %v2680
      %v2682 = vrot.slane %v2654, %v2681
      %v2683 = vcombine.low %v2661, %v2675
      %v2684 = vcombine.high %v2661, %v2675
      %v2685 = vcombine.low %v2668, %v2682
      %v2686 = vcombine.high %v2668, %v2682
      %v2687 = vcombine.low %v1801, %v1803
      %v2688 = vcombine.high %v1801, %v1803
      %v2689 = vcombine.high %v2071, %v2071
      %v2691 = vunpack.c.l.s4 1983009808
      %v2692 = vunpack.c.0.s8 %v2691
      %v2693 = vlaneseq
      %v2694 = vshrl.u32 %v2693, 7
      %v2695 = vsub.s32 %v2692, %v2694
      %v2696 = vrot.slane %v2687, %v2695
      %v2698 = vunpack.c.l.s4 1983009808
      %v2699 = vunpack.c.0.s8 %v2698
      %v2700 = vlaneseq
      %v2701 = vshrl.u32 %v2700, 7
      %v2702 = vsub.s32 %v2699, %v2701
      %v2703 = vrot.slane %v2688, %v2702
      %v2705 = vunpack.c.l.s4 1983009808
      %v2706 = vunpack.c.0.s8 %v2705
      %v2707 = vlaneseq
      %v2708 = vshrl.u32 %v2707, 7
      %v2709 = vsub.s32 %v2706, %v2708
      %v2710 = vrot.slane %v2071, %v2709
      %v2712 = vunpack.c.l.s4 1983009808
      %v2713 = vunpack.c.0.s8 %v2712
      %v2714 = vlaneseq
      %v2715 = vshrl.u32 %v2714, 7
      %v2716 = vsub.s32 %v2713, %v2715
      %v2717 = vrot.slane %v2689, %v2716
      %v2718 = vcombine.low %v2696, %v2710
      %v2719 = vcombine.high %v2696, %v2710
      %v2720 = vcombine.low %v2703, %v2717
      %v2721 = vcombine.high %v2703, %v2717
      %v2722 = vcombine.low %v1807, %v1809
      %v2723 = vcombine.high %v1807, %v1809
      %v2724 = vcombine.high %v2076, %v2076
      %v2726 = vunpack.c.l.s4 1983009808
      %v2727 = vunpack.c.0.s8 %v2726
      %v2728 = vlaneseq
      %v2729 = vshrl.u32 %v2728, 7
      %v2730 = vsub.s32 %v2727, %v2729
      %v2731 = vrot.slane %v2722, %v2730
      %v2733 = vunpack.c.l.s4 1983009808
      %v2734 = vunpack.c.0.s8 %v2733
      %v2735 = vlaneseq
      %v2736 = vshrl.u32 %v2735, 7
      %v2737 = vsub.s32 %v2734, %v2736
      %v2738 = vrot.slane %v2723, %v2737
      %v2740 = vunpack.c.l.s4 1983009808
      %v2741 = vunpack.c.0.s8 %v2740
      %v2742 = vlaneseq
      %v2743 = vshrl.u32 %v2742, 7
      %v2744 = vsub.s32 %v2741, %v2743
      %v2745 = vrot.slane %v2076, %v2744
      %v2747 = vunpack.c.l.s4 1983009808
      %v2748 = vunpack.c.0.s8 %v2747
      %v2749 = vlaneseq
      %v2750 = vshrl.u32 %v2749, 7
      %v2751 = vsub.s32 %v2748, %v2750
      %v2752 = vrot.slane %v2724, %v2751
      %v2753 = vcombine.low %v2731, %v2745
      %v2754 = vcombine.high %v2731, %v2745
      %v2755 = vcombine.low %v2738, %v2752
      %v2756 = vcombine.high %v2738, %v2752
      %v2757 = vcombine.low %v1813, %v1815
      %v2758 = vcombine.high %v1813, %v1815
      %v2759 = vcombine.high %v2081, %v2081
      %v2761 = vunpack.c.l.s4 1983009808
      %v2762 = vunpack.c.0.s8 %v2761
      %v2763 = vlaneseq
      %v2764 = vshrl.u32 %v2763, 7
      %v2765 = vsub.s32 %v2762, %v2764
      %v2766 = vrot.slane %v2757, %v2765
      %v2768 = vunpack.c.l.s4 1983009808
      %v2769 = vunpack.c.0.s8 %v2768
      %v2770 = vlaneseq
      %v2771 = vshrl.u32 %v2770, 7
      %v2772 = vsub.s32 %v2769, %v2771
      %v2773 = vrot.slane %v2758, %v2772
      %v2775 = vunpack.c.l.s4 1983009808
      %v2776 = vunpack.c.0.s8 %v2775
      %v2777 = vlaneseq
      %v2778 = vshrl.u32 %v2777, 7
      %v2779 = vsub.s32 %v2776, %v2778
      %v2780 = vrot.slane %v2081, %v2779
      %v2782 = vunpack.c.l.s4 1983009808
      %v2783 = vunpack.c.0.s8 %v2782
      %v2784 = vlaneseq
      %v2785 = vshrl.u32 %v2784, 7
      %v2786 = vsub.s32 %v2783, %v2785
      %v2787 = vrot.slane %v2759, %v2786
      %v2788 = vcombine.low %v2766, %v2780
      %v2789 = vcombine.high %v2766, %v2780
      %v2790 = vcombine.low %v2773, %v2787
      %v2791 = vcombine.high %v2773, %v2787
      %v2792 = vcombine.low %v1819, %v1821
      %v2793 = vcombine.high %v1819, %v1821
      %v2794 = vcombine.high %v2086, %v2086
      %v2796 = vunpack.c.l.s4 1983009808
      %v2797 = vunpack.c.0.s8 %v2796
      %v2798 = vlaneseq
      %v2799 = vshrl.u32 %v2798, 7
      %v2800 = vsub.s32 %v2797, %v2799
      %v2801 = vrot.slane %v2792, %v2800
      %v2803 = vunpack.c.l.s4 1983009808
      %v2804 = vunpack.c.0.s8 %v2803
      %v2805 = vlaneseq
      %v2806 = vshrl.u32 %v2805, 7
      %v2807 = vsub.s32 %v2804, %v2806
      %v2808 = vrot.slane %v2793, %v2807
      %v2810 = vunpack.c.l.s4 1983009808
      %v2811 = vunpack.c.0.s8 %v2810
      %v2812 = vlaneseq
      %v2813 = vshrl.u32 %v2812, 7
      %v2814 = vsub.s32 %v2811, %v2813
      %v2815 = vrot.slane %v2086, %v2814
      %v2817 = vunpack.c.l.s4 1983009808
      %v2818 = vunpack.c.0.s8 %v2817
      %v2819 = vlaneseq
      %v2820 = vshrl.u32 %v2819, 7
      %v2821 = vsub.s32 %v2818, %v2820
      %v2822 = vrot.slane %v2794, %v2821
      %v2823 = vcombine.low %v2801, %v2815
      %v2824 = vcombine.high %v2801, %v2815
      %v2825 = vcombine.low %v2808, %v2822
      %v2826 = vcombine.high %v2808, %v2822
      %v2827 = vcombine.low %v1825, %v1827
      %v2828 = vcombine.high %v1825, %v1827
      %v2829 = vcombine.high %v2091, %v2091
      %v2831 = vunpack.c.l.s4 1983009808
      %v2832 = vunpack.c.0.s8 %v2831
      %v2833 = vlaneseq
      %v2834 = vshrl.u32 %v2833, 7
      %v2835 = vsub.s32 %v2832, %v2834
      %v2836 = vrot.slane %v2827, %v2835
      %v2838 = vunpack.c.l.s4 1983009808
      %v2839 = vunpack.c.0.s8 %v2838
      %v2840 = vlaneseq
      %v2841 = vshrl.u32 %v2840, 7
      %v2842 = vsub.s32 %v2839, %v2841
      %v2843 = vrot.slane %v2828, %v2842
      %v2845 = vunpack.c.l.s4 1983009808
      %v2846 = vunpack.c.0.s8 %v2845
      %v2847 = vlaneseq
      %v2848 = vshrl.u32 %v2847, 7
      %v2849 = vsub.s32 %v2846, %v2848
      %v2850 = vrot.slane %v2091, %v2849
      %v2852 = vunpack.c.l.s4 1983009808
      %v2853 = vunpack.c.0.s8 %v2852
      %v2854 = vlaneseq
      %v2855 = vshrl.u32 %v2854, 7
      %v2856 = vsub.s32 %v2853, %v2855
      %v2857 = vrot.slane %v2829, %v2856
      %v2858 = vcombine.low %v2836, %v2850
      %v2859 = vcombine.high %v2836, %v2850
      %v2860 = vcombine.low %v2843, %v2857
      %v2861 = vcombine.high %v2843, %v2857
      %v2862 = vcombine.low %v1831, %v1833
      %v2863 = vcombine.high %v1831, %v1833
      %v2864 = vcombine.high %v2096, %v2096
      %v2866 = vunpack.c.l.s4 1983009808
      %v2867 = vunpack.c.0.s8 %v2866
      %v2868 = vlaneseq
      %v2869 = vshrl.u32 %v2868, 7
      %v2870 = vsub.s32 %v2867, %v2869
      %v2871 = vrot.slane %v2862, %v2870
      %v2873 = vunpack.c.l.s4 1983009808
      %v2874 = vunpack.c.0.s8 %v2873
      %v2875 = vlaneseq
      %v2876 = vshrl.u32 %v2875, 7
      %v2877 = vsub.s32 %v2874, %v2876
      %v2878 = vrot.slane %v2863, %v2877
      %v2880 = vunpack.c.l.s4 1983009808
      %v2881 = vunpack.c.0.s8 %v2880
      %v2882 = vlaneseq
      %v2883 = vshrl.u32 %v2882, 7
      %v2884 = vsub.s32 %v2881, %v2883
      %v2885 = vrot.slane %v2096, %v2884
      %v2887 = vunpack.c.l.s4 1983009808
      %v2888 = vunpack.c.0.s8 %v2887
      %v2889 = vlaneseq
      %v2890 = vshrl.u32 %v2889, 7
      %v2891 = vsub.s32 %v2888, %v2890
      %v2892 = vrot.slane %v2864, %v2891
      %v2893 = vcombine.low %v2871, %v2885
      %v2894 = vcombine.high %v2871, %v2885
      %v2895 = vcombine.low %v2878, %v2892
      %v2896 = vcombine.high %v2878, %v2892
      %v2897 = vcombine.low %v1837, %v1839
      %v2898 = vcombine.high %v1837, %v1839
      %v2899 = vcombine.high %v2101, %v2101
      %v2901 = vunpack.c.l.s4 1983009808
      %v2902 = vunpack.c.0.s8 %v2901
      %v2903 = vlaneseq
      %v2904 = vshrl.u32 %v2903, 7
      %v2905 = vsub.s32 %v2902, %v2904
      %v2906 = vrot.slane %v2897, %v2905
      %v2908 = vunpack.c.l.s4 1983009808
      %v2909 = vunpack.c.0.s8 %v2908
      %v2910 = vlaneseq
      %v2911 = vshrl.u32 %v2910, 7
      %v2912 = vsub.s32 %v2909, %v2911
      %v2913 = vrot.slane %v2898, %v2912
      %v2915 = vunpack.c.l.s4 1983009808
      %v2916 = vunpack.c.0.s8 %v2915
      %v2917 = vlaneseq
      %v2918 = vshrl.u32 %v2917, 7
      %v2919 = vsub.s32 %v2916, %v2918
      %v2920 = vrot.slane %v2101, %v2919
      %v2922 = vunpack.c.l.s4 1983009808
      %v2923 = vunpack.c.0.s8 %v2922
      %v2924 = vlaneseq
      %v2925 = vshrl.u32 %v2924, 7
      %v2926 = vsub.s32 %v2923, %v2925
      %v2927 = vrot.slane %v2899, %v2926
      %v2928 = vcombine.low %v2906, %v2920
      %v2929 = vcombine.high %v2906, %v2920
      %v2930 = vcombine.low %v2913, %v2927
      %v2931 = vcombine.high %v2913, %v2927
      %v2932 = vcombine.low %v1843, %v1845
      %v2933 = vcombine.high %v1843, %v1845
      %v2934 = vcombine.high %v2106, %v2106
      %v2936 = vunpack.c.l.s4 1983009808
      %v2937 = vunpack.c.0.s8 %v2936
      %v2938 = vlaneseq
      %v2939 = vshrl.u32 %v2938, 7
      %v2940 = vsub.s32 %v2937, %v2939
      %v2941 = vrot.slane %v2932, %v2940
      %v2943 = vunpack.c.l.s4 1983009808
      %v2944 = vunpack.c.0.s8 %v2943
      %v2945 = vlaneseq
      %v2946 = vshrl.u32 %v2945, 7
      %v2947 = vsub.s32 %v2944, %v2946
      %v2948 = vrot.slane %v2933, %v2947
      %v2950 = vunpack.c.l.s4 1983009808
      %v2951 = vunpack.c.0.s8 %v2950
      %v2952 = vlaneseq
      %v2953 = vshrl.u32 %v2952, 7
      %v2954 = vsub.s32 %v2951, %v2953
      %v2955 = vrot.slane %v2106, %v2954
      %v2957 = vunpack.c.l.s4 1983009808
      %v2958 = vunpack.c.0.s8 %v2957
      %v2959 = vlaneseq
      %v2960 = vshrl.u32 %v2959, 7
      %v2961 = vsub.s32 %v2958, %v2960
      %v2962 = vrot.slane %v2934, %v2961
      %v2963 = vcombine.low %v2941, %v2955
      %v2964 = vcombine.high %v2941, %v2955
      %v2965 = vcombine.low %v2948, %v2962
      %v2966 = vcombine.high %v2948, %v2962
      %v2967 = vcombine.low %v1849, %v1851
      %v2968 = vcombine.high %v1849, %v1851
      %v2969 = vcombine.high %v2111, %v2111
      %v2971 = vunpack.c.l.s4 1983009808
      %v2972 = vunpack.c.0.s8 %v2971
      %v2973 = vlaneseq
      %v2974 = vshrl.u32 %v2973, 7
      %v2975 = vsub.s32 %v2972, %v2974
      %v2976 = vrot.slane %v2967, %v2975
      %v2978 = vunpack.c.l.s4 1983009808
      %v2979 = vunpack.c.0.s8 %v2978
      %v2980 = vlaneseq
      %v2981 = vshrl.u32 %v2980, 7
      %v2982 = vsub.s32 %v2979, %v2981
      %v2983 = vrot.slane %v2968, %v2982
      %v2985 = vunpack.c.l.s4 1983009808
      %v2986 = vunpack.c.0.s8 %v2985
      %v2987 = vlaneseq
      %v2988 = vshrl.u32 %v2987, 7
      %v2989 = vsub.s32 %v2986, %v2988
      %v2990 = vrot.slane %v2111, %v2989
      %v2992 = vunpack.c.l.s4 1983009808
      %v2993 = vunpack.c.0.s8 %v2992
      %v2994 = vlaneseq
      %v2995 = vshrl.u32 %v2994, 7
      %v2996 = vsub.s32 %v2993, %v2995
      %v2997 = vrot.slane %v2969, %v2996
      %v2998 = vcombine.low %v2976, %v2990
      %v2999 = vcombine.high %v2976, %v2990
      %v3000 = vcombine.low %v2983, %v2997
      %v3001 = vcombine.high %v2983, %v2997
      %v3002 = vcombine.low %v1855, %v1857
      %v3003 = vcombine.high %v1855, %v1857
      %v3004 = vcombine.high %v2116, %v2116
      %v3006 = vunpack.c.l.s4 1983009808
      %v3007 = vunpack.c.0.s8 %v3006
      %v3008 = vlaneseq
      %v3009 = vshrl.u32 %v3008, 7
      %v3010 = vsub.s32 %v3007, %v3009
      %v3011 = vrot.slane %v3002, %v3010
      %v3013 = vunpack.c.l.s4 1983009808
      %v3014 = vunpack.c.0.s8 %v3013
      %v3015 = vlaneseq
      %v3016 = vshrl.u32 %v3015, 7
      %v3017 = vsub.s32 %v3014, %v3016
      %v3018 = vrot.slane %v3003, %v3017
      %v3020 = vunpack.c.l.s4 1983009808
      %v3021 = vunpack.c.0.s8 %v3020
      %v3022 = vlaneseq
      %v3023 = vshrl.u32 %v3022, 7
      %v3024 = vsub.s32 %v3021, %v3023
      %v3025 = vrot.slane %v2116, %v3024
      %v3027 = vunpack.c.l.s4 1983009808
      %v3028 = vunpack.c.0.s8 %v3027
      %v3029 = vlaneseq
      %v3030 = vshrl.u32 %v3029, 7
      %v3031 = vsub.s32 %v3028, %v3030
      %v3032 = vrot.slane %v3004, %v3031
      %v3033 = vcombine.low %v3011, %v3025
      %v3034 = vcombine.high %v3011, %v3025
      %v3035 = vcombine.low %v3018, %v3032
      %v3036 = vcombine.high %v3018, %v3032
      %v3037 = vcombine.low %v1861, %v1863
      %v3038 = vcombine.high %v1861, %v1863
      %v3039 = vcombine.high %v2121, %v2121
      %v3041 = vunpack.c.l.s4 1983009808
      %v3042 = vunpack.c.0.s8 %v3041
      %v3043 = vlaneseq
      %v3044 = vshrl.u32 %v3043, 7
      %v3045 = vsub.s32 %v3042, %v3044
      %v3046 = vrot.slane %v3037, %v3045
      %v3048 = vunpack.c.l.s4 1983009808
      %v3049 = vunpack.c.0.s8 %v3048
      %v3050 = vlaneseq
      %v3051 = vshrl.u32 %v3050, 7
      %v3052 = vsub.s32 %v3049, %v3051
      %v3053 = vrot.slane %v3038, %v3052
      %v3055 = vunpack.c.l.s4 1983009808
      %v3056 = vunpack.c.0.s8 %v3055
      %v3057 = vlaneseq
      %v3058 = vshrl.u32 %v3057, 7
      %v3059 = vsub.s32 %v3056, %v3058
      %v3060 = vrot.slane %v2121, %v3059
      %v3062 = vunpack.c.l.s4 1983009808
      %v3063 = vunpack.c.0.s8 %v3062
      %v3064 = vlaneseq
      %v3065 = vshrl.u32 %v3064, 7
      %v3066 = vsub.s32 %v3063, %v3065
      %v3067 = vrot.slane %v3039, %v3066
      %v3068 = vcombine.low %v3046, %v3060
      %v3069 = vcombine.high %v3046, %v3060
      %v3070 = vcombine.low %v3053, %v3067
      %v3071 = vcombine.high %v3053, %v3067
      %v3072 = vcombine.low %v1867, %v1869
      %v3073 = vcombine.high %v1867, %v1869
      %v3074 = vcombine.high %v2126, %v2126
      %v3076 = vunpack.c.l.s4 1983009808
      %v3077 = vunpack.c.0.s8 %v3076
      %v3078 = vlaneseq
      %v3079 = vshrl.u32 %v3078, 7
      %v3080 = vsub.s32 %v3077, %v3079
      %v3081 = vrot.slane %v3072, %v3080
      %v3083 = vunpack.c.l.s4 1983009808
      %v3084 = vunpack.c.0.s8 %v3083
      %v3085 = vlaneseq
      %v3086 = vshrl.u32 %v3085, 7
      %v3087 = vsub.s32 %v3084, %v3086
      %v3088 = vrot.slane %v3073, %v3087
      %v3090 = vunpack.c.l.s4 1983009808
      %v3091 = vunpack.c.0.s8 %v3090
      %v3092 = vlaneseq
      %v3093 = vshrl.u32 %v3092, 7
      %v3094 = vsub.s32 %v3091, %v3093
      %v3095 = vrot.slane %v2126, %v3094
      %v3097 = vunpack.c.l.s4 1983009808
      %v3098 = vunpack.c.0.s8 %v3097
      %v3099 = vlaneseq
      %v3100 = vshrl.u32 %v3099, 7
      %v3101 = vsub.s32 %v3098, %v3100
      %v3102 = vrot.slane %v3074, %v3101
      %v3103 = vcombine.low %v3081, %v3095
      %v3104 = vcombine.high %v3081, %v3095
      %v3105 = vcombine.low %v3088, %v3102
      %v3106 = vcombine.high %v3088, %v3102
      %v3107 = vcombine.low %v1873, %v1875
      %v3108 = vcombine.high %v1873, %v1875
      %v3109 = vcombine.high %v2131, %v2131
      %v3111 = vunpack.c.l.s4 1983009808
      %v3112 = vunpack.c.0.s8 %v3111
      %v3113 = vlaneseq
      %v3114 = vshrl.u32 %v3113, 7
      %v3115 = vsub.s32 %v3112, %v3114
      %v3116 = vrot.slane %v3107, %v3115
      %v3118 = vunpack.c.l.s4 1983009808
      %v3119 = vunpack.c.0.s8 %v3118
      %v3120 = vlaneseq
      %v3121 = vshrl.u32 %v3120, 7
      %v3122 = vsub.s32 %v3119, %v3121
      %v3123 = vrot.slane %v3108, %v3122
      %v3125 = vunpack.c.l.s4 1983009808
      %v3126 = vunpack.c.0.s8 %v3125
      %v3127 = vlaneseq
      %v3128 = vshrl.u32 %v3127, 7
      %v3129 = vsub.s32 %v3126, %v3128
      %v3130 = vrot.slane %v2131, %v3129
      %v3132 = vunpack.c.l.s4 1983009808
      %v3133 = vunpack.c.0.s8 %v3132
      %v3134 = vlaneseq
      %v3135 = vshrl.u32 %v3134, 7
      %v3136 = vsub.s32 %v3133, %v3135
      %v3137 = vrot.slane %v3109, %v3136
      %v3138 = vcombine.low %v3116, %v3130
      %v3139 = vcombine.high %v3116, %v3130
      %v3140 = vcombine.low %v3123, %v3137
      %v3141 = vcombine.high %v3123, %v3137
      %v3142 = vcombine.low %v1879, %v1881
      %v3143 = vcombine.high %v1879, %v1881
      %v3144 = vcombine.high %v2136, %v2136
      %v3146 = vunpack.c.l.s4 1983009808
      %v3147 = vunpack.c.0.s8 %v3146
      %v3148 = vlaneseq
      %v3149 = vshrl.u32 %v3148, 7
      %v3150 = vsub.s32 %v3147, %v3149
      %v3151 = vrot.slane %v3142, %v3150
      %v3153 = vunpack.c.l.s4 1983009808
      %v3154 = vunpack.c.0.s8 %v3153
      %v3155 = vlaneseq
      %v3156 = vshrl.u32 %v3155, 7
      %v3157 = vsub.s32 %v3154, %v3156
      %v3158 = vrot.slane %v3143, %v3157
      %v3160 = vunpack.c.l.s4 1983009808
      %v3161 = vunpack.c.0.s8 %v3160
      %v3162 = vlaneseq
      %v3163 = vshrl.u32 %v3162, 7
      %v3164 = vsub.s32 %v3161, %v3163
      %v3165 = vrot.slane %v2136, %v3164
      %v3167 = vunpack.c.l.s4 1983009808
      %v3168 = vunpack.c.0.s8 %v3167
      %v3169 = vlaneseq
      %v3170 = vshrl.u32 %v3169, 7
      %v3171 = vsub.s32 %v3168, %v3170
      %v3172 = vrot.slane %v3144, %v3171
      %v3173 = vcombine.low %v3151, %v3165
      %v3174 = vcombine.high %v3151, %v3165
      %v3175 = vcombine.low %v3158, %v3172
      %v3176 = vcombine.high %v3158, %v3172
      %v3177 = vcombine.low %v1885, %v1887
      %v3178 = vcombine.high %v1885, %v1887
      %v3179 = vcombine.high %v2141, %v2141
      %v3181 = vunpack.c.l.s4 1983009808
      %v3182 = vunpack.c.0.s8 %v3181
      %v3183 = vlaneseq
      %v3184 = vshrl.u32 %v3183, 7
      %v3185 = vsub.s32 %v3182, %v3184
      %v3186 = vrot.slane %v3177, %v3185
      %v3188 = vunpack.c.l.s4 1983009808
      %v3189 = vunpack.c.0.s8 %v3188
      %v3190 = vlaneseq
      %v3191 = vshrl.u32 %v3190, 7
      %v3192 = vsub.s32 %v3189, %v3191
      %v3193 = vrot.slane %v3178, %v3192
      %v3195 = vunpack.c.l.s4 1983009808
      %v3196 = vunpack.c.0.s8 %v3195
      %v3197 = vlaneseq
      %v3198 = vshrl.u32 %v3197, 7
      %v3199 = vsub.s32 %v3196, %v3198
      %v3200 = vrot.slane %v2141, %v3199
      %v3202 = vunpack.c.l.s4 1983009808
      %v3203 = vunpack.c.0.s8 %v3202
      %v3204 = vlaneseq
      %v3205 = vshrl.u32 %v3204, 7
      %v3206 = vsub.s32 %v3203, %v3205
      %v3207 = vrot.slane %v3179, %v3206
      %v3208 = vcombine.low %v3186, %v3200
      %v3209 = vcombine.high %v3186, %v3200
      %v3210 = vcombine.low %v3193, %v3207
      %v3211 = vcombine.high %v3193, %v3207
      %v3212 = vcombine.low %v1891, %v1893
      %v3213 = vcombine.high %v1891, %v1893
      %v3214 = vcombine.high %v2146, %v2146
      %v3216 = vunpack.c.l.s4 1983009808
      %v3217 = vunpack.c.0.s8 %v3216
      %v3218 = vlaneseq
      %v3219 = vshrl.u32 %v3218, 7
      %v3220 = vsub.s32 %v3217, %v3219
      %v3221 = vrot.slane %v3212, %v3220
      %v3223 = vunpack.c.l.s4 1983009808
      %v3224 = vunpack.c.0.s8 %v3223
      %v3225 = vlaneseq
      %v3226 = vshrl.u32 %v3225, 7
      %v3227 = vsub.s32 %v3224, %v3226
      %v3228 = vrot.slane %v3213, %v3227
      %v3230 = vunpack.c.l.s4 1983009808
      %v3231 = vunpack.c.0.s8 %v3230
      %v3232 = vlaneseq
      %v3233 = vshrl.u32 %v3232, 7
      %v3234 = vsub.s32 %v3231, %v3233
      %v3235 = vrot.slane %v2146, %v3234
      %v3237 = vunpack.c.l.s4 1983009808
      %v3238 = vunpack.c.0.s8 %v3237
      %v3239 = vlaneseq
      %v3240 = vshrl.u32 %v3239, 7
      %v3241 = vsub.s32 %v3238, %v3240
      %v3242 = vrot.slane %v3214, %v3241
      %v3243 = vcombine.low %v3221, %v3235
      %v3244 = vcombine.high %v3221, %v3235
      %v3245 = vcombine.low %v3228, %v3242
      %v3246 = vcombine.high %v3228, %v3242
      %v3247 = vcombine.low %v1897, %v1899
      %v3248 = vcombine.high %v1897, %v1899
      %v3249 = vcombine.high %v2151, %v2151
      %v3251 = vunpack.c.l.s4 1983009808
      %v3252 = vunpack.c.0.s8 %v3251
      %v3253 = vlaneseq
      %v3254 = vshrl.u32 %v3253, 7
      %v3255 = vsub.s32 %v3252, %v3254
      %v3256 = vrot.slane %v3247, %v3255
      %v3258 = vunpack.c.l.s4 1983009808
      %v3259 = vunpack.c.0.s8 %v3258
      %v3260 = vlaneseq
      %v3261 = vshrl.u32 %v3260, 7
      %v3262 = vsub.s32 %v3259, %v3261
      %v3263 = vrot.slane %v3248, %v3262
      %v3265 = vunpack.c.l.s4 1983009808
      %v3266 = vunpack.c.0.s8 %v3265
      %v3267 = vlaneseq
      %v3268 = vshrl.u32 %v3267, 7
      %v3269 = vsub.s32 %v3266, %v3268
      %v3270 = vrot.slane %v2151, %v3269
      %v3272 = vunpack.c.l.s4 1983009808
      %v3273 = vunpack.c.0.s8 %v3272
      %v3274 = vlaneseq
      %v3275 = vshrl.u32 %v3274, 7
      %v3276 = vsub.s32 %v3273, %v3275
      %v3277 = vrot.slane %v3249, %v3276
      %v3278 = vcombine.low %v3256, %v3270
      %v3279 = vcombine.high %v3256, %v3270
      %v3280 = vcombine.low %v3263, %v3277
      %v3281 = vcombine.high %v3263, %v3277
      %v3282 = vcombine.low %v1903, %v1905
      %v3283 = vcombine.high %v1903, %v1905
      %v3284 = vcombine.high %v2156, %v2156
      %v3286 = vunpack.c.l.s4 1983009808
      %v3287 = vunpack.c.0.s8 %v3286
      %v3288 = vlaneseq
      %v3289 = vshrl.u32 %v3288, 7
      %v3290 = vsub.s32 %v3287, %v3289
      %v3291 = vrot.slane %v3282, %v3290
      %v3293 = vunpack.c.l.s4 1983009808
      %v3294 = vunpack.c.0.s8 %v3293
      %v3295 = vlaneseq
      %v3296 = vshrl.u32 %v3295, 7
      %v3297 = vsub.s32 %v3294, %v3296
      %v3298 = vrot.slane %v3283, %v3297
      %v3300 = vunpack.c.l.s4 1983009808
      %v3301 = vunpack.c.0.s8 %v3300
      %v3302 = vlaneseq
      %v3303 = vshrl.u32 %v3302, 7
      %v3304 = vsub.s32 %v3301, %v3303
      %v3305 = vrot.slane %v2156, %v3304
      %v3307 = vunpack.c.l.s4 1983009808
      %v3308 = vunpack.c.0.s8 %v3307
      %v3309 = vlaneseq
      %v3310 = vshrl.u32 %v3309, 7
      %v3311 = vsub.s32 %v3308, %v3310
      %v3312 = vrot.slane %v3284, %v3311
      %v3313 = vcombine.low %v3291, %v3305
      %v3314 = vcombine.high %v3291, %v3305
      %v3315 = vcombine.low %v3298, %v3312
      %v3316 = vcombine.high %v3298, %v3312
      %v3317 = vcombine.low %v1909, %v1911
      %v3318 = vcombine.high %v1909, %v1911
      %v3319 = vcombine.high %v2161, %v2161
      %v3321 = vunpack.c.l.s4 1983009808
      %v3322 = vunpack.c.0.s8 %v3321
      %v3323 = vlaneseq
      %v3324 = vshrl.u32 %v3323, 7
      %v3325 = vsub.s32 %v3322, %v3324
      %v3326 = vrot.slane %v3317, %v3325
      %v3328 = vunpack.c.l.s4 1983009808
      %v3329 = vunpack.c.0.s8 %v3328
      %v3330 = vlaneseq
      %v3331 = vshrl.u32 %v3330, 7
      %v3332 = vsub.s32 %v3329, %v3331
      %v3333 = vrot.slane %v3318, %v3332
      %v3335 = vunpack.c.l.s4 1983009808
      %v3336 = vunpack.c.0.s8 %v3335
      %v3337 = vlaneseq
      %v3338 = vshrl.u32 %v3337, 7
      %v3339 = vsub.s32 %v3336, %v3338
      %v3340 = vrot.slane %v2161, %v3339
      %v3342 = vunpack.c.l.s4 1983009808
      %v3343 = vunpack.c.0.s8 %v3342
      %v3344 = vlaneseq
      %v3345 = vshrl.u32 %v3344, 7
      %v3346 = vsub.s32 %v3343, %v3345
      %v3347 = vrot.slane %v3319, %v3346
      %v3348 = vcombine.low %v3326, %v3340
      %v3349 = vcombine.high %v3326, %v3340
      %v3350 = vcombine.low %v3333, %v3347
      %v3351 = vcombine.high %v3333, %v3347
      %v3352 = vcombine.low %v1915, %v1917
      %v3353 = vcombine.high %v1915, %v1917
      %v3354 = vcombine.high %v2166, %v2166
      %v3356 = vunpack.c.l.s4 1983009808
      %v3357 = vunpack.c.0.s8 %v3356
      %v3358 = vlaneseq
      %v3359 = vshrl.u32 %v3358, 7
      %v3360 = vsub.s32 %v3357, %v3359
      %v3361 = vrot.slane %v3352, %v3360
      %v3363 = vunpack.c.l.s4 1983009808
      %v3364 = vunpack.c.0.s8 %v3363
      %v3365 = vlaneseq
      %v3366 = vshrl.u32 %v3365, 7
      %v3367 = vsub.s32 %v3364, %v3366
      %v3368 = vrot.slane %v3353, %v3367
      %v3370 = vunpack.c.l.s4 1983009808
      %v3371 = vunpack.c.0.s8 %v3370
      %v3372 = vlaneseq
      %v3373 = vshrl.u32 %v3372, 7
      %v3374 = vsub.s32 %v3371, %v3373
      %v3375 = vrot.slane %v2166, %v3374
      %v3377 = vunpack.c.l.s4 1983009808
      %v3378 = vunpack.c.0.s8 %v3377
      %v3379 = vlaneseq
      %v3380 = vshrl.u32 %v3379, 7
      %v3381 = vsub.s32 %v3378, %v3380
      %v3382 = vrot.slane %v3354, %v3381
      %v3383 = vcombine.low %v3361, %v3375
      %v3384 = vcombine.high %v3361, %v3375
      %v3385 = vcombine.low %v3368, %v3382
      %v3386 = vcombine.high %v3368, %v3382
      %v3387 = vcombine.low %v1921, %v1923
      %v3388 = vcombine.high %v1921, %v1923
      %v3389 = vcombine.high %v2171, %v2171
      %v3391 = vunpack.c.l.s4 1983009808
      %v3392 = vunpack.c.0.s8 %v3391
      %v3393 = vlaneseq
      %v3394 = vshrl.u32 %v3393, 7
      %v3395 = vsub.s32 %v3392, %v3394
      %v3396 = vrot.slane %v3387, %v3395
      %v3398 = vunpack.c.l.s4 1983009808
      %v3399 = vunpack.c.0.s8 %v3398
      %v3400 = vlaneseq
      %v3401 = vshrl.u32 %v3400, 7
      %v3402 = vsub.s32 %v3399, %v3401
      %v3403 = vrot.slane %v3388, %v3402
      %v3405 = vunpack.c.l.s4 1983009808
      %v3406 = vunpack.c.0.s8 %v3405
      %v3407 = vlaneseq
      %v3408 = vshrl.u32 %v3407, 7
      %v3409 = vsub.s32 %v3406, %v3408
      %v3410 = vrot.slane %v2171, %v3409
      %v3412 = vunpack.c.l.s4 1983009808
      %v3413 = vunpack.c.0.s8 %v3412
      %v3414 = vlaneseq
      %v3415 = vshrl.u32 %v3414, 7
      %v3416 = vsub.s32 %v3413, %v3415
      %v3417 = vrot.slane %v3389, %v3416
      %v3418 = vcombine.low %v3396, %v3410
      %v3419 = vcombine.high %v3396, %v3410
      %v3420 = vcombine.low %v3403, %v3417
      %v3421 = vcombine.high %v3403, %v3417
      %v3422 = vcombine.low %v1927, %v1929
      %v3423 = vcombine.high %v1927, %v1929
      %v3424 = vcombine.high %v2176, %v2176
      %v3426 = vunpack.c.l.s4 1983009808
      %v3427 = vunpack.c.0.s8 %v3426
      %v3428 = vlaneseq
      %v3429 = vshrl.u32 %v3428, 7
      %v3430 = vsub.s32 %v3427, %v3429
      %v3431 = vrot.slane %v3422, %v3430
      %v3433 = vunpack.c.l.s4 1983009808
      %v3434 = vunpack.c.0.s8 %v3433
      %v3435 = vlaneseq
      %v3436 = vshrl.u32 %v3435, 7
      %v3437 = vsub.s32 %v3434, %v3436
      %v3438 = vrot.slane %v3423, %v3437
      %v3440 = vunpack.c.l.s4 1983009808
      %v3441 = vunpack.c.0.s8 %v3440
      %v3442 = vlaneseq
      %v3443 = vshrl.u32 %v3442, 7
      %v3444 = vsub.s32 %v3441, %v3443
      %v3445 = vrot.slane %v2176, %v3444
      %v3447 = vunpack.c.l.s4 1983009808
      %v3448 = vunpack.c.0.s8 %v3447
      %v3449 = vlaneseq
      %v3450 = vshrl.u32 %v3449, 7
      %v3451 = vsub.s32 %v3448, %v3450
      %v3452 = vrot.slane %v3424, %v3451
      %v3453 = vcombine.low %v3431, %v3445
      %v3454 = vcombine.high %v3431, %v3445
      %v3455 = vcombine.low %v3438, %v3452
      %v3456 = vcombine.high %v3438, %v3452
      %v3457 = vcombine.low %v1933, %v1935
      %v3458 = vcombine.high %v1933, %v1935
      %v3459 = vcombine.high %v2181, %v2181
      %v3461 = vunpack.c.l.s4 1983009808
      %v3462 = vunpack.c.0.s8 %v3461
      %v3463 = vlaneseq
      %v3464 = vshrl.u32 %v3463, 7
      %v3465 = vsub.s32 %v3462, %v3464
      %v3466 = vrot.slane %v3457, %v3465
      %v3468 = vunpack.c.l.s4 1983009808
      %v3469 = vunpack.c.0.s8 %v3468
      %v3470 = vlaneseq
      %v3471 = vshrl.u32 %v3470, 7
      %v3472 = vsub.s32 %v3469, %v3471
      %v3473 = vrot.slane %v3458, %v3472
      %v3475 = vunpack.c.l.s4 1983009808
      %v3476 = vunpack.c.0.s8 %v3475
      %v3477 = vlaneseq
      %v3478 = vshrl.u32 %v3477, 7
      %v3479 = vsub.s32 %v3476, %v3478
      %v3480 = vrot.slane %v2181, %v3479
      %v3482 = vunpack.c.l.s4 1983009808
      %v3483 = vunpack.c.0.s8 %v3482
      %v3484 = vlaneseq
      %v3485 = vshrl.u32 %v3484, 7
      %v3486 = vsub.s32 %v3483, %v3485
      %v3487 = vrot.slane %v3459, %v3486
      %v3488 = vcombine.low %v3466, %v3480
      %v3489 = vcombine.high %v3466, %v3480
      %v3490 = vcombine.low %v3473, %v3487
      %v3491 = vcombine.high %v3473, %v3487
      %v3492 = vcombine.low %v1939, %v1941
      %v3493 = vcombine.high %v1939, %v1941
      %v3494 = vcombine.high %v2186, %v2186
      %v3496 = vunpack.c.l.s4 1983009808
      %v3497 = vunpack.c.0.s8 %v3496
      %v3498 = vlaneseq
      %v3499 = vshrl.u32 %v3498, 7
      %v3500 = vsub.s32 %v3497, %v3499
      %v3501 = vrot.slane %v3492, %v3500
      %v3503 = vunpack.c.l.s4 1983009808
      %v3504 = vunpack.c.0.s8 %v3503
      %v3505 = vlaneseq
      %v3506 = vshrl.u32 %v3505, 7
      %v3507 = vsub.s32 %v3504, %v3506
      %v3508 = vrot.slane %v3493, %v3507
      %v3510 = vunpack.c.l.s4 1983009808
      %v3511 = vunpack.c.0.s8 %v3510
      %v3512 = vlaneseq
      %v3513 = vshrl.u32 %v3512, 7
      %v3514 = vsub.s32 %v3511, %v3513
      %v3515 = vrot.slane %v2186, %v3514
      %v3517 = vunpack.c.l.s4 1983009808
      %v3518 = vunpack.c.0.s8 %v3517
      %v3519 = vlaneseq
      %v3520 = vshrl.u32 %v3519, 7
      %v3521 = vsub.s32 %v3518, %v3520
      %v3522 = vrot.slane %v3494, %v3521
      %v3523 = vcombine.low %v3501, %v3515
      %v3524 = vcombine.high %v3501, %v3515
      %v3525 = vcombine.low %v3508, %v3522
      %v3526 = vcombine.high %v3508, %v3522
      %v3527 = vcombine.low %v1945, %v1947
      %v3528 = vcombine.high %v1945, %v1947
      %v3529 = vcombine.high %v2191, %v2191
      %v3531 = vunpack.c.l.s4 1983009808
      %v3532 = vunpack.c.0.s8 %v3531
      %v3533 = vlaneseq
      %v3534 = vshrl.u32 %v3533, 7
      %v3535 = vsub.s32 %v3532, %v3534
      %v3536 = vrot.slane %v3527, %v3535
      %v3538 = vunpack.c.l.s4 1983009808
      %v3539 = vunpack.c.0.s8 %v3538
      %v3540 = vlaneseq
      %v3541 = vshrl.u32 %v3540, 7
      %v3542 = vsub.s32 %v3539, %v3541
      %v3543 = vrot.slane %v3528, %v3542
      %v3545 = vunpack.c.l.s4 1983009808
      %v3546 = vunpack.c.0.s8 %v3545
      %v3547 = vlaneseq
      %v3548 = vshrl.u32 %v3547, 7
      %v3549 = vsub.s32 %v3546, %v3548
      %v3550 = vrot.slane %v2191, %v3549
      %v3552 = vunpack.c.l.s4 1983009808
      %v3553 = vunpack.c.0.s8 %v3552
      %v3554 = vlaneseq
      %v3555 = vshrl.u32 %v3554, 7
      %v3556 = vsub.s32 %v3553, %v3555
      %v3557 = vrot.slane %v3529, %v3556
      %v3558 = vcombine.low %v3536, %v3550
      %v3559 = vcombine.high %v3536, %v3550
      %v3560 = vcombine.low %v3543, %v3557
      %v3561 = vcombine.high %v3543, %v3557
      %vm3690 = vcmask 1040384
      %vm3691 = vcmask 1042434
      %vm3692 = vmor %vm3690, %vm3691
      %vm3693 = vcmask 1044484
      %vm3694 = vmor %vm3692, %vm3693
      %vm3695 = vcmask 1046534
      %vm3696 = vmor %vm3694, %vm3695
      %v3697 = vrot.slane %v2333, 7
      %v3698 = vrot.slane %v3697, 2
      %v3699 = vrot.slane %v2334, 7
      %v3700 = vsel %vm3696, %v3698, %v3699
      %v3701 = vrot.slane %v3699, 2
      %v3702 = vrot.slane %v2335, 7
      %v3703 = vsel %vm3696, %v3701, %v3702
      %v3704 = vrot.slane %v3702, 2
      %v3705 = vrot.slane %v2336, 7
      %v3706 = vsel %vm3696, %v3704, %v3705
      %v3707 = vrot.slane %v3705, 2
      %v3708 = vrot.slane %v2368, 7
      %v3709 = vsel %vm3696, %v3707, %v3708
      %v3710 = vrot.slane %v3708, 2
      %v3711 = vrot.slane %v2369, 7
      %v3712 = vsel %vm3696, %v3710, %v3711
      %v3713 = vrot.slane %v3711, 2
      %v3714 = vrot.slane %v2370, 7
      %v3715 = vsel %vm3696, %v3713, %v3714
      %v3716 = vrot.slane %v3714, 2
      %v3717 = vrot.slane %v2371, 7
      %v3718 = vsel %vm3696, %v3716, %v3717
      %v3719 = vrot.slane %v3717, 2
      %v3720 = vrot.slane %v2403, 7
      %v3721 = vsel %vm3696, %v3719, %v3720
      %v3722 = vrot.slane %v2404, 7
      %v3723 = vrot.slane %v3722, 2
      %v3724 = vrot.slane %v2405, 7
      %v3725 = vsel %vm3696, %v3723, %v3724
      %v3726 = vrot.slane %v3724, 2
      %v3727 = vrot.slane %v2406, 7
      %v3728 = vsel %vm3696, %v3726, %v3727
      %v3729 = vrot.slane %v3727, 2
      %v3730 = vrot.slane %v2438, 7
      %v3731 = vsel %vm3696, %v3729, %v3730
      %v3732 = vrot.slane %v3730, 2
      %v3733 = vrot.slane %v2439, 7
      %v3734 = vsel %vm3696, %v3732, %v3733
      %v3735 = vrot.slane %v3733, 2
      %v3736 = vrot.slane %v2440, 7
      %v3737 = vsel %vm3696, %v3735, %v3736
      %v3738 = vrot.slane %v3736, 2
      %v3739 = vrot.slane %v2441, 7
      %v3740 = vsel %vm3696, %v3738, %v3739
      %v3741 = vrot.slane %v3739, 2
      %v3742 = vrot.slane %v2473, 7
      %v3743 = vsel %vm3696, %v3741, %v3742
      %v3744 = vrot.slane %v3742, 2
      %v3745 = vrot.slane %v2474, 7
      %v3746 = vsel %vm3696, %v3744, %v3745
      %v3747 = vrot.slane %v2475, 7
      %v3748 = vrot.slane %v3747, 2
      %v3749 = vrot.slane %v2476, 7
      %v3750 = vsel %vm3696, %v3748, %v3749
      %v3751 = vrot.slane %v3749, 2
      %v3752 = vrot.slane %v2508, 7
      %v3753 = vsel %vm3696, %v3751, %v3752
      %v3754 = vrot.slane %v3752, 2
      %v3755 = vrot.slane %v2509, 7
      %v3756 = vsel %vm3696, %v3754, %v3755
      %v3757 = vrot.slane %v3755, 2
      %v3758 = vrot.slane %v2510, 7
      %v3759 = vsel %vm3696, %v3757, %v3758
      %v3760 = vrot.slane %v3758, 2
      %v3761 = vrot.slane %v2511, 7
      %v3762 = vsel %vm3696, %v3760, %v3761
      %v3763 = vrot.slane %v3761, 2
      %v3764 = vrot.slane %v2543, 7
      %v3765 = vsel %vm3696, %v3763, %v3764
      %v3766 = vrot.slane %v3764, 2
      %v3767 = vrot.slane %v2544, 7
      %v3768 = vsel %vm3696, %v3766, %v3767
      %v3769 = vrot.slane %v3767, 2
      %v3770 = vrot.slane %v2545, 7
      %v3771 = vsel %vm3696, %v3769, %v3770
      %v3772 = vrot.slane %v2546, 7
      %v3773 = vrot.slane %v3772, 2
      %v3774 = vrot.slane %v2578, 7
      %v3775 = vsel %vm3696, %v3773, %v3774
      %v3776 = vrot.slane %v3774, 2
      %v3777 = vrot.slane %v2579, 7
      %v3778 = vsel %vm3696, %v3776, %v3777
      %v3779 = vrot.slane %v3777, 2
      %v3780 = vrot.slane %v2580, 7
      %v3781 = vsel %vm3696, %v3779, %v3780
      %v3782 = vrot.slane %v3780, 2
      %v3783 = vrot.slane %v2581, 7
      %v3784 = vsel %vm3696, %v3782, %v3783
      %v3785 = vrot.slane %v3783, 2
      %v3786 = vrot.slane %v2613, 7
      %v3787 = vsel %vm3696, %v3785, %v3786
      %v3788 = vrot.slane %v3786, 2
      %v3789 = vrot.slane %v2614, 7
      %v3790 = vsel %vm3696, %v3788, %v3789
      %v3791 = vrot.slane %v3789, 2
      %v3792 = vrot.slane %v2615, 7
      %v3793 = vsel %vm3696, %v3791, %v3792
      %v3794 = vrot.slane %v3792, 2
      %v3795 = vrot.slane %v2616, 7
      %v3796 = vsel %vm3696, %v3794, %v3795
      %v3797 = vrot.slane %v2648, 7
      %v3798 = vrot.slane %v3797, 2
      %v3799 = vrot.slane %v2649, 7
      %v3800 = vsel %vm3696, %v3798, %v3799
      %v3801 = vrot.slane %v3799, 2
      %v3802 = vrot.slane %v2650, 7
      %v3803 = vsel %vm3696, %v3801, %v3802
      %v3804 = vrot.slane %v3802, 2
      %v3805 = vrot.slane %v2651, 7
      %v3806 = vsel %vm3696, %v3804, %v3805
      %v3807 = vrot.slane %v3805, 2
      %v3808 = vrot.slane %v2683, 7
      %v3809 = vsel %vm3696, %v3807, %v3808
      %v3810 = vrot.slane %v3808, 2
      %v3811 = vrot.slane %v2684, 7
      %v3812 = vsel %vm3696, %v3810, %v3811
      %v3813 = vrot.slane %v3811, 2
      %v3814 = vrot.slane %v2685, 7
      %v3815 = vsel %vm3696, %v3813, %v3814
      %v3816 = vrot.slane %v3814, 2
      %v3817 = vrot.slane %v2686, 7
      %v3818 = vsel %vm3696, %v3816, %v3817
      %v3819 = vrot.slane %v3817, 2
      %v3820 = vrot.slane %v2718, 7
      %v3821 = vsel %vm3696, %v3819, %v3820
      %v3822 = vrot.slane %v2719, 7
      %v3823 = vrot.slane %v3822, 2
      %v3824 = vrot.slane %v2720, 7
      %v3825 = vsel %vm3696, %v3823, %v3824
      %v3826 = vrot.slane %v3824, 2
      %v3827 = vrot.slane %v2721, 7
      %v3828 = vsel %vm3696, %v3826, %v3827
      %v3829 = vrot.slane %v3827, 2
      %v3830 = vrot.slane %v2753, 7
      %v3831 = vsel %vm3696, %v3829, %v3830
      %v3832 = vrot.slane %v3830, 2
      %v3833 = vrot.slane %v2754, 7
      %v3834 = vsel %vm3696, %v3832, %v3833
      %v3835 = vrot.slane %v3833, 2
      %v3836 = vrot.slane %v2755, 7
      %v3837 = vsel %vm3696, %v3835, %v3836
      %v3838 = vrot.slane %v3836, 2
      %v3839 = vrot.slane %v2756, 7
      %v3840 = vsel %vm3696, %v3838, %v3839
      %v3841 = vrot.slane %v3839, 2
      %v3842 = vrot.slane %v2788, 7
      %v3843 = vsel %vm3696, %v3841, %v3842
      %v3844 = vrot.slane %v3842, 2
      %v3845 = vrot.slane %v2789, 7
      %v3846 = vsel %vm3696, %v3844, %v3845
      %v3847 = vrot.slane %v2790, 7
      %v3848 = vrot.slane %v3847, 2
      %v3849 = vrot.slane %v2791, 7
      %v3850 = vsel %vm3696, %v3848, %v3849
      %v3851 = vrot.slane %v3849, 2
      %v3852 = vrot.slane %v2823, 7
      %v3853 = vsel %vm3696, %v3851, %v3852
      %v3854 = vrot.slane %v3852, 2
      %v3855 = vrot.slane %v2824, 7
      %v3856 = vsel %vm3696, %v3854, %v3855
      %v3857 = vrot.slane %v3855, 2
      %v3858 = vrot.slane %v2825, 7
      %v3859 = vsel %vm3696, %v3857, %v3858
      %v3860 = vrot.slane %v3858, 2
      %v3861 = vrot.slane %v2826, 7
      %v3862 = vsel %vm3696, %v3860, %v3861
      %v3863 = vrot.slane %v3861, 2
      %v3864 = vrot.slane %v2858, 7
      %v3865 = vsel %vm3696, %v3863, %v3864
      %v3866 = vrot.slane %v3864, 2
      %v3867 = vrot.slane %v2859, 7
      %v3868 = vsel %vm3696, %v3866, %v3867
      %v3869 = vrot.slane %v3867, 2
      %v3870 = vrot.slane %v2860, 7
      %v3871 = vsel %vm3696, %v3869, %v3870
      %v3872 = vrot.slane %v2861, 7
      %v3873 = vrot.slane %v3872, 2
      %v3874 = vrot.slane %v2893, 7
      %v3875 = vsel %vm3696, %v3873, %v3874
      %v3876 = vrot.slane %v3874, 2
      %v3877 = vrot.slane %v2894, 7
      %v3878 = vsel %vm3696, %v3876, %v3877
      %v3879 = vrot.slane %v3877, 2
      %v3880 = vrot.slane %v2895, 7
      %v3881 = vsel %vm3696, %v3879, %v3880
      %v3882 = vrot.slane %v3880, 2
      %v3883 = vrot.slane %v2896, 7
      %v3884 = vsel %vm3696, %v3882, %v3883
      %v3885 = vrot.slane %v3883, 2
      %v3886 = vrot.slane %v2928, 7
      %v3887 = vsel %vm3696, %v3885, %v3886
      %v3888 = vrot.slane %v3886, 2
      %v3889 = vrot.slane %v2929, 7
      %v3890 = vsel %vm3696, %v3888, %v3889
      %v3891 = vrot.slane %v3889, 2
      %v3892 = vrot.slane %v2930, 7
      %v3893 = vsel %vm3696, %v3891, %v3892
      %v3894 = vrot.slane %v3892, 2
      %v3895 = vrot.slane %v2931, 7
      %v3896 = vsel %vm3696, %v3894, %v3895
      %v3897 = vrot.slane %v2963, 7
      %v3898 = vrot.slane %v3897, 2
      %v3899 = vrot.slane %v2964, 7
      %v3900 = vsel %vm3696, %v3898, %v3899
      %v3901 = vrot.slane %v3899, 2
      %v3902 = vrot.slane %v2965, 7
      %v3903 = vsel %vm3696, %v3901, %v3902
      %v3904 = vrot.slane %v3902, 2
      %v3905 = vrot.slane %v2966, 7
      %v3906 = vsel %vm3696, %v3904, %v3905
      %v3907 = vrot.slane %v3905, 2
      %v3908 = vrot.slane %v2998, 7
      %v3909 = vsel %vm3696, %v3907, %v3908
      %v3910 = vrot.slane %v3908, 2
      %v3911 = vrot.slane %v2999, 7
      %v3912 = vsel %vm3696, %v3910, %v3911
      %v3913 = vrot.slane %v3911, 2
      %v3914 = vrot.slane %v3000, 7
      %v3915 = vsel %vm3696, %v3913, %v3914
      %v3916 = vrot.slane %v3914, 2
      %v3917 = vrot.slane %v3001, 7
      %v3918 = vsel %vm3696, %v3916, %v3917
      %v3919 = vrot.slane %v3917, 2
      %v3920 = vrot.slane %v3033, 7
      %v3921 = vsel %vm3696, %v3919, %v3920
      %v3922 = vrot.slane %v3034, 7
      %v3923 = vrot.slane %v3922, 2
      %v3924 = vrot.slane %v3035, 7
      %v3925 = vsel %vm3696, %v3923, %v3924
      %v3926 = vrot.slane %v3924, 2
      %v3927 = vrot.slane %v3036, 7
      %v3928 = vsel %vm3696, %v3926, %v3927
      %v3929 = vrot.slane %v3927, 2
      %v3930 = vrot.slane %v3068, 7
      %v3931 = vsel %vm3696, %v3929, %v3930
      %v3932 = vrot.slane %v3930, 2
      %v3933 = vrot.slane %v3069, 7
      %v3934 = vsel %vm3696, %v3932, %v3933
      %v3935 = vrot.slane %v3933, 2
      %v3936 = vrot.slane %v3070, 7
      %v3937 = vsel %vm3696, %v3935, %v3936
      %v3938 = vrot.slane %v3936, 2
      %v3939 = vrot.slane %v3071, 7
      %v3940 = vsel %vm3696, %v3938, %v3939
      %v3941 = vrot.slane %v3939, 2
      %v3942 = vrot.slane %v3103, 7
      %v3943 = vsel %vm3696, %v3941, %v3942
      %v3944 = vrot.slane %v3942, 2
      %v3945 = vrot.slane %v3104, 7
      %v3946 = vsel %vm3696, %v3944, %v3945
      %v3947 = vrot.slane %v3105, 7
      %v3948 = vrot.slane %v3947, 2
      %v3949 = vrot.slane %v3106, 7
      %v3950 = vsel %vm3696, %v3948, %v3949
      %v3951 = vrot.slane %v3949, 2
      %v3952 = vrot.slane %v3138, 7
      %v3953 = vsel %vm3696, %v3951, %v3952
      %v3954 = vrot.slane %v3952, 2
      %v3955 = vrot.slane %v3139, 7
      %v3956 = vsel %vm3696, %v3954, %v3955
      %v3957 = vrot.slane %v3955, 2
      %v3958 = vrot.slane %v3140, 7
      %v3959 = vsel %vm3696, %v3957, %v3958
      %v3960 = vrot.slane %v3958, 2
      %v3961 = vrot.slane %v3141, 7
      %v3962 = vsel %vm3696, %v3960, %v3961
      %v3963 = vrot.slane %v3961, 2
      %v3964 = vrot.slane %v3173, 7
      %v3965 = vsel %vm3696, %v3963, %v3964
      %v3966 = vrot.slane %v3964, 2
      %v3967 = vrot.slane %v3174, 7
      %v3968 = vsel %vm3696, %v3966, %v3967
      %v3969 = vrot.slane %v3967, 2
      %v3970 = vrot.slane %v3175, 7
      %v3971 = vsel %vm3696, %v3969, %v3970
      %v3972 = vrot.slane %v3176, 7
      %v3973 = vrot.slane %v3972, 2
      %v3974 = vrot.slane %v3208, 7
      %v3975 = vsel %vm3696, %v3973, %v3974
      %v3976 = vrot.slane %v3974, 2
      %v3977 = vrot.slane %v3209, 7
      %v3978 = vsel %vm3696, %v3976, %v3977
      %v3979 = vrot.slane %v3977, 2
      %v3980 = vrot.slane %v3210, 7
      %v3981 = vsel %vm3696, %v3979, %v3980
      %v3982 = vrot.slane %v3980, 2
      %v3983 = vrot.slane %v3211, 7
      %v3984 = vsel %vm3696, %v3982, %v3983
      %v3985 = vrot.slane %v3983, 2
      %v3986 = vrot.slane %v3243, 7
      %v3987 = vsel %vm3696, %v3985, %v3986
      %v3988 = vrot.slane %v3986, 2
      %v3989 = vrot.slane %v3244, 7
      %v3990 = vsel %vm3696, %v3988, %v3989
      %v3991 = vrot.slane %v3989, 2
      %v3992 = vrot.slane %v3245, 7
      %v3993 = vsel %vm3696, %v3991, %v3992
      %v3994 = vrot.slane %v3992, 2
      %v3995 = vrot.slane %v3246, 7
      %v3996 = vsel %vm3696, %v3994, %v3995
      %v3997 = vrot.slane %v3278, 7
      %v3998 = vrot.slane %v3997, 2
      %v3999 = vrot.slane %v3279, 7
      %v4000 = vsel %vm3696, %v3998, %v3999
      %v4001 = vrot.slane %v3999, 2
      %v4002 = vrot.slane %v3280, 7
      %v4003 = vsel %vm3696, %v4001, %v4002
      %v4004 = vrot.slane %v4002, 2
      %v4005 = vrot.slane %v3281, 7
      %v4006 = vsel %vm3696, %v4004, %v4005
      %v4007 = vrot.slane %v4005, 2
      %v4008 = vrot.slane %v3313, 7
      %v4009 = vsel %vm3696, %v4007, %v4008
      %v4010 = vrot.slane %v4008, 2
      %v4011 = vrot.slane %v3314, 7
      %v4012 = vsel %vm3696, %v4010, %v4011
      %v4013 = vrot.slane %v4011, 2
      %v4014 = vrot.slane %v3315, 7
      %v4015 = vsel %vm3696, %v4013, %v4014
      %v4016 = vrot.slane %v4014, 2
      %v4017 = vrot.slane %v3316, 7
      %v4018 = vsel %vm3696, %v4016, %v4017
      %v4019 = vrot.slane %v4017, 2
      %v4020 = vrot.slane %v3348, 7
      %v4021 = vsel %vm3696, %v4019, %v4020
      %v4022 = vrot.slane %v3349, 7
      %v4023 = vrot.slane %v4022, 2
      %v4024 = vrot.slane %v3350, 7
      %v4025 = vsel %vm3696, %v4023, %v4024
      %v4026 = vrot.slane %v4024, 2
      %v4027 = vrot.slane %v3351, 7
      %v4028 = vsel %vm3696, %v4026, %v4027
      %v4029 = vrot.slane %v4027, 2
      %v4030 = vrot.slane %v3383, 7
      %v4031 = vsel %vm3696, %v4029, %v4030
      %v4032 = vrot.slane %v4030, 2
      %v4033 = vrot.slane %v3384, 7
      %v4034 = vsel %vm3696, %v4032, %v4033
      %v4035 = vrot.slane %v4033, 2
      %v4036 = vrot.slane %v3385, 7
      %v4037 = vsel %vm3696, %v4035, %v4036
      %v4038 = vrot.slane %v4036, 2
      %v4039 = vrot.slane %v3386, 7
      %v4040 = vsel %vm3696, %v4038, %v4039
      %v4041 = vrot.slane %v4039, 2
      %v4042 = vrot.slane %v3418, 7
      %v4043 = vsel %vm3696, %v4041, %v4042
      %v4044 = vrot.slane %v4042, 2
      %v4045 = vrot.slane %v3419, 7
      %v4046 = vsel %vm3696, %v4044, %v4045
      %v4047 = vrot.slane %v3420, 7
      %v4048 = vrot.slane %v4047, 2
      %v4049 = vrot.slane %v3421, 7
      %v4050 = vsel %vm3696, %v4048, %v4049
      %v4051 = vrot.slane %v4049, 2
      %v4052 = vrot.slane %v3453, 7
      %v4053 = vsel %vm3696, %v4051, %v4052
      %v4054 = vrot.slane %v4052, 2
      %v4055 = vrot.slane %v3454, 7
      %v4056 = vsel %vm3696, %v4054, %v4055
      %v4057 = vrot.slane %v4055, 2
      %v4058 = vrot.slane %v3455, 7
      %v4059 = vsel %vm3696, %v4057, %v4058
      %v4060 = vrot.slane %v4058, 2
      %v4061 = vrot.slane %v3456, 7
      %v4062 = vsel %vm3696, %v4060, %v4061
      %v4063 = vrot.slane %v4061, 2
      %v4064 = vrot.slane %v3488, 7
      %v4065 = vsel %vm3696, %v4063, %v4064
      %v4066 = vrot.slane %v4064, 2
      %v4067 = vrot.slane %v3489, 7
      %v4068 = vsel %vm3696, %v4066, %v4067
      %v4069 = vrot.slane %v4067, 2
      %v4070 = vrot.slane %v3490, 7
      %v4071 = vsel %vm3696, %v4069, %v4070
      %v4072 = vrot.slane %v3491, 7
      %v4073 = vrot.slane %v4072, 2
      %v4074 = vrot.slane %v3523, 7
      %v4075 = vsel %vm3696, %v4073, %v4074
      %v4076 = vrot.slane %v4074, 2
      %v4077 = vrot.slane %v3524, 7
      %v4078 = vsel %vm3696, %v4076, %v4077
      %v4079 = vrot.slane %v4077, 2
      %v4080 = vrot.slane %v3525, 7
      %v4081 = vsel %vm3696, %v4079, %v4080
      %v4082 = vrot.slane %v4080, 2
      %v4083 = vrot.slane %v3526, 7
      %v4084 = vsel %vm3696, %v4082, %v4083
      %v4085 = vrot.slane %v4083, 2
      %v4086 = vrot.slane %v3558, 7
      %v4087 = vsel %vm3696, %v4085, %v4086
      %v4088 = vrot.slane %v4086, 2
      %v4089 = vrot.slane %v3559, 7
      %v4090 = vsel %vm3696, %v4088, %v4089
      %v4091 = vrot.slane %v4089, 2
      %v4092 = vrot.slane %v3560, 7
      %v4093 = vsel %vm3696, %v4091, %v4092
      %v4094 = vrot.slane %v4092, 2
      %v4095 = vrot.slane %v3561, 7
      %v4096 = vsel %vm3696, %v4094, %v4095
      %v4097 = vrot.slane %v3700, 2
      %v4098 = vrot.slane %v3703, 2
      %v4099 = vrot.slane %v3706, 2
      %v4100 = vrot.slane %v3709, 2
      %v4101 = vrot.slane %v3712, 2
      %v4102 = vrot.slane %v3715, 2
      %v4103 = vrot.slane %v3718, 2
      %v4104 = vrot.slane %v3721, 2
      %v4105 = vrot.slane %v3725, 2
      %v4106 = vrot.slane %v3728, 2
      %v4107 = vrot.slane %v3731, 2
      %v4108 = vrot.slane %v3734, 2
      %v4109 = vrot.slane %v3737, 2
      %v4110 = vrot.slane %v3740, 2
      %v4111 = vrot.slane %v3743, 2
      %v4112 = vrot.slane %v3746, 2
      %v4113 = vrot.slane %v3750, 2
      %v4114 = vrot.slane %v3753, 2
      %v4115 = vrot.slane %v3756, 2
      %v4116 = vrot.slane %v3759, 2
      %v4117 = vrot.slane %v3762, 2
      %v4118 = vrot.slane %v3765, 2
      %v4119 = vrot.slane %v3768, 2
      %v4120 = vrot.slane %v3771, 2
      %v4121 = vrot.slane %v3775, 2
      %v4122 = vrot.slane %v3778, 2
      %v4123 = vrot.slane %v3781, 2
      %v4124 = vrot.slane %v3784, 2
      %v4125 = vrot.slane %v3787, 2
      %v4126 = vrot.slane %v3790, 2
      %v4127 = vrot.slane %v3793, 2
      %v4128 = vrot.slane %v3796, 2
      %v4129 = vrot.slane %v3800, 2
      %v4130 = vrot.slane %v3803, 2
      %v4131 = vrot.slane %v3806, 2
      %v4132 = vrot.slane %v3809, 2
      %v4133 = vrot.slane %v3812, 2
      %v4134 = vrot.slane %v3815, 2
      %v4135 = vrot.slane %v3818, 2
      %v4136 = vrot.slane %v3821, 2
      %v4137 = vrot.slane %v3825, 2
      %v4138 = vrot.slane %v3828, 2
      %v4139 = vrot.slane %v3831, 2
      %v4140 = vrot.slane %v3834, 2
      %v4141 = vrot.slane %v3837, 2
      %v4142 = vrot.slane %v3840, 2
      %v4143 = vrot.slane %v3843, 2
      %v4144 = vrot.slane %v3846, 2
      %v4145 = vrot.slane %v3850, 2
      %v4146 = vrot.slane %v3853, 2
      %v4147 = vrot.slane %v3856, 2
      %v4148 = vrot.slane %v3859, 2
      %v4149 = vrot.slane %v3862, 2
      %v4150 = vrot.slane %v3865, 2
      %v4151 = vrot.slane %v3868, 2
      %v4152 = vrot.slane %v3871, 2
      %v4153 = vrot.slane %v3875, 2
      %v4154 = vrot.slane %v3878, 2
      %v4155 = vrot.slane %v3881, 2
      %v4156 = vrot.slane %v3884, 2
      %v4157 = vrot.slane %v3887, 2
      %v4158 = vrot.slane %v3890, 2
      %v4159 = vrot.slane %v3893, 2
      %v4160 = vrot.slane %v3896, 2
      %v4161 = vrot.slane %v3900, 2
      %v4162 = vrot.slane %v3903, 2
      %v4163 = vrot.slane %v3906, 2
      %v4164 = vrot.slane %v3909, 2
      %v4165 = vrot.slane %v3912, 2
      %v4166 = vrot.slane %v3915, 2
      %v4167 = vrot.slane %v3918, 2
      %v4168 = vrot.slane %v3921, 2
      %v4169 = vrot.slane %v3925, 2
      %v4170 = vrot.slane %v3928, 2
      %v4171 = vrot.slane %v3931, 2
      %v4172 = vrot.slane %v3934, 2
      %v4173 = vrot.slane %v3937, 2
      %v4174 = vrot.slane %v3940, 2
      %v4175 = vrot.slane %v3943, 2
      %v4176 = vrot.slane %v3946, 2
      %v4177 = vrot.slane %v3950, 2
      %v4178 = vrot.slane %v3953, 2
      %v4179 = vrot.slane %v3956, 2
      %v4180 = vrot.slane %v3959, 2
      %v4181 = vrot.slane %v3962, 2
      %v4182 = vrot.slane %v3965, 2
      %v4183 = vrot.slane %v3968, 2
      %v4184 = vrot.slane %v3971, 2
      %v4185 = vrot.slane %v3975, 2
      %v4186 = vrot.slane %v3978, 2
      %v4187 = vrot.slane %v3981, 2
      %v4188 = vrot.slane %v3984, 2
      %v4189 = vrot.slane %v3987, 2
      %v4190 = vrot.slane %v3990, 2
      %v4191 = vrot.slane %v3993, 2
      %v4192 = vrot.slane %v3996, 2
      %v4193 = vrot.slane %v4000, 2
      %v4194 = vrot.slane %v4003, 2
      %v4195 = vrot.slane %v4006, 2
      %v4196 = vrot.slane %v4009, 2
      %v4197 = vrot.slane %v4012, 2
      %v4198 = vrot.slane %v4015, 2
      %v4199 = vrot.slane %v4018, 2
      %v4200 = vrot.slane %v4021, 2
      %v4201 = vrot.slane %v4025, 2
      %v4202 = vrot.slane %v4028, 2
      %v4203 = vrot.slane %v4031, 2
      %v4204 = vrot.slane %v4034, 2
      %v4205 = vrot.slane %v4037, 2
      %v4206 = vrot.slane %v4040, 2
      %v4207 = vrot.slane %v4043, 2
      %v4208 = vrot.slane %v4046, 2
      %v4209 = vrot.slane %v4050, 2
      %v4210 = vrot.slane %v4053, 2
      %v4211 = vrot.slane %v4056, 2
      %v4212 = vrot.slane %v4059, 2
      %v4213 = vrot.slane %v4062, 2
      %v4214 = vrot.slane %v4065, 2
      %v4215 = vrot.slane %v4068, 2
      %v4216 = vrot.slane %v4071, 2
      %v4217 = vrot.slane %v4075, 2
      %v4218 = vrot.slane %v4078, 2
      %v4219 = vrot.slane %v4081, 2
      %v4220 = vrot.slane %v4084, 2
      %v4221 = vrot.slane %v4087, 2
      %v4222 = vrot.slane %v4090, 2
      %v4223 = vrot.slane %v4093, 2
      %v4224 = vrot.slane %v4096, 2
      %v4353 = vadd.f32 %v2333, %v4097
      %v4354 = vadd.f32 %v2334, %v4098
      %v4355 = vadd.f32 %v2335, %v4099
      %v4356 = vadd.f32 %v2336, %v4100
      %v4357 = vadd.f32 %v2368, %v4101
      %v4358 = vadd.f32 %v2369, %v4102
      %v4359 = vadd.f32 %v2370, %v4103
      %v4360 = vadd.f32 %v2371, %v4104
      %v4361 = vadd.f32 %v2404, %v4105
      %v4362 = vadd.f32 %v2405, %v4106
      %v4363 = vadd.f32 %v2406, %v4107
      %v4364 = vadd.f32 %v2438, %v4108
      %v4365 = vadd.f32 %v2439, %v4109
      %v4366 = vadd.f32 %v2440, %v4110
      %v4367 = vadd.f32 %v2441, %v4111
      %v4368 = vadd.f32 %v2473, %v4112
      %v4369 = vadd.f32 %v2475, %v4113
      %v4370 = vadd.f32 %v2476, %v4114
      %v4371 = vadd.f32 %v2508, %v4115
      %v4372 = vadd.f32 %v2509, %v4116
      %v4373 = vadd.f32 %v2510, %v4117
      %v4374 = vadd.f32 %v2511, %v4118
      %v4375 = vadd.f32 %v2543, %v4119
      %v4376 = vadd.f32 %v2544, %v4120
      %v4377 = vadd.f32 %v2546, %v4121
      %v4378 = vadd.f32 %v2578, %v4122
      %v4379 = vadd.f32 %v2579, %v4123
      %v4380 = vadd.f32 %v2580, %v4124
      %v4381 = vadd.f32 %v2581, %v4125
      %v4382 = vadd.f32 %v2613, %v4126
      %v4383 = vadd.f32 %v2614, %v4127
      %v4384 = vadd.f32 %v2615, %v4128
      %v4385 = vadd.f32 %v2648, %v4129
      %v4386 = vadd.f32 %v2649, %v4130
      %v4387 = vadd.f32 %v2650, %v4131
      %v4388 = vadd.f32 %v2651, %v4132
      %v4389 = vadd.f32 %v2683, %v4133
      %v4390 = vadd.f32 %v2684, %v4134
      %v4391 = vadd.f32 %v2685, %v4135
      %v4392 = vadd.f32 %v2686, %v4136
      %v4393 = vadd.f32 %v2719, %v4137
      %v4394 = vadd.f32 %v2720, %v4138
      %v4395 = vadd.f32 %v2721, %v4139
      %v4396 = vadd.f32 %v2753, %v4140
      %v4397 = vadd.f32 %v2754, %v4141
      %v4398 = vadd.f32 %v2755, %v4142
      %v4399 = vadd.f32 %v2756, %v4143
      %v4400 = vadd.f32 %v2788, %v4144
      %v4401 = vadd.f32 %v2790, %v4145
      %v4402 = vadd.f32 %v2791, %v4146
      %v4403 = vadd.f32 %v2823, %v4147
      %v4404 = vadd.f32 %v2824, %v4148
      %v4405 = vadd.f32 %v2825, %v4149
      %v4406 = vadd.f32 %v2826, %v4150
      %v4407 = vadd.f32 %v2858, %v4151
      %v4408 = vadd.f32 %v2859, %v4152
      %v4409 = vadd.f32 %v2861, %v4153
      %v4410 = vadd.f32 %v2893, %v4154
      %v4411 = vadd.f32 %v2894, %v4155
      %v4412 = vadd.f32 %v2895, %v4156
      %v4413 = vadd.f32 %v2896, %v4157
      %v4414 = vadd.f32 %v2928, %v4158
      %v4415 = vadd.f32 %v2929, %v4159
      %v4416 = vadd.f32 %v2930, %v4160
      %v4417 = vadd.f32 %v2963, %v4161
      %v4418 = vadd.f32 %v2964, %v4162
      %v4419 = vadd.f32 %v2965, %v4163
      %v4420 = vadd.f32 %v2966, %v4164
      %v4421 = vadd.f32 %v2998, %v4165
      %v4422 = vadd.f32 %v2999, %v4166
      %v4423 = vadd.f32 %v3000, %v4167
      %v4424 = vadd.f32 %v3001, %v4168
      %v4425 = vadd.f32 %v3034, %v4169
      %v4426 = vadd.f32 %v3035, %v4170
      %v4427 = vadd.f32 %v3036, %v4171
      %v4428 = vadd.f32 %v3068, %v4172
      %v4429 = vadd.f32 %v3069, %v4173
      %v4430 = vadd.f32 %v3070, %v4174
      %v4431 = vadd.f32 %v3071, %v4175
      %v4432 = vadd.f32 %v3103, %v4176
      %v4433 = vadd.f32 %v3105, %v4177
      %v4434 = vadd.f32 %v3106, %v4178
      %v4435 = vadd.f32 %v3138, %v4179
      %v4436 = vadd.f32 %v3139, %v4180
      %v4437 = vadd.f32 %v3140, %v4181
      %v4438 = vadd.f32 %v3141, %v4182
      %v4439 = vadd.f32 %v3173, %v4183
      %v4440 = vadd.f32 %v3174, %v4184
      %v4441 = vadd.f32 %v3176, %v4185
      %v4442 = vadd.f32 %v3208, %v4186
      %v4443 = vadd.f32 %v3209, %v4187
      %v4444 = vadd.f32 %v3210, %v4188
      %v4445 = vadd.f32 %v3211, %v4189
      %v4446 = vadd.f32 %v3243, %v4190
      %v4447 = vadd.f32 %v3244, %v4191
      %v4448 = vadd.f32 %v3245, %v4192
      %v4449 = vadd.f32 %v3278, %v4193
      %v4450 = vadd.f32 %v3279, %v4194
      %v4451 = vadd.f32 %v3280, %v4195
      %v4452 = vadd.f32 %v3281, %v4196
      %v4453 = vadd.f32 %v3313, %v4197
      %v4454 = vadd.f32 %v3314, %v4198
      %v4455 = vadd.f32 %v3315, %v4199
      %v4456 = vadd.f32 %v3316, %v4200
      %v4457 = vadd.f32 %v3349, %v4201
      %v4458 = vadd.f32 %v3350, %v4202
      %v4459 = vadd.f32 %v3351, %v4203
      %v4460 = vadd.f32 %v3383, %v4204
      %v4461 = vadd.f32 %v3384, %v4205
      %v4462 = vadd.f32 %v3385, %v4206
      %v4463 = vadd.f32 %v3386, %v4207
      %v4464 = vadd.f32 %v3418, %v4208
      %v4465 = vadd.f32 %v3420, %v4209
      %v4466 = vadd.f32 %v3421, %v4210
      %v4467 = vadd.f32 %v3453, %v4211
      %v4468 = vadd.f32 %v3454, %v4212
      %v4469 = vadd.f32 %v3455, %v4213
      %v4470 = vadd.f32 %v3456, %v4214
      %v4471 = vadd.f32 %v3488, %v4215
      %v4472 = vadd.f32 %v3489, %v4216
      %v4473 = vadd.f32 %v3491, %v4217
      %v4474 = vadd.f32 %v3523, %v4218
      %v4475 = vadd.f32 %v3524, %v4219
      %v4476 = vadd.f32 %v3525, %v4220
      %v4477 = vadd.f32 %v3526, %v4221
      %v4478 = vadd.f32 %v3558, %v4222
      %v4479 = vadd.f32 %v3559, %v4223
      %v4480 = vadd.f32 %v3560, %v4224
      %v4481 = vrot.slane %v2334, 4
      %v4482 = vrot.slane %v2335, 4
      %v4483 = vrot.slane %v2336, 4
      %v4484 = vrot.slane %v2368, 4
      %v4485 = vrot.slane %v2369, 4
      %v4486 = vrot.slane %v2370, 4
      %v4487 = vrot.slane %v2371, 4
      %v4488 = vrot.slane %v2403, 4
      %v4489 = vrot.slane %v2405, 4
      %v4490 = vrot.slane %v2406, 4
      %v4491 = vrot.slane %v2438, 4
      %v4492 = vrot.slane %v2439, 4
      %v4493 = vrot.slane %v2440, 4
      %v4494 = vrot.slane %v2441, 4
      %v4495 = vrot.slane %v2473, 4
      %v4496 = vrot.slane %v2474, 4
      %v4497 = vrot.slane %v2476, 4
      %v4498 = vrot.slane %v2508, 4
      %v4499 = vrot.slane %v2509, 4
      %v4500 = vrot.slane %v2510, 4
      %v4501 = vrot.slane %v2511, 4
      %v4502 = vrot.slane %v2543, 4
      %v4503 = vrot.slane %v2544, 4
      %v4504 = vrot.slane %v2545, 4
      %v4505 = vrot.slane %v2578, 4
      %v4506 = vrot.slane %v2579, 4
      %v4507 = vrot.slane %v2580, 4
      %v4508 = vrot.slane %v2581, 4
      %v4509 = vrot.slane %v2613, 4
      %v4510 = vrot.slane %v2614, 4
      %v4511 = vrot.slane %v2615, 4
      %v4512 = vrot.slane %v2616, 4
      %v4513 = vrot.slane %v2649, 4
      %v4514 = vrot.slane %v2650, 4
      %v4515 = vrot.slane %v2651, 4
      %v4516 = vrot.slane %v2683, 4
      %v4517 = vrot.slane %v2684, 4
      %v4518 = vrot.slane %v2685, 4
      %v4519 = vrot.slane %v2686, 4
      %v4520 = vrot.slane %v2718, 4
      %v4521 = vrot.slane %v2720, 4
      %v4522 = vrot.slane %v2721, 4
      %v4523 = vrot.slane %v2753, 4
      %v4524 = vrot.slane %v2754, 4
      %v4525 = vrot.slane %v2755, 4
      %v4526 = vrot.slane %v2756, 4
      %v4527 = vrot.slane %v2788, 4
      %v4528 = vrot.slane %v2789, 4
      %v4529 = vrot.slane %v2791, 4
      %v4530 = vrot.slane %v2823, 4
      %v4531 = vrot.slane %v2824, 4
      %v4532 = vrot.slane %v2825, 4
      %v4533 = vrot.slane %v2826, 4
      %v4534 = vrot.slane %v2858, 4
      %v4535 = vrot.slane %v2859, 4
      %v4536 = vrot.slane %v2860, 4
      %v4537 = vrot.slane %v2893, 4
      %v4538 = vrot.slane %v2894, 4
      %v4539 = vrot.slane %v2895, 4
      %v4540 = vrot.slane %v2896, 4
      %v4541 = vrot.slane %v2928, 4
      %v4542 = vrot.slane %v2929, 4
      %v4543 = vrot.slane %v2930, 4
      %v4544 = vrot.slane %v2931, 4
      %v4545 = vrot.slane %v2964, 4
      %v4546 = vrot.slane %v2965, 4
      %v4547 = vrot.slane %v2966, 4
      %v4548 = vrot.slane %v2998, 4
      %v4549 = vrot.slane %v2999, 4
      %v4550 = vrot.slane %v3000, 4
      %v4551 = vrot.slane %v3001, 4
      %v4552 = vrot.slane %v3033, 4
      %v4553 = vrot.slane %v3035, 4
      %v4554 = vrot.slane %v3036, 4
      %v4555 = vrot.slane %v3068, 4
      %v4556 = vrot.slane %v3069, 4
      %v4557 = vrot.slane %v3070, 4
      %v4558 = vrot.slane %v3071, 4
      %v4559 = vrot.slane %v3103, 4
      %v4560 = vrot.slane %v3104, 4
      %v4561 = vrot.slane %v3106, 4
      %v4562 = vrot.slane %v3138, 4
      %v4563 = vrot.slane %v3139, 4
      %v4564 = vrot.slane %v3140, 4
      %v4565 = vrot.slane %v3141, 4
      %v4566 = vrot.slane %v3173, 4
      %v4567 = vrot.slane %v3174, 4
      %v4568 = vrot.slane %v3175, 4
      %v4569 = vrot.slane %v3208, 4
      %v4570 = vrot.slane %v3209, 4
      %v4571 = vrot.slane %v3210, 4
      %v4572 = vrot.slane %v3211, 4
      %v4573 = vrot.slane %v3243, 4
      %v4574 = vrot.slane %v3244, 4
      %v4575 = vrot.slane %v3245, 4
      %v4576 = vrot.slane %v3246, 4
      %v4577 = vrot.slane %v3279, 4
      %v4578 = vrot.slane %v3280, 4
      %v4579 = vrot.slane %v3281, 4
      %v4580 = vrot.slane %v3313, 4
      %v4581 = vrot.slane %v3314, 4
      %v4582 = vrot.slane %v3315, 4
      %v4583 = vrot.slane %v3316, 4
      %v4584 = vrot.slane %v3348, 4
      %v4585 = vrot.slane %v3350, 4
      %v4586 = vrot.slane %v3351, 4
      %v4587 = vrot.slane %v3383, 4
      %v4588 = vrot.slane %v3384, 4
      %v4589 = vrot.slane %v3385, 4
      %v4590 = vrot.slane %v3386, 4
      %v4591 = vrot.slane %v3418, 4
      %v4592 = vrot.slane %v3419, 4
      %v4593 = vrot.slane %v3421, 4
      %v4594 = vrot.slane %v3453, 4
      %v4595 = vrot.slane %v3454, 4
      %v4596 = vrot.slane %v3455, 4
      %v4597 = vrot.slane %v3456, 4
      %v4598 = vrot.slane %v3488, 4
      %v4599 = vrot.slane %v3489, 4
      %v4600 = vrot.slane %v3490, 4
      %v4601 = vrot.slane %v3523, 4
      %v4602 = vrot.slane %v3524, 4
      %v4603 = vrot.slane %v3525, 4
      %v4604 = vrot.slane %v3526, 4
      %v4605 = vrot.slane %v3558, 4
      %v4606 = vrot.slane %v3559, 4
      %v4607 = vrot.slane %v3560, 4
      %v4608 = vrot.slane %v3561, 4
      %v4737 = vadd.f32 %v4353, %v4481
      %v4738 = vadd.f32 %v4354, %v4482
      %v4739 = vadd.f32 %v4355, %v4483
      %v4740 = vadd.f32 %v4356, %v4484
      %v4741 = vadd.f32 %v4357, %v4485
      %v4742 = vadd.f32 %v4358, %v4486
      %v4743 = vadd.f32 %v4359, %v4487
      %v4744 = vadd.f32 %v4360, %v4488
      %v4745 = vadd.f32 %v4361, %v4489
      %v4746 = vadd.f32 %v4362, %v4490
      %v4747 = vadd.f32 %v4363, %v4491
      %v4748 = vadd.f32 %v4364, %v4492
      %v4749 = vadd.f32 %v4365, %v4493
      %v4750 = vadd.f32 %v4366, %v4494
      %v4751 = vadd.f32 %v4367, %v4495
      %v4752 = vadd.f32 %v4368, %v4496
      %v4753 = vadd.f32 %v4369, %v4497
      %v4754 = vadd.f32 %v4370, %v4498
      %v4755 = vadd.f32 %v4371, %v4499
      %v4756 = vadd.f32 %v4372, %v4500
      %v4757 = vadd.f32 %v4373, %v4501
      %v4758 = vadd.f32 %v4374, %v4502
      %v4759 = vadd.f32 %v4375, %v4503
      %v4760 = vadd.f32 %v4376, %v4504
      %v4761 = vadd.f32 %v4377, %v4505
      %v4762 = vadd.f32 %v4378, %v4506
      %v4763 = vadd.f32 %v4379, %v4507
      %v4764 = vadd.f32 %v4380, %v4508
      %v4765 = vadd.f32 %v4381, %v4509
      %v4766 = vadd.f32 %v4382, %v4510
      %v4767 = vadd.f32 %v4383, %v4511
      %v4768 = vadd.f32 %v4384, %v4512
      %v4769 = vadd.f32 %v4385, %v4513
      %v4770 = vadd.f32 %v4386, %v4514
      %v4771 = vadd.f32 %v4387, %v4515
      %v4772 = vadd.f32 %v4388, %v4516
      %v4773 = vadd.f32 %v4389, %v4517
      %v4774 = vadd.f32 %v4390, %v4518
      %v4775 = vadd.f32 %v4391, %v4519
      %v4776 = vadd.f32 %v4392, %v4520
      %v4777 = vadd.f32 %v4393, %v4521
      %v4778 = vadd.f32 %v4394, %v4522
      %v4779 = vadd.f32 %v4395, %v4523
      %v4780 = vadd.f32 %v4396, %v4524
      %v4781 = vadd.f32 %v4397, %v4525
      %v4782 = vadd.f32 %v4398, %v4526
      %v4783 = vadd.f32 %v4399, %v4527
      %v4784 = vadd.f32 %v4400, %v4528
      %v4785 = vadd.f32 %v4401, %v4529
      %v4786 = vadd.f32 %v4402, %v4530
      %v4787 = vadd.f32 %v4403, %v4531
      %v4788 = vadd.f32 %v4404, %v4532
      %v4789 = vadd.f32 %v4405, %v4533
      %v4790 = vadd.f32 %v4406, %v4534
      %v4791 = vadd.f32 %v4407, %v4535
      %v4792 = vadd.f32 %v4408, %v4536
      %v4793 = vadd.f32 %v4409, %v4537
      %v4794 = vadd.f32 %v4410, %v4538
      %v4795 = vadd.f32 %v4411, %v4539
      %v4796 = vadd.f32 %v4412, %v4540
      %v4797 = vadd.f32 %v4413, %v4541
      %v4798 = vadd.f32 %v4414, %v4542
      %v4799 = vadd.f32 %v4415, %v4543
      %v4800 = vadd.f32 %v4416, %v4544
      %v4801 = vadd.f32 %v4417, %v4545
      %v4802 = vadd.f32 %v4418, %v4546
      %v4803 = vadd.f32 %v4419, %v4547
      %v4804 = vadd.f32 %v4420, %v4548
      %v4805 = vadd.f32 %v4421, %v4549
      %v4806 = vadd.f32 %v4422, %v4550
      %v4807 = vadd.f32 %v4423, %v4551
      %v4808 = vadd.f32 %v4424, %v4552
      %v4809 = vadd.f32 %v4425, %v4553
      %v4810 = vadd.f32 %v4426, %v4554
      %v4811 = vadd.f32 %v4427, %v4555
      %v4812 = vadd.f32 %v4428, %v4556
      %v4813 = vadd.f32 %v4429, %v4557
      %v4814 = vadd.f32 %v4430, %v4558
      %v4815 = vadd.f32 %v4431, %v4559
      %v4816 = vadd.f32 %v4432, %v4560
      %v4817 = vadd.f32 %v4433, %v4561
      %v4818 = vadd.f32 %v4434, %v4562
      %v4819 = vadd.f32 %v4435, %v4563
      %v4820 = vadd.f32 %v4436, %v4564
      %v4821 = vadd.f32 %v4437, %v4565
      %v4822 = vadd.f32 %v4438, %v4566
      %v4823 = vadd.f32 %v4439, %v4567
      %v4824 = vadd.f32 %v4440, %v4568
      %v4825 = vadd.f32 %v4441, %v4569
      %v4826 = vadd.f32 %v4442, %v4570
      %v4827 = vadd.f32 %v4443, %v4571
      %v4828 = vadd.f32 %v4444, %v4572
      %v4829 = vadd.f32 %v4445, %v4573
      %v4830 = vadd.f32 %v4446, %v4574
      %v4831 = vadd.f32 %v4447, %v4575
      %v4832 = vadd.f32 %v4448, %v4576
      %v4833 = vadd.f32 %v4449, %v4577
      %v4834 = vadd.f32 %v4450, %v4578
      %v4835 = vadd.f32 %v4451, %v4579
      %v4836 = vadd.f32 %v4452, %v4580
      %v4837 = vadd.f32 %v4453, %v4581
      %v4838 = vadd.f32 %v4454, %v4582
      %v4839 = vadd.f32 %v4455, %v4583
      %v4840 = vadd.f32 %v4456, %v4584
      %v4841 = vadd.f32 %v4457, %v4585
      %v4842 = vadd.f32 %v4458, %v4586
      %v4843 = vadd.f32 %v4459, %v4587
      %v4844 = vadd.f32 %v4460, %v4588
      %v4845 = vadd.f32 %v4461, %v4589
      %v4846 = vadd.f32 %v4462, %v4590
      %v4847 = vadd.f32 %v4463, %v4591
      %v4848 = vadd.f32 %v4464, %v4592
      %v4849 = vadd.f32 %v4465, %v4593
      %v4850 = vadd.f32 %v4466, %v4594
      %v4851 = vadd.f32 %v4467, %v4595
      %v4852 = vadd.f32 %v4468, %v4596
      %v4853 = vadd.f32 %v4469, %v4597
      %v4854 = vadd.f32 %v4470, %v4598
      %v4855 = vadd.f32 %v4471, %v4599
      %v4856 = vadd.f32 %v4472, %v4600
      %v4857 = vadd.f32 %v4473, %v4601
      %v4858 = vadd.f32 %v4474, %v4602
      %v4859 = vadd.f32 %v4475, %v4603
      %v4860 = vadd.f32 %v4476, %v4604
      %v4861 = vadd.f32 %v4477, %v4605
      %v4862 = vadd.f32 %v4478, %v4606
      %v4863 = vadd.f32 %v4479, %v4607
      %v4864 = vadd.f32 %v4480, %v4608
      %v4865 = vld [vmem:[%s2] sm:$0x1]
      %v4867 = vlaneseq
      %v4868 = vshrl.u32 %v4867, 7
      %v4869 = vsub.s32 0, %v4868
      %v4870 = vrot.slane %v4865, %v4869
      %v4871 = vcombine.high %v4870, %v4870
      %v4873 = vunpack.c.l.s4 1983009808
      %v4874 = vunpack.c.0.s8 %v4873
      %v4875 = vlaneseq
      %v4876 = vshrl.u32 %v4875, 7
      %v4877 = vsub.s32 %v4874, %v4876
      %v4878 = vrot.slane %v4870, %v4877
      %v4880 = vunpack.c.l.s4 1983009808
      %v4881 = vunpack.c.0.s8 %v4880
      %v4882 = vlaneseq
      %v4883 = vshrl.u32 %v4882, 7
      %v4884 = vsub.s32 %v4881, %v4883
      %v4885 = vrot.slane %v4871, %v4884
      %v4886 = vcombine.high %v4878, %v4878
      %v4887 = vcombine.high %v4885, %v4885
      %v4892 = vadd.f32 %v4737, %v4878
      %v4893 = vadd.f32 %v4738, %v4886
      %v4894 = vadd.f32 %v4739, %v4885
      %v4895 = vadd.f32 %v4740, %v4887
      %v4896 = vadd.f32 %v4741, %v4878
      %v4897 = vadd.f32 %v4742, %v4886
      %v4898 = vadd.f32 %v4743, %v4885
      %v4899 = vadd.f32 %v4744, %v4887
      %v4900 = vadd.f32 %v4745, %v4878
      %v4901 = vadd.f32 %v4746, %v4886
      %v4902 = vadd.f32 %v4747, %v4885
      %v4903 = vadd.f32 %v4748, %v4887
      %v4904 = vadd.f32 %v4749, %v4878
      %v4905 = vadd.f32 %v4750, %v4886
      %v4906 = vadd.f32 %v4751, %v4885
      %v4907 = vadd.f32 %v4752, %v4887
      %v4908 = vadd.f32 %v4753, %v4878
      %v4909 = vadd.f32 %v4754, %v4886
      %v4910 = vadd.f32 %v4755, %v4885
      %v4911 = vadd.f32 %v4756, %v4887
      %v4912 = vadd.f32 %v4757, %v4878
      %v4913 = vadd.f32 %v4758, %v4886
      %v4914 = vadd.f32 %v4759, %v4885
      %v4915 = vadd.f32 %v4760, %v4887
      %v4916 = vadd.f32 %v4761, %v4878
      %v4917 = vadd.f32 %v4762, %v4886
      %v4918 = vadd.f32 %v4763, %v4885
      %v4919 = vadd.f32 %v4764, %v4887
      %v4920 = vadd.f32 %v4765, %v4878
      %v4921 = vadd.f32 %v4766, %v4886
      %v4922 = vadd.f32 %v4767, %v4885
      %v4923 = vadd.f32 %v4768, %v4887
      %v4924 = vadd.f32 %v4769, %v4878
      %v4925 = vadd.f32 %v4770, %v4886
      %v4926 = vadd.f32 %v4771, %v4885
      %v4927 = vadd.f32 %v4772, %v4887
      %v4928 = vadd.f32 %v4773, %v4878
      %v4929 = vadd.f32 %v4774, %v4886
      %v4930 = vadd.f32 %v4775, %v4885
      %v4931 = vadd.f32 %v4776, %v4887
      %v4932 = vadd.f32 %v4777, %v4878
      %v4933 = vadd.f32 %v4778, %v4886
      %v4934 = vadd.f32 %v4779, %v4885
      %v4935 = vadd.f32 %v4780, %v4887
      %v4936 = vadd.f32 %v4781, %v4878
      %v4937 = vadd.f32 %v4782, %v4886
      %v4938 = vadd.f32 %v4783, %v4885
      %v4939 = vadd.f32 %v4784, %v4887
      %v4940 = vadd.f32 %v4785, %v4878
      %v4941 = vadd.f32 %v4786, %v4886
      %v4942 = vadd.f32 %v4787, %v4885
      %v4943 = vadd.f32 %v4788, %v4887
      %v4944 = vadd.f32 %v4789, %v4878
      %v4945 = vadd.f32 %v4790, %v4886
      %v4946 = vadd.f32 %v4791, %v4885
      %v4947 = vadd.f32 %v4792, %v4887
      %v4948 = vadd.f32 %v4793, %v4878
      %v4949 = vadd.f32 %v4794, %v4886
      %v4950 = vadd.f32 %v4795, %v4885
      %v4951 = vadd.f32 %v4796, %v4887
      %v4952 = vadd.f32 %v4797, %v4878
      %v4953 = vadd.f32 %v4798, %v4886
      %v4954 = vadd.f32 %v4799, %v4885
      %v4955 = vadd.f32 %v4800, %v4887
      %v4956 = vadd.f32 %v4801, %v4878
      %v4957 = vadd.f32 %v4802, %v4886
      %v4958 = vadd.f32 %v4803, %v4885
      %v4959 = vadd.f32 %v4804, %v4887
      %v4960 = vadd.f32 %v4805, %v4878
      %v4961 = vadd.f32 %v4806, %v4886
      %v4962 = vadd.f32 %v4807, %v4885
      %v4963 = vadd.f32 %v4808, %v4887
      %v4964 = vadd.f32 %v4809, %v4878
      %v4965 = vadd.f32 %v4810, %v4886
      %v4966 = vadd.f32 %v4811, %v4885
      %v4967 = vadd.f32 %v4812, %v4887
      %v4968 = vadd.f32 %v4813, %v4878
      %v4969 = vadd.f32 %v4814, %v4886
      %v4970 = vadd.f32 %v4815, %v4885
      %v4971 = vadd.f32 %v4816, %v4887
      %v4972 = vadd.f32 %v4817, %v4878
      %v4973 = vadd.f32 %v4818, %v4886
      %v4974 = vadd.f32 %v4819, %v4885
      %v4975 = vadd.f32 %v4820, %v4887
      %v4976 = vadd.f32 %v4821, %v4878
      %v4977 = vadd.f32 %v4822, %v4886
      %v4978 = vadd.f32 %v4823, %v4885
      %v4979 = vadd.f32 %v4824, %v4887
      %v4980 = vadd.f32 %v4825, %v4878
      %v4981 = vadd.f32 %v4826, %v4886
      %v4982 = vadd.f32 %v4827, %v4885
      %v4983 = vadd.f32 %v4828, %v4887
      %v4984 = vadd.f32 %v4829, %v4878
      %v4985 = vadd.f32 %v4830, %v4886
      %v4986 = vadd.f32 %v4831, %v4885
      %v4987 = vadd.f32 %v4832, %v4887
      %v4988 = vadd.f32 %v4833, %v4878
      %v4989 = vadd.f32 %v4834, %v4886
      %v4990 = vadd.f32 %v4835, %v4885
      %v4991 = vadd.f32 %v4836, %v4887
      %v4992 = vadd.f32 %v4837, %v4878
      %v4993 = vadd.f32 %v4838, %v4886
      %v4994 = vadd.f32 %v4839, %v4885
      %v4995 = vadd.f32 %v4840, %v4887
      %v4996 = vadd.f32 %v4841, %v4878
      %v4997 = vadd.f32 %v4842, %v4886
      %v4998 = vadd.f32 %v4843, %v4885
      %v4999 = vadd.f32 %v4844, %v4887
      %v5000 = vadd.f32 %v4845, %v4878
      %v5001 = vadd.f32 %v4846, %v4886
      %v5002 = vadd.f32 %v4847, %v4885
      %v5003 = vadd.f32 %v4848, %v4887
      %v5004 = vadd.f32 %v4849, %v4878
      %v5005 = vadd.f32 %v4850, %v4886
      %v5006 = vadd.f32 %v4851, %v4885
      %v5007 = vadd.f32 %v4852, %v4887
      %v5008 = vadd.f32 %v4853, %v4878
      %v5009 = vadd.f32 %v4854, %v4886
      %v5010 = vadd.f32 %v4855, %v4885
      %v5011 = vadd.f32 %v4856, %v4887
      %v5012 = vadd.f32 %v4857, %v4878
      %v5013 = vadd.f32 %v4858, %v4886
      %v5014 = vadd.f32 %v4859, %v4885
      %v5015 = vadd.f32 %v4860, %v4887
      %v5016 = vadd.f32 %v4861, %v4878
      %v5017 = vadd.f32 %v4862, %v4886
      %v5018 = vadd.f32 %v4863, %v4885
      %v5019 = vadd.f32 %v4864, %v4887
      %v5020 = vmax.f32 %v4892, 0.0
      %v5021 = vmax.f32 %v4893, 0.0
      %v5022 = vmax.f32 %v4894, 0.0
      %v5023 = vmax.f32 %v4895, 0.0
      %v5024 = vmax.f32 %v4896, 0.0
      %v5025 = vmax.f32 %v4897, 0.0
      %v5026 = vmax.f32 %v4898, 0.0
      %v5027 = vmax.f32 %v4899, 0.0
      %v5028 = vmax.f32 %v4900, 0.0
      %v5029 = vmax.f32 %v4901, 0.0
      %v5030 = vmax.f32 %v4902, 0.0
      %v5031 = vmax.f32 %v4903, 0.0
      %v5032 = vmax.f32 %v4904, 0.0
      %v5033 = vmax.f32 %v4905, 0.0
      %v5034 = vmax.f32 %v4906, 0.0
      %v5035 = vmax.f32 %v4907, 0.0
      %v5036 = vmax.f32 %v4908, 0.0
      %v5037 = vmax.f32 %v4909, 0.0
      %v5038 = vmax.f32 %v4910, 0.0
      %v5039 = vmax.f32 %v4911, 0.0
      %v5040 = vmax.f32 %v4912, 0.0
      %v5041 = vmax.f32 %v4913, 0.0
      %v5042 = vmax.f32 %v4914, 0.0
      %v5043 = vmax.f32 %v4915, 0.0
      %v5044 = vmax.f32 %v4916, 0.0
      %v5045 = vmax.f32 %v4917, 0.0
      %v5046 = vmax.f32 %v4918, 0.0
      %v5047 = vmax.f32 %v4919, 0.0
      %v5048 = vmax.f32 %v4920, 0.0
      %v5049 = vmax.f32 %v4921, 0.0
      %v5050 = vmax.f32 %v4922, 0.0
      %v5051 = vmax.f32 %v4923, 0.0
      %v5052 = vmax.f32 %v4924, 0.0
      %v5053 = vmax.f32 %v4925, 0.0
      %v5054 = vmax.f32 %v4926, 0.0
      %v5055 = vmax.f32 %v4927, 0.0
      %v5056 = vmax.f32 %v4928, 0.0
      %v5057 = vmax.f32 %v4929, 0.0
      %v5058 = vmax.f32 %v4930, 0.0
      %v5059 = vmax.f32 %v4931, 0.0
      %v5060 = vmax.f32 %v4932, 0.0
      %v5061 = vmax.f32 %v4933, 0.0
      %v5062 = vmax.f32 %v4934, 0.0
      %v5063 = vmax.f32 %v4935, 0.0
      %v5064 = vmax.f32 %v4936, 0.0
      %v5065 = vmax.f32 %v4937, 0.0
      %v5066 = vmax.f32 %v4938, 0.0
      %v5067 = vmax.f32 %v4939, 0.0
      %v5068 = vmax.f32 %v4940, 0.0
      %v5069 = vmax.f32 %v4941, 0.0
      %v5070 = vmax.f32 %v4942, 0.0
      %v5071 = vmax.f32 %v4943, 0.0
      %v5072 = vmax.f32 %v4944, 0.0
      %v5073 = vmax.f32 %v4945, 0.0
      %v5074 = vmax.f32 %v4946, 0.0
      %v5075 = vmax.f32 %v4947, 0.0
      %v5076 = vmax.f32 %v4948, 0.0
      %v5077 = vmax.f32 %v4949, 0.0
      %v5078 = vmax.f32 %v4950, 0.0
      %v5079 = vmax.f32 %v4951, 0.0
      %v5080 = vmax.f32 %v4952, 0.0
      %v5081 = vmax.f32 %v4953, 0.0
      %v5082 = vmax.f32 %v4954, 0.0
      %v5083 = vmax.f32 %v4955, 0.0
      %v5084 = vmax.f32 %v4956, 0.0
      %v5085 = vmax.f32 %v4957, 0.0
      %v5086 = vmax.f32 %v4958, 0.0
      %v5087 = vmax.f32 %v4959, 0.0
      %v5088 = vmax.f32 %v4960, 0.0
      %v5089 = vmax.f32 %v4961, 0.0
      %v5090 = vmax.f32 %v4962, 0.0
      %v5091 = vmax.f32 %v4963, 0.0
      %v5092 = vmax.f32 %v4964, 0.0
      %v5093 = vmax.f32 %v4965, 0.0
      %v5094 = vmax.f32 %v4966, 0.0
      %v5095 = vmax.f32 %v4967, 0.0
      %v5096 = vmax.f32 %v4968, 0.0
      %v5097 = vmax.f32 %v4969, 0.0
      %v5098 = vmax.f32 %v4970, 0.0
      %v5099 = vmax.f32 %v4971, 0.0
      %v5100 = vmax.f32 %v4972, 0.0
      %v5101 = vmax.f32 %v4973, 0.0
      %v5102 = vmax.f32 %v4974, 0.0
      %v5103 = vmax.f32 %v4975, 0.0
      %v5104 = vmax.f32 %v4976, 0.0
      %v5105 = vmax.f32 %v4977, 0.0
      %v5106 = vmax.f32 %v4978, 0.0
      %v5107 = vmax.f32 %v4979, 0.0
      %v5108 = vmax.f32 %v4980, 0.0
      %v5109 = vmax.f32 %v4981, 0.0
      %v5110 = vmax.f32 %v4982, 0.0
      %v5111 = vmax.f32 %v4983, 0.0
      %v5112 = vmax.f32 %v4984, 0.0
      %v5113 = vmax.f32 %v4985, 0.0
      %v5114 = vmax.f32 %v4986, 0.0
      %v5115 = vmax.f32 %v4987, 0.0
      %v5116 = vmax.f32 %v4988, 0.0
      %v5117 = vmax.f32 %v4989, 0.0
      %v5118 = vmax.f32 %v4990, 0.0
      %v5119 = vmax.f32 %v4991, 0.0
      %v5120 = vmax.f32 %v4992, 0.0
      %v5121 = vmax.f32 %v4993, 0.0
      %v5122 = vmax.f32 %v4994, 0.0
      %v5123 = vmax.f32 %v4995, 0.0
      %v5124 = vmax.f32 %v4996, 0.0
      %v5125 = vmax.f32 %v4997, 0.0
      %v5126 = vmax.f32 %v4998, 0.0
      %v5127 = vmax.f32 %v4999, 0.0
      %v5128 = vmax.f32 %v5000, 0.0
      %v5129 = vmax.f32 %v5001, 0.0
      %v5130 = vmax.f32 %v5002, 0.0
      %v5131 = vmax.f32 %v5003, 0.0
      %v5132 = vmax.f32 %v5004, 0.0
      %v5133 = vmax.f32 %v5005, 0.0
      %v5134 = vmax.f32 %v5006, 0.0
      %v5135 = vmax.f32 %v5007, 0.0
      %v5136 = vmax.f32 %v5008, 0.0
      %v5137 = vmax.f32 %v5009, 0.0
      %v5138 = vmax.f32 %v5010, 0.0
      %v5139 = vmax.f32 %v5011, 0.0
      %v5140 = vmax.f32 %v5012, 0.0
      %v5141 = vmax.f32 %v5013, 0.0
      %v5142 = vmax.f32 %v5014, 0.0
      %v5143 = vmax.f32 %v5015, 0.0
      %v5144 = vmax.f32 %v5016, 0.0
      %v5145 = vmax.f32 %v5017, 0.0
      %v5146 = vmax.f32 %v5018, 0.0
      %v5147 = vmax.f32 %v5019, 0.0
      %v5276 = vcombine.low %v5020, %v5021
      %v5277 = vcombine.low %v5022, %v5023
      %v5279 = vunpack.c.l.s4 1983009808
      %v5280 = vunpack.c.0.s8 %v5279
      %v5281 = vlaneseq
      %v5282 = vshrl.u32 %v5281, 7
      %v5283 = vsub.s32 %v5280, %v5282
      %v5284 = vrot.slane %v5276, %v5283
      %v5286 = vunpack.c.l.s4 1983009808
      %v5287 = vunpack.c.0.s8 %v5286
      %v5288 = vlaneseq
      %v5289 = vshrl.u32 %v5288, 7
      %v5290 = vsub.s32 %v5287, %v5289
      %v5291 = vrot.slane %v5277, %v5290
      %v5292 = vcombine.low %v5284, %v5291
      %v5293 = vcombine.low %v5024, %v5025
      %v5294 = vcombine.low %v5026, %v5027
      %v5296 = vunpack.c.l.s4 1983009808
      %v5297 = vunpack.c.0.s8 %v5296
      %v5298 = vlaneseq
      %v5299 = vshrl.u32 %v5298, 7
      %v5300 = vsub.s32 %v5297, %v5299
      %v5301 = vrot.slane %v5293, %v5300
      %v5303 = vunpack.c.l.s4 1983009808
      %v5304 = vunpack.c.0.s8 %v5303
      %v5305 = vlaneseq
      %v5306 = vshrl.u32 %v5305, 7
      %v5307 = vsub.s32 %v5304, %v5306
      %v5308 = vrot.slane %v5294, %v5307
      %v5309 = vcombine.low %v5301, %v5308
      %v5310 = vcombine.low %v5028, %v5029
      %v5311 = vcombine.low %v5030, %v5031
      %v5313 = vunpack.c.l.s4 1983009808
      %v5314 = vunpack.c.0.s8 %v5313
      %v5315 = vlaneseq
      %v5316 = vshrl.u32 %v5315, 7
      %v5317 = vsub.s32 %v5314, %v5316
      %v5318 = vrot.slane %v5310, %v5317
      %v5320 = vunpack.c.l.s4 1983009808
      %v5321 = vunpack.c.0.s8 %v5320
      %v5322 = vlaneseq
      %v5323 = vshrl.u32 %v5322, 7
      %v5324 = vsub.s32 %v5321, %v5323
      %v5325 = vrot.slane %v5311, %v5324
      %v5326 = vcombine.low %v5318, %v5325
      %v5327 = vcombine.low %v5032, %v5033
      %v5328 = vcombine.low %v5034, %v5035
      %v5330 = vunpack.c.l.s4 1983009808
      %v5331 = vunpack.c.0.s8 %v5330
      %v5332 = vlaneseq
      %v5333 = vshrl.u32 %v5332, 7
      %v5334 = vsub.s32 %v5331, %v5333
      %v5335 = vrot.slane %v5327, %v5334
      %v5337 = vunpack.c.l.s4 1983009808
      %v5338 = vunpack.c.0.s8 %v5337
      %v5339 = vlaneseq
      %v5340 = vshrl.u32 %v5339, 7
      %v5341 = vsub.s32 %v5338, %v5340
      %v5342 = vrot.slane %v5328, %v5341
      %v5343 = vcombine.low %v5335, %v5342
      %v5344 = vcombine.low %v5036, %v5037
      %v5345 = vcombine.low %v5038, %v5039
      %v5347 = vunpack.c.l.s4 1983009808
      %v5348 = vunpack.c.0.s8 %v5347
      %v5349 = vlaneseq
      %v5350 = vshrl.u32 %v5349, 7
      %v5351 = vsub.s32 %v5348, %v5350
      %v5352 = vrot.slane %v5344, %v5351
      %v5354 = vunpack.c.l.s4 1983009808
      %v5355 = vunpack.c.0.s8 %v5354
      %v5356 = vlaneseq
      %v5357 = vshrl.u32 %v5356, 7
      %v5358 = vsub.s32 %v5355, %v5357
      %v5359 = vrot.slane %v5345, %v5358
      %v5360 = vcombine.low %v5352, %v5359
      %v5361 = vcombine.low %v5040, %v5041
      %v5362 = vcombine.low %v5042, %v5043
      %v5364 = vunpack.c.l.s4 1983009808
      %v5365 = vunpack.c.0.s8 %v5364
      %v5366 = vlaneseq
      %v5367 = vshrl.u32 %v5366, 7
      %v5368 = vsub.s32 %v5365, %v5367
      %v5369 = vrot.slane %v5361, %v5368
      %v5371 = vunpack.c.l.s4 1983009808
      %v5372 = vunpack.c.0.s8 %v5371
      %v5373 = vlaneseq
      %v5374 = vshrl.u32 %v5373, 7
      %v5375 = vsub.s32 %v5372, %v5374
      %v5376 = vrot.slane %v5362, %v5375
      %v5377 = vcombine.low %v5369, %v5376
      %v5378 = vcombine.low %v5044, %v5045
      %v5379 = vcombine.low %v5046, %v5047
      %v5381 = vunpack.c.l.s4 1983009808
      %v5382 = vunpack.c.0.s8 %v5381
      %v5383 = vlaneseq
      %v5384 = vshrl.u32 %v5383, 7
      %v5385 = vsub.s32 %v5382, %v5384
      %v5386 = vrot.slane %v5378, %v5385
      %v5388 = vunpack.c.l.s4 1983009808
      %v5389 = vunpack.c.0.s8 %v5388
      %v5390 = vlaneseq
      %v5391 = vshrl.u32 %v5390, 7
      %v5392 = vsub.s32 %v5389, %v5391
      %v5393 = vrot.slane %v5379, %v5392
      %v5394 = vcombine.low %v5386, %v5393
      %v5395 = vcombine.low %v5048, %v5049
      %v5396 = vcombine.low %v5050, %v5051
      %v5398 = vunpack.c.l.s4 1983009808
      %v5399 = vunpack.c.0.s8 %v5398
      %v5400 = vlaneseq
      %v5401 = vshrl.u32 %v5400, 7
      %v5402 = vsub.s32 %v5399, %v5401
      %v5403 = vrot.slane %v5395, %v5402
      %v5405 = vunpack.c.l.s4 1983009808
      %v5406 = vunpack.c.0.s8 %v5405
      %v5407 = vlaneseq
      %v5408 = vshrl.u32 %v5407, 7
      %v5409 = vsub.s32 %v5406, %v5408
      %v5410 = vrot.slane %v5396, %v5409
      %v5411 = vcombine.low %v5403, %v5410
      %v5412 = vcombine.low %v5052, %v5053
      %v5413 = vcombine.low %v5054, %v5055
      %v5415 = vunpack.c.l.s4 1983009808
      %v5416 = vunpack.c.0.s8 %v5415
      %v5417 = vlaneseq
      %v5418 = vshrl.u32 %v5417, 7
      %v5419 = vsub.s32 %v5416, %v5418
      %v5420 = vrot.slane %v5412, %v5419
      %v5422 = vunpack.c.l.s4 1983009808
      %v5423 = vunpack.c.0.s8 %v5422
      %v5424 = vlaneseq
      %v5425 = vshrl.u32 %v5424, 7
      %v5426 = vsub.s32 %v5423, %v5425
      %v5427 = vrot.slane %v5413, %v5426
      %v5428 = vcombine.low %v5420, %v5427
      %v5429 = vcombine.low %v5056, %v5057
      %v5430 = vcombine.low %v5058, %v5059
      %v5432 = vunpack.c.l.s4 1983009808
      %v5433 = vunpack.c.0.s8 %v5432
      %v5434 = vlaneseq
      %v5435 = vshrl.u32 %v5434, 7
      %v5436 = vsub.s32 %v5433, %v5435
      %v5437 = vrot.slane %v5429, %v5436
      %v5439 = vunpack.c.l.s4 1983009808
      %v5440 = vunpack.c.0.s8 %v5439
      %v5441 = vlaneseq
      %v5442 = vshrl.u32 %v5441, 7
      %v5443 = vsub.s32 %v5440, %v5442
      %v5444 = vrot.slane %v5430, %v5443
      %v5445 = vcombine.low %v5437, %v5444
      %v5446 = vcombine.low %v5060, %v5061
      %v5447 = vcombine.low %v5062, %v5063
      %v5449 = vunpack.c.l.s4 1983009808
      %v5450 = vunpack.c.0.s8 %v5449
      %v5451 = vlaneseq
      %v5452 = vshrl.u32 %v5451, 7
      %v5453 = vsub.s32 %v5450, %v5452
      %v5454 = vrot.slane %v5446, %v5453
      %v5456 = vunpack.c.l.s4 1983009808
      %v5457 = vunpack.c.0.s8 %v5456
      %v5458 = vlaneseq
      %v5459 = vshrl.u32 %v5458, 7
      %v5460 = vsub.s32 %v5457, %v5459
      %v5461 = vrot.slane %v5447, %v5460
      %v5462 = vcombine.low %v5454, %v5461
      %v5463 = vcombine.low %v5064, %v5065
      %v5464 = vcombine.low %v5066, %v5067
      %v5466 = vunpack.c.l.s4 1983009808
      %v5467 = vunpack.c.0.s8 %v5466
      %v5468 = vlaneseq
      %v5469 = vshrl.u32 %v5468, 7
      %v5470 = vsub.s32 %v5467, %v5469
      %v5471 = vrot.slane %v5463, %v5470
      %v5473 = vunpack.c.l.s4 1983009808
      %v5474 = vunpack.c.0.s8 %v5473
      %v5475 = vlaneseq
      %v5476 = vshrl.u32 %v5475, 7
      %v5477 = vsub.s32 %v5474, %v5476
      %v5478 = vrot.slane %v5464, %v5477
      %v5479 = vcombine.low %v5471, %v5478
      %v5480 = vcombine.low %v5068, %v5069
      %v5481 = vcombine.low %v5070, %v5071
      %v5483 = vunpack.c.l.s4 1983009808
      %v5484 = vunpack.c.0.s8 %v5483
      %v5485 = vlaneseq
      %v5486 = vshrl.u32 %v5485, 7
      %v5487 = vsub.s32 %v5484, %v5486
      %v5488 = vrot.slane %v5480, %v5487
      %v5490 = vunpack.c.l.s4 1983009808
      %v5491 = vunpack.c.0.s8 %v5490
      %v5492 = vlaneseq
      %v5493 = vshrl.u32 %v5492, 7
      %v5494 = vsub.s32 %v5491, %v5493
      %v5495 = vrot.slane %v5481, %v5494
      %v5496 = vcombine.low %v5488, %v5495
      %v5497 = vcombine.low %v5072, %v5073
      %v5498 = vcombine.low %v5074, %v5075
      %v5500 = vunpack.c.l.s4 1983009808
      %v5501 = vunpack.c.0.s8 %v5500
      %v5502 = vlaneseq
      %v5503 = vshrl.u32 %v5502, 7
      %v5504 = vsub.s32 %v5501, %v5503
      %v5505 = vrot.slane %v5497, %v5504
      %v5507 = vunpack.c.l.s4 1983009808
      %v5508 = vunpack.c.0.s8 %v5507
      %v5509 = vlaneseq
      %v5510 = vshrl.u32 %v5509, 7
      %v5511 = vsub.s32 %v5508, %v5510
      %v5512 = vrot.slane %v5498, %v5511
      %v5513 = vcombine.low %v5505, %v5512
      %v5514 = vcombine.low %v5076, %v5077
      %v5515 = vcombine.low %v5078, %v5079
      %v5517 = vunpack.c.l.s4 1983009808
      %v5518 = vunpack.c.0.s8 %v5517
      %v5519 = vlaneseq
      %v5520 = vshrl.u32 %v5519, 7
      %v5521 = vsub.s32 %v5518, %v5520
      %v5522 = vrot.slane %v5514, %v5521
      %v5524 = vunpack.c.l.s4 1983009808
      %v5525 = vunpack.c.0.s8 %v5524
      %v5526 = vlaneseq
      %v5527 = vshrl.u32 %v5526, 7
      %v5528 = vsub.s32 %v5525, %v5527
      %v5529 = vrot.slane %v5515, %v5528
      %v5530 = vcombine.low %v5522, %v5529
      %v5531 = vcombine.low %v5080, %v5081
      %v5532 = vcombine.low %v5082, %v5083
      %v5534 = vunpack.c.l.s4 1983009808
      %v5535 = vunpack.c.0.s8 %v5534
      %v5536 = vlaneseq
      %v5537 = vshrl.u32 %v5536, 7
      %v5538 = vsub.s32 %v5535, %v5537
      %v5539 = vrot.slane %v5531, %v5538
      %v5541 = vunpack.c.l.s4 1983009808
      %v5542 = vunpack.c.0.s8 %v5541
      %v5543 = vlaneseq
      %v5544 = vshrl.u32 %v5543, 7
      %v5545 = vsub.s32 %v5542, %v5544
      %v5546 = vrot.slane %v5532, %v5545
      %v5547 = vcombine.low %v5539, %v5546
      %v5548 = vcombine.low %v5084, %v5085
      %v5549 = vcombine.low %v5086, %v5087
      %v5551 = vunpack.c.l.s4 1983009808
      %v5552 = vunpack.c.0.s8 %v5551
      %v5553 = vlaneseq
      %v5554 = vshrl.u32 %v5553, 7
      %v5555 = vsub.s32 %v5552, %v5554
      %v5556 = vrot.slane %v5548, %v5555
      %v5558 = vunpack.c.l.s4 1983009808
      %v5559 = vunpack.c.0.s8 %v5558
      %v5560 = vlaneseq
      %v5561 = vshrl.u32 %v5560, 7
      %v5562 = vsub.s32 %v5559, %v5561
      %v5563 = vrot.slane %v5549, %v5562
      %v5564 = vcombine.low %v5556, %v5563
      %v5565 = vcombine.low %v5088, %v5089
      %v5566 = vcombine.low %v5090, %v5091
      %v5568 = vunpack.c.l.s4 1983009808
      %v5569 = vunpack.c.0.s8 %v5568
      %v5570 = vlaneseq
      %v5571 = vshrl.u32 %v5570, 7
      %v5572 = vsub.s32 %v5569, %v5571
      %v5573 = vrot.slane %v5565, %v5572
      %v5575 = vunpack.c.l.s4 1983009808
      %v5576 = vunpack.c.0.s8 %v5575
      %v5577 = vlaneseq
      %v5578 = vshrl.u32 %v5577, 7
      %v5579 = vsub.s32 %v5576, %v5578
      %v5580 = vrot.slane %v5566, %v5579
      %v5581 = vcombine.low %v5573, %v5580
      %v5582 = vcombine.low %v5092, %v5093
      %v5583 = vcombine.low %v5094, %v5095
      %v5585 = vunpack.c.l.s4 1983009808
      %v5586 = vunpack.c.0.s8 %v5585
      %v5587 = vlaneseq
      %v5588 = vshrl.u32 %v5587, 7
      %v5589 = vsub.s32 %v5586, %v5588
      %v5590 = vrot.slane %v5582, %v5589
      %v5592 = vunpack.c.l.s4 1983009808
      %v5593 = vunpack.c.0.s8 %v5592
      %v5594 = vlaneseq
      %v5595 = vshrl.u32 %v5594, 7
      %v5596 = vsub.s32 %v5593, %v5595
      %v5597 = vrot.slane %v5583, %v5596
      %v5598 = vcombine.low %v5590, %v5597
      %v5599 = vcombine.low %v5096, %v5097
      %v5600 = vcombine.low %v5098, %v5099
      %v5602 = vunpack.c.l.s4 1983009808
      %v5603 = vunpack.c.0.s8 %v5602
      %v5604 = vlaneseq
      %v5605 = vshrl.u32 %v5604, 7
      %v5606 = vsub.s32 %v5603, %v5605
      %v5607 = vrot.slane %v5599, %v5606
      %v5609 = vunpack.c.l.s4 1983009808
      %v5610 = vunpack.c.0.s8 %v5609
      %v5611 = vlaneseq
      %v5612 = vshrl.u32 %v5611, 7
      %v5613 = vsub.s32 %v5610, %v5612
      %v5614 = vrot.slane %v5600, %v5613
      %v5615 = vcombine.low %v5607, %v5614
      %v5616 = vcombine.low %v5100, %v5101
      %v5617 = vcombine.low %v5102, %v5103
      %v5619 = vunpack.c.l.s4 1983009808
      %v5620 = vunpack.c.0.s8 %v5619
      %v5621 = vlaneseq
      %v5622 = vshrl.u32 %v5621, 7
      %v5623 = vsub.s32 %v5620, %v5622
      %v5624 = vrot.slane %v5616, %v5623
      %v5626 = vunpack.c.l.s4 1983009808
      %v5627 = vunpack.c.0.s8 %v5626
      %v5628 = vlaneseq
      %v5629 = vshrl.u32 %v5628, 7
      %v5630 = vsub.s32 %v5627, %v5629
      %v5631 = vrot.slane %v5617, %v5630
      %v5632 = vcombine.low %v5624, %v5631
      %v5633 = vcombine.low %v5104, %v5105
      %v5634 = vcombine.low %v5106, %v5107
      %v5636 = vunpack.c.l.s4 1983009808
      %v5637 = vunpack.c.0.s8 %v5636
      %v5638 = vlaneseq
      %v5639 = vshrl.u32 %v5638, 7
      %v5640 = vsub.s32 %v5637, %v5639
      %v5641 = vrot.slane %v5633, %v5640
      %v5643 = vunpack.c.l.s4 1983009808
      %v5644 = vunpack.c.0.s8 %v5643
      %v5645 = vlaneseq
      %v5646 = vshrl.u32 %v5645, 7
      %v5647 = vsub.s32 %v5644, %v5646
      %v5648 = vrot.slane %v5634, %v5647
      %v5649 = vcombine.low %v5641, %v5648
      %v5650 = vcombine.low %v5108, %v5109
      %v5651 = vcombine.low %v5110, %v5111
      %v5653 = vunpack.c.l.s4 1983009808
      %v5654 = vunpack.c.0.s8 %v5653
      %v5655 = vlaneseq
      %v5656 = vshrl.u32 %v5655, 7
      %v5657 = vsub.s32 %v5654, %v5656
      %v5658 = vrot.slane %v5650, %v5657
      %v5660 = vunpack.c.l.s4 1983009808
      %v5661 = vunpack.c.0.s8 %v5660
      %v5662 = vlaneseq
      %v5663 = vshrl.u32 %v5662, 7
      %v5664 = vsub.s32 %v5661, %v5663
      %v5665 = vrot.slane %v5651, %v5664
      %v5666 = vcombine.low %v5658, %v5665
      %v5667 = vcombine.low %v5112, %v5113
      %v5668 = vcombine.low %v5114, %v5115
      %v5670 = vunpack.c.l.s4 1983009808
      %v5671 = vunpack.c.0.s8 %v5670
      %v5672 = vlaneseq
      %v5673 = vshrl.u32 %v5672, 7
      %v5674 = vsub.s32 %v5671, %v5673
      %v5675 = vrot.slane %v5667, %v5674
      %v5677 = vunpack.c.l.s4 1983009808
      %v5678 = vunpack.c.0.s8 %v5677
      %v5679 = vlaneseq
      %v5680 = vshrl.u32 %v5679, 7
      %v5681 = vsub.s32 %v5678, %v5680
      %v5682 = vrot.slane %v5668, %v5681
      %v5683 = vcombine.low %v5675, %v5682
      %v5684 = vcombine.low %v5116, %v5117
      %v5685 = vcombine.low %v5118, %v5119
      %v5687 = vunpack.c.l.s4 1983009808
      %v5688 = vunpack.c.0.s8 %v5687
      %v5689 = vlaneseq
      %v5690 = vshrl.u32 %v5689, 7
      %v5691 = vsub.s32 %v5688, %v5690
      %v5692 = vrot.slane %v5684, %v5691
      %v5694 = vunpack.c.l.s4 1983009808
      %v5695 = vunpack.c.0.s8 %v5694
      %v5696 = vlaneseq
      %v5697 = vshrl.u32 %v5696, 7
      %v5698 = vsub.s32 %v5695, %v5697
      %v5699 = vrot.slane %v5685, %v5698
      %v5700 = vcombine.low %v5692, %v5699
      %v5701 = vcombine.low %v5120, %v5121
      %v5702 = vcombine.low %v5122, %v5123
      %v5704 = vunpack.c.l.s4 1983009808
      %v5705 = vunpack.c.0.s8 %v5704
      %v5706 = vlaneseq
      %v5707 = vshrl.u32 %v5706, 7
      %v5708 = vsub.s32 %v5705, %v5707
      %v5709 = vrot.slane %v5701, %v5708
      %v5711 = vunpack.c.l.s4 1983009808
      %v5712 = vunpack.c.0.s8 %v5711
      %v5713 = vlaneseq
      %v5714 = vshrl.u32 %v5713, 7
      %v5715 = vsub.s32 %v5712, %v5714
      %v5716 = vrot.slane %v5702, %v5715
      %v5717 = vcombine.low %v5709, %v5716
      %v5718 = vcombine.low %v5124, %v5125
      %v5719 = vcombine.low %v5126, %v5127
      %v5721 = vunpack.c.l.s4 1983009808
      %v5722 = vunpack.c.0.s8 %v5721
      %v5723 = vlaneseq
      %v5724 = vshrl.u32 %v5723, 7
      %v5725 = vsub.s32 %v5722, %v5724
      %v5726 = vrot.slane %v5718, %v5725
      %v5728 = vunpack.c.l.s4 1983009808
      %v5729 = vunpack.c.0.s8 %v5728
      %v5730 = vlaneseq
      %v5731 = vshrl.u32 %v5730, 7
      %v5732 = vsub.s32 %v5729, %v5731
      %v5733 = vrot.slane %v5719, %v5732
      %v5734 = vcombine.low %v5726, %v5733
      %v5735 = vcombine.low %v5128, %v5129
      %v5736 = vcombine.low %v5130, %v5131
      %v5738 = vunpack.c.l.s4 1983009808
      %v5739 = vunpack.c.0.s8 %v5738
      %v5740 = vlaneseq
      %v5741 = vshrl.u32 %v5740, 7
      %v5742 = vsub.s32 %v5739, %v5741
      %v5743 = vrot.slane %v5735, %v5742
      %v5745 = vunpack.c.l.s4 1983009808
      %v5746 = vunpack.c.0.s8 %v5745
      %v5747 = vlaneseq
      %v5748 = vshrl.u32 %v5747, 7
      %v5749 = vsub.s32 %v5746, %v5748
      %v5750 = vrot.slane %v5736, %v5749
      %v5751 = vcombine.low %v5743, %v5750
      %v5752 = vcombine.low %v5132, %v5133
      %v5753 = vcombine.low %v5134, %v5135
      %v5755 = vunpack.c.l.s4 1983009808
      %v5756 = vunpack.c.0.s8 %v5755
      %v5757 = vlaneseq
      %v5758 = vshrl.u32 %v5757, 7
      %v5759 = vsub.s32 %v5756, %v5758
      %v5760 = vrot.slane %v5752, %v5759
      %v5762 = vunpack.c.l.s4 1983009808
      %v5763 = vunpack.c.0.s8 %v5762
      %v5764 = vlaneseq
      %v5765 = vshrl.u32 %v5764, 7
      %v5766 = vsub.s32 %v5763, %v5765
      %v5767 = vrot.slane %v5753, %v5766
      %v5768 = vcombine.low %v5760, %v5767
      %v5769 = vcombine.low %v5136, %v5137
      %v5770 = vcombine.low %v5138, %v5139
      %v5772 = vunpack.c.l.s4 1983009808
      %v5773 = vunpack.c.0.s8 %v5772
      %v5774 = vlaneseq
      %v5775 = vshrl.u32 %v5774, 7
      %v5776 = vsub.s32 %v5773, %v5775
      %v5777 = vrot.slane %v5769, %v5776
      %v5779 = vunpack.c.l.s4 1983009808
      %v5780 = vunpack.c.0.s8 %v5779
      %v5781 = vlaneseq
      %v5782 = vshrl.u32 %v5781, 7
      %v5783 = vsub.s32 %v5780, %v5782
      %v5784 = vrot.slane %v5770, %v5783
      %v5785 = vcombine.low %v5777, %v5784
      %v5786 = vcombine.low %v5140, %v5141
      %v5787 = vcombine.low %v5142, %v5143
      %v5789 = vunpack.c.l.s4 1983009808
      %v5790 = vunpack.c.0.s8 %v5789
      %v5791 = vlaneseq
      %v5792 = vshrl.u32 %v5791, 7
      %v5793 = vsub.s32 %v5790, %v5792
      %v5794 = vrot.slane %v5786, %v5793
      %v5796 = vunpack.c.l.s4 1983009808
      %v5797 = vunpack.c.0.s8 %v5796
      %v5798 = vlaneseq
      %v5799 = vshrl.u32 %v5798, 7
      %v5800 = vsub.s32 %v5797, %v5799
      %v5801 = vrot.slane %v5787, %v5800
      %v5802 = vcombine.low %v5794, %v5801
      %v5803 = vcombine.low %v5144, %v5145
      %v5804 = vcombine.low %v5146, %v5147
      %v5806 = vunpack.c.l.s4 1983009808
      %v5807 = vunpack.c.0.s8 %v5806
      %v5808 = vlaneseq
      %v5809 = vshrl.u32 %v5808, 7
      %v5810 = vsub.s32 %v5807, %v5809
      %v5811 = vrot.slane %v5803, %v5810
      %v5813 = vunpack.c.l.s4 1983009808
      %v5814 = vunpack.c.0.s8 %v5813
      %v5815 = vlaneseq
      %v5816 = vshrl.u32 %v5815, 7
      %v5817 = vsub.s32 %v5814, %v5816
      %v5818 = vrot.slane %v5804, %v5817
      %v5819 = vcombine.low %v5811, %v5818
      %5852 = vst [vmem:[%s213] sm:$0xff] %v5292
      %5853 = vst [vmem:[%s213 + $0x8] sm:$0xff] %v5309
      %5854 = vst [vmem:[%s213 + $0x10] sm:$0xff] %v5326
      %5855 = vst [vmem:[%s213 + $0x18] sm:$0xff] %v5343
      %5856 = vst [vmem:[%s213 + $0x20] sm:$0xff] %v5360
      %5857 = vst [vmem:[%s213 + $0x28] sm:$0xff] %v5377
      %5858 = vst [vmem:[%s213 + $0x30] sm:$0xff] %v5394
      %5859 = vst [vmem:[%s213 + $0x38] sm:$0xff] %v5411
      %5860 = vst [vmem:[%s213 + $0x40] sm:$0xff] %v5428
      %5861 = vst [vmem:[%s213 + $0x48] sm:$0xff] %v5445
      %5862 = vst [vmem:[%s213 + $0x50] sm:$0xff] %v5462
      %5863 = vst [vmem:[%s213 + $0x58] sm:$0xff] %v5479
      %5864 = vst [vmem:[%s213 + $0x60] sm:$0xff] %v5496
      %5865 = vst [vmem:[%s213 + $0x68] sm:$0xff] %v5513
      %5866 = vst [vmem:[%s213 + $0x70] sm:$0xff] %v5530
      %5867 = vst [vmem:[%s213 + $0x78] sm:$0xff] %v5547
      %5868 = vst [vmem:[%s213 + $0x80] sm:$0xff] %v5564
      %5869 = vst [vmem:[%s213 + $0x88] sm:$0xff] %v5581
      %5870 = vst [vmem:[%s213 + $0x90] sm:$0xff] %v5598
      %5871 = vst [vmem:[%s213 + $0x98] sm:$0xff] %v5615
      %5872 = vst [vmem:[%s213 + $0xa0] sm:$0xff] %v5632
      %5873 = vst [vmem:[%s213 + $0xa8] sm:$0xff] %v5649
      %5874 = vst [vmem:[%s213 + $0xb0] sm:$0xff] %v5666
      %5875 = vst [vmem:[%s213 + $0xb8] sm:$0xff] %v5683
      %5876 = vst [vmem:[%s213 + $0xc0] sm:$0xff] %v5700
      %5877 = vst [vmem:[%s213 + $0xc8] sm:$0xff] %v5717
      %5878 = vst [vmem:[%s213 + $0xd0] sm:$0xff] %v5734
      %5879 = vst [vmem:[%s213 + $0xd8] sm:$0xff] %v5751
      %5880 = vst [vmem:[%s213 + $0xe0] sm:$0xff] %v5768
      %5881 = vst [vmem:[%s213 + $0xe8] sm:$0xff] %v5785
      %5882 = vst [vmem:[%s213 + $0xf0] sm:$0xff] %v5802
      %5883 = vst [vmem:[%s213 + $0xf8] sm:$0xff] %v5819
      %s5884 = smul.u32 16, %s19
      %p5885 = scmp.lt.s32.totalorder %s18, 1
      %s5886 = scalar_select %p5885, %s18, 1
      %p5887 = scmp.lt.s32.totalorder %s5884, 15
      %s5888 = scalar_select %p5887, %s5884, 15
      %s5889 = smul.addr %s5888, 2
      %s5890 = smul.addr %s5886, 32
      %s5891 = sadd.s32 %s5889, %s5890
      %s5892 = smul.addr %s5891, 8
      %s5893 = scalar_lea.vmem %s3, %s5892
      // Predicated region
      $region33: #{conv3x3_relu.1} parent=31 // pred_check
        %p5894 = pneg %p116
      $region34: #{conv3x3_relu.1} parent=31 // pred_check_branch
        %5896 = sbr.rel (%p5894) target = $region36
      $region35: #{conv3x3_relu.1} parent=31 // pred_region
        %s5897 = smul.u32 16, %s19
      $region36: #{conv3x3_relu.1} parent=31 // pred_fallthru
        _
    $region32: #{conv3x3_relu.1} parent=5 // pred_fallthru
      _
    %p5898 = scmp.le.s32.totalorder 2, %s9
    // Predicated region
    $region37: #{conv3x3_relu.1} parent=5 // pred_check
      %p5899 = pneg %p5898
    $region38: #{conv3x3_relu.1} parent=5 // pred_check_branch
      %5901 = sbr.rel (%p5899) target = $region40
    $region39: #{conv3x3_relu.1} parent=5 // pred_region
      %s5902 = ssub.s32 %s9, 2
      // Predicated region
      $region41: #{conv3x3_relu.1} parent=39 // pred_check
        %p5903 = pneg %p122
      $region42: #{conv3x3_relu.1} parent=39 // pred_check_branch
        %5905 = sbr.rel (%p5903) target = $region44
      $region43: #{conv3x3_relu.1} parent=39 // pred_region
        %s5906 = smul.u32 16, %s21
        %p5907 = scmp.lt.s32.totalorder %s20, 1
        %s5908 = scalar_select %p5907, %s20, 1
        %p5909 = scmp.lt.s32.totalorder %s5906, 15
        %s5910 = scalar_select %p5909, %s5906, 15
        %s5911 = smul.addr %s5910, 2
        %s5912 = smul.addr %s5908, 32
        %s5913 = sadd.s32 %s5911, %s5912
        %s5914 = smul.addr %s5913, 8
        %s5915 = scalar_lea.vmem %s3, %s5914
      $region44: #{conv3x3_relu.1} parent=39 // pred_fallthru
        _
    $region40: #{conv3x3_relu.1} parent=5 // pred_fallthru
      _
  $region6: #{conv3x3_relu.1} parent=0 // loop_footer
    %s13 = sadd.s32 1, %s9
  $region7: #{conv3x3_relu.1} parent=0 // loop_footer_branch
    %8 = sbr.rel target = $region3
  $region8: #{conv3x3_relu.1} parent=0 // loop_exit
    _

</llo_original>
